<compile_context>
chip_gen: v7x
topology: tpu7x:2x2x1
jax: 0.10.0
libtpu: 0.0.40
codegen_flags: <defaults>
</compile_context>

<pallas_src>
import jax
import jax.numpy as jnp
from jax import lax
from jax.experimental import pallas as pl
from jax.experimental.pallas import tpu as pltpu


# ----------------------------------------------------------------------------
# Pallas kernels
# ----------------------------------------------------------------------------
def _conv_pool_relu_kernel(p_ref, w_ref, b_ref, o_ref):
    """Fused conv-as-matmul (4 pool positions) + maxpool + bias + ReLU.

    p_ref : (4, tm, K) bf16 im2col patches; leading axis = pool offset
            (0,0),(0,1),(1,0),(1,1)
    w_ref : (K, N) bf16 weight matrix, rows in (kh, kw, ci) order
    b_ref : (1, N) f32 bias
    o_ref : (tm, N) bf16 pooled + ReLU'd activation
    """
    w = w_ref[...]
    a = jnp.dot(p_ref[0], w, preferred_element_type=jnp.float32)
    b = jnp.dot(p_ref[1], w, preferred_element_type=jnp.float32)
    c = jnp.dot(p_ref[2], w, preferred_element_type=jnp.float32)
    d = jnp.dot(p_ref[3], w, preferred_element_type=jnp.float32)
    # pool(relu(conv + bias)) == relu(max(conv) + bias): per-channel constant
    # bias, monotone ReLU.
    m = jnp.maximum(jnp.maximum(a, b), jnp.maximum(c, d)) + b_ref[...]
    o_ref[...] = jnp.maximum(m, 0.0).astype(o_ref.dtype)


def _mlp_kernel(x_ref, w4_ref, b4_ref, w5_ref, b5_ref, w6_ref, b6_ref, o_ref):
    """Fused fc4+ReLU -> fc5+ReLU -> fc6. Intermediates never leave VMEM."""
    h = jnp.dot(x_ref[...], w4_ref[...], preferred_element_type=jnp.float32)
    h = jnp.maximum(h + b4_ref[...], 0.0).astype(jnp.bfloat16)
    h = jnp.dot(h, w5_ref[...], preferred_element_type=jnp.float32)
    h = jnp.maximum(h + b5_ref[...], 0.0).astype(jnp.bfloat16)
    h = jnp.dot(h, w6_ref[...], preferred_element_type=jnp.float32)
    o_ref[...] = (h + b6_ref[...]).astype(o_ref.dtype)


# ----------------------------------------------------------------------------
# Tiling helpers
# ----------------------------------------------------------------------------
_MAX_TILE_M = 2048   # rows / grid step; far below any VMEM limit at these K/N


def _round_up(x, m):
    return ((x + m - 1) // m) * m


def _pick_tm(M):
    # Multiple of 8; >= 2 grid steps whenever M is large (v7x megacore);
    # capped so per-step overhead (~0.35us) stays amortized.
    return min(_MAX_TILE_M, _round_up(pl.cdiv(M, 2), 8))


def _pool_patch_views(x, k):
    """Build the 4 pool-position im2col matrices directly from x (no full
    (B,Ho,Wo,K) intermediate).  x: (B,H,W,C) -> (4, B*Hp*Wp, k*k*C)."""
    B, H, W, C = x.shape
    Ho, Wo = H - k + 1, W - k + 1
    Hp, Wp = Ho // 2, Wo // 2
    K = k * k * C
    views = []
    for u in (0, 1):
        for v in (0, 1):
            taps = [x[:, u + dh:u + dh + 2 * Hp:2, v + dw:v + dw + 2 * Wp:2, :]
                    for dh in range(k) for dw in range(k)]
            views.append(jnp.concatenate(taps, axis=-1).reshape(B * Hp * Wp, K))
    return jnp.stack(views, axis=0), Hp, Wp


# ----------------------------------------------------------------------------
# Layer wrappers
# ----------------------------------------------------------------------------
def conv_relu_pool(x, w_mat, b_row, k=5):
    """Fused VALID conv (stride 1) + ReLU + 2x2/2 maxpool on NHWC bf16 input.

    x     : (B, H, W, C) bf16
    w_mat : (k*k*C, N) bf16, rows in (kh, kw, ci) order
    b_row : (1, N) f32
    returns (B, Hp, Wp, N) bf16
    """
    B, H, W, C = x.shape
    pstack, Hp, Wp = _pool_patch_views(x, k)          # (4, M, K) bf16
    M = B * Hp * Wp
    K = k * k * C
    N = w_mat.shape[1]
    tm = _pick_tm(M)
    grid = (pl.cdiv(M, tm),)

    cost = pl.CostEstimate(
        flops=2 * 4 * M * K * N + 5 * M * N,
        transcendentals=0,
        bytes_accessed=4 * M * K * 2 + K * N * 2 + N * 4 + M * N * 2,
    )

    out = pl.pallas_call(
        _conv_pool_relu_kernel,
        out_shape=jax.ShapeDtypeStruct((M, N), jnp.bfloat16),
        grid=grid,
        in_specs=[
            pl.BlockSpec((4, tm, K), lambda i: (0, i, 0)),   # patches, tiled on M
            pl.BlockSpec((K, N), lambda i: (0, 0)),          # weights: resident
            pl.BlockSpec((1, N), lambda i: (0, 0)),          # bias: resident
        ],
        out_specs=pl.BlockSpec((tm, N), lambda i: (i, 0)),
        compiler_params=pltpu.CompilerParams(
            dimension_semantics=("parallel",)),
        cost_estimate=cost,
    )(pstack, w_mat, b_row)

    return out.reshape(B, Hp, Wp, N)


def mlp_fused(x, w4, b4, w5, b5, w6, b6):
    """x: (B, 400) bf16 -> (B, 128) f32 (last 28 fc6 columns are zero pad)."""
    B, K = x.shape
    N = w6.shape[1]
    n4, n5 = w4.shape[1], w5.shape[1]
    tm = _pick_tm(B)
    grid = (pl.cdiv(B, tm),)

    cost = pl.CostEstimate(
        flops=2 * B * (K * n4 + n4 * n5 + n5 * N) + 4 * B * (n4 + n5 + N),
        transcendentals=0,
        bytes_accessed=(B * K * 2 + (K * n4 + n4 * n5 + n5 * N) * 2
                        + (n4 + n5 + N) * 4 + B * N * 4),
    )

    return pl.pallas_call(
        _mlp_kernel,
        out_shape=jax.ShapeDtypeStruct((B, N), jnp.float32),
        grid=grid,
        in_specs=[
            pl.BlockSpec((tm, K), lambda i: (i, 0)),
            pl.BlockSpec(w4.shape, lambda i: (0, 0)),
            pl.BlockSpec(b4.shape, lambda i: (0, 0)),
            pl.BlockSpec(w5.shape, lambda i: (0, 0)),
            pl.BlockSpec(b5.shape, lambda i: (0, 0)),
            pl.BlockSpec(w6.shape, lambda i: (0, 0)),
            pl.BlockSpec(b6.shape, lambda i: (0, 0)),
        ],
        out_specs=pl.BlockSpec((tm, N), lambda i: (i, 0)),
        compiler_params=pltpu.CompilerParams(
            dimension_semantics=("parallel",)),
        cost_estimate=cost,
    )(x, w4, b4, w5, b5, w6, b6)


# ----------------------------------------------------------------------------
# Forward pass
# ----------------------------------------------------------------------------
@jax.jit
def lenet_logits(x_nchw, p):
    # NCHW -> NHWC and f32 -> bf16 exactly once.
    x = jnp.transpose(x_nchw, (0, 2, 3, 1)).astype(jnp.bfloat16)
    x = conv_relu_pool(x, p["w1m"], p["b1r"])        # (B,14,14,8) bf16 (ch 6,7 == 0)
    x = conv_relu_pool(x, p["w2m"], p["b2r"])        # (B,5,5,16)  bf16
    flat = x.reshape(x.shape[0], -1)                 # (B,400) bf16, (h,w,c) order
    out = mlp_fused(flat, p["w4m"], p["b4r"], p["w5m"], p["b5r"],
                    p["w6m"], p["b6r"])              # (B,128) f32
    return out[:, :100]


def lenet_forward(x_nchw, prepared):
    logits = lenet_logits(x_nchw, prepared)
    B, _, H, W = x_nchw.shape
    h1, w1 = (H - 4) // 2, (W - 4) // 2
    h2, w2 = (h1 - 4) // 2, (w1 - 4) // 2
    shape_dict = {1: [B, 6, h1, w1], 2: [B, 16, h2, w2], 3: [B, 16 * h2 * w2],
                  4: [B, 256], 5: [B, 128], 6: [B, 100]}
    return logits, shape_dict


# ----------------------------------------------------------------------------
# One-time parameter preparation (no per-forward transposes)
# ----------------------------------------------------------------------------
def prepare_params(params):
    # conv1: (6,3,5,5) -> (75, 8), rows in (kh, kw, ci) order; 2 zero output
    # channels (pad channels stay exactly 0: zero weight cols + zero bias + ReLU).
    w1m = params["w1"].transpose(2, 3, 1, 0).reshape(75, 6)
    w1m = jnp.pad(w1m, ((0, 0), (0, 2))).astype(jnp.bfloat16)
    b1r = jnp.pad(params["b1"], (0, 2)).reshape(1, 8).astype(jnp.float32)

    # conv2 consumes the 8-channel conv1 activation directly: rows for the 2
    # pad input channels are zero, so conv1's output is never sliced.
    w2p = jnp.pad(params["w2"], ((0, 0), (0, 2), (0, 0), (0, 0)))   # (16,8,5,5)
    w2m = w2p.transpose(2, 3, 1, 0).reshape(200, 16).astype(jnp.bfloat16)
    b2r = params["b2"].reshape(1, 16).astype(jnp.float32)

    # fc4: fold the torch (C,H,W)-flatten -> NHWC (H,W,C)-flatten permutation
    # into the weight, stored pre-transposed as (K, N).
    w4m = (params["w4"].reshape(256, 16, 5, 5)
           .transpose(2, 3, 1, 0).reshape(400, 256).astype(jnp.bfloat16))
    b4r = params["b4"].reshape(1, 256).astype(jnp.float32)
    w5m = params["w5"].T.astype(jnp.bfloat16)                        # (256,128)
    b5r = params["b5"].reshape(1, 128).astype(jnp.float32)
    # fc6: pad 100 -> 128 output columns for a lane-dense final store.
    w6m = jnp.pad(params["w6"].T, ((0, 0), (0, 28))).astype(jnp.bfloat16)
    b6r = jnp.pad(params["b6"], (0, 28)).reshape(1, 128).astype(jnp.float32)

    return {"w1m": w1m, "b1r": b1r, "w2m": w2m, "b2r": b2r,
            "w4m": w4m, "b4r": b4r, "w5m": w5m, "b5r": b5r,
            "w6m": w6m, "b6r": b6r}


# ----------------------------------------------------------------------------
# Deterministic parameter init (torch layouts) + plain-JAX reference
# ----------------------------------------------------------------------------
def init_params(key):
    ks = jax.random.split(key, 10)
    s = 0.05
    return {
        "w1": s * jax.random.normal(ks[0], (6, 3, 5, 5), jnp.float32),
        "b1": s * jax.random.normal(ks[1], (6,), jnp.float32),
        "w2": s * jax.random.normal(ks[2], (16, 6, 5, 5), jnp.float32),
        "b2": s * jax.random.normal(ks[3], (16,), jnp.float32),
        "w4": s * jax.random.normal(ks[4], (256, 400), jnp.float32),
        "b4": s * jax.random.normal(ks[5], (256,), jnp.float32),
        "w5": s * jax.random.normal(ks[6], (128, 256), jnp.float32),
        "b5": s * jax.random.normal(ks[7], (128,), jnp.float32),
        "w6": s * jax.random.normal(ks[8], (100, 128), jnp.float32),
        "b6": s * jax.random.normal(ks[9], (100,), jnp.float32),
    }


def reference_forward(x, p):
    dn = ("NCHW", "OIHW", "NCHW")
    out = lax.conv_general_dilated(x, p["w1"], (1, 1), "VALID", dimension_numbers=dn)
    out = jax.nn.relu(out + p["b1"][None, :, None, None])
    out = lax.reduce_window(out, -jnp.inf, lax.max, (1, 1, 2, 2), (1, 1, 2, 2), "VALID")
    out = lax.conv_general_dilated(out, p["w2"], (1, 1), "VALID", dimension_numbers=dn)
    out = jax.nn.relu(out + p["b2"][None, :, None, None])
    out = lax.reduce_window(out, -jnp.inf, lax.max, (1, 1, 2, 2), (1, 1, 2, 2), "VALID")
    out = out.reshape(out.shape[0], -1)                      # torch (C,H,W) flatten
    out = jax.nn.relu(out @ p["w4"].T + p["b4"])
    out = jax.nn.relu(out @ p["w5"].T + p["b5"])
    return out @ p["w6"].T + p["b6"]


if __name__ == "__main__":
    key = jax.random.PRNGKey(0)
    pkey, xkey = jax.random.split(key)
    params = init_params(pkey)
    prepared = prepare_params(params)
    # LeNet geometry requires 32x32 spatial input (Linear(400) after two convs).
    x = jax.random.normal(xkey, (2, 3, 32, 32), jnp.float32)

    out, shape_dict = lenet_forward(x, prepared)
    out = jax.block_until_ready(out)

    expected = {1: [2, 6, 14, 14], 2: [2, 16, 5, 5], 3: [2, 400],
                4: [2, 256], 5: [2, 128], 6: [2, 100]}
    assert shape_dict == expected, shape_dict
    assert out.shape == (2, 100) and out.dtype == jnp.float32
    assert bool(jnp.all(jnp.isfinite(out)))

    ref = reference_forward(x, params)
    max_err = float(jnp.max(jnp.abs(out - ref)))
    assert bool(jnp.allclose(out, ref, rtol=2e-2, atol=2e-3)), max_err
    print("KERNEL_OK")
</pallas_src>

<mosaic_0001>
module attributes {stable_mosaic.version = 11 : i64} {
  func.func @_conv_pool_relu_kernel(%arg0: i32, %arg1: memref<4x200x75xbf16, #tpu.memory_space<vmem>>, %arg2: memref<75x8xbf16, #tpu.memory_space<vmem>>, %arg3: memref<1x8xf32, #tpu.memory_space<vmem>>, %arg4: memref<200x8xbf16, #tpu.memory_space<vmem>>) attributes {dimension_semantics = [#tpu.dimension_semantics<parallel>], iteration_bounds = array<i64: 2>, scalar_prefetch = 0 : i64, scratch_operands = 0 : i64, tpu.core_type = #tpu.core_type<tc>, window_params = [{transform_indices = @transform_0, window_bounds = array<i64: 4, 200, 75>}, {pipeline_mode = #tpu.pipeline_mode<synchronous>, transform_indices = @transform_1, window_bounds = array<i64: 75, 8>}, {pipeline_mode = #tpu.pipeline_mode<synchronous>, transform_indices = @transform_2, window_bounds = array<i64: 1, 8>}, {transform_indices = @transform_3, window_bounds = array<i64: 200, 8>}]} {
    %c0 = arith.constant 0 : index
    %c0_0 = arith.constant 0 : index
    %0 = vector.load %arg2[%c0, %c0_0] : memref<75x8xbf16, #tpu.memory_space<vmem>>, vector<75x8xbf16>
    %c0_1 = arith.constant 0 : index
    %c0_2 = arith.constant 0 : index
    %c0_3 = arith.constant 0 : index
    %1 = vector.load %arg1[%c0_1, %c0_2, %c0_3] : memref<4x200x75xbf16, #tpu.memory_space<vmem>>, vector<1x200x75xbf16>
    %2 = vector.shape_cast %1 : vector<1x200x75xbf16> to vector<200x75xbf16>
    %cst = arith.constant dense<0.000000e+00> : vector<200x8xf32>
    %3 = tpu.matmul %2, %0, %cst {dimension_numbers = #tpu.dot_dimension_numbers<[1], [0], [0], [1], [0, 0, 1, 1], [], []>} : vector<200x75xbf16>, vector<75x8xbf16>, vector<200x8xf32> -> vector<200x8xf32>
    %c1 = arith.constant 1 : index
    %c0_4 = arith.constant 0 : index
    %c0_5 = arith.constant 0 : index
    %4 = vector.load %arg1[%c1, %c0_4, %c0_5] : memref<4x200x75xbf16, #tpu.memory_space<vmem>>, vector<1x200x75xbf16>
    %5 = vector.shape_cast %4 : vector<1x200x75xbf16> to vector<200x75xbf16>
    %cst_6 = arith.constant dense<0.000000e+00> : vector<200x8xf32>
    %6 = tpu.matmul %5, %0, %cst_6 {dimension_numbers = #tpu.dot_dimension_numbers<[1], [0], [0], [1], [0, 0, 1, 1], [], []>} : vector<200x75xbf16>, vector<75x8xbf16>, vector<200x8xf32> -> vector<200x8xf32>
    %c2 = arith.constant 2 : index
    %c0_7 = arith.constant 0 : index
    %c0_8 = arith.constant 0 : index
    %7 = vector.load %arg1[%c2, %c0_7, %c0_8] : memref<4x200x75xbf16, #tpu.memory_space<vmem>>, vector<1x200x75xbf16>
    %8 = vector.shape_cast %7 : vector<1x200x75xbf16> to vector<200x75xbf16>
    %cst_9 = arith.constant dense<0.000000e+00> : vector<200x8xf32>
    %9 = tpu.matmul %8, %0, %cst_9 {dimension_numbers = #tpu.dot_dimension_numbers<[1], [0], [0], [1], [0, 0, 1, 1], [], []>} : vector<200x75xbf16>, vector<75x8xbf16>, vector<200x8xf32> -> vector<200x8xf32>
    %c3 = arith.constant 3 : index
    %c0_10 = arith.constant 0 : index
    %c0_11 = arith.constant 0 : index
    %10 = vector.load %arg1[%c3, %c0_10, %c0_11] : memref<4x200x75xbf16, #tpu.memory_space<vmem>>, vector<1x200x75xbf16>
    %11 = vector.shape_cast %10 : vector<1x200x75xbf16> to vector<200x75xbf16>
    %cst_12 = arith.constant dense<0.000000e+00> : vector<200x8xf32>
    %12 = tpu.matmul %11, %0, %cst_12 {dimension_numbers = #tpu.dot_dimension_numbers<[1], [0], [0], [1], [0, 0, 1, 1], [], []>} : vector<200x75xbf16>, vector<75x8xbf16>, vector<200x8xf32> -> vector<200x8xf32>
    %13 = arith.maximumf %3, %6 : vector<200x8xf32>
    %14 = arith.maximumf %9, %12 : vector<200x8xf32>
    %15 = arith.maximumf %13, %14 : vector<200x8xf32>
    %c0_13 = arith.constant 0 : index
    %c0_14 = arith.constant 0 : index
    %16 = vector.load %arg3[%c0_13, %c0_14] : memref<1x8xf32, #tpu.memory_space<vmem>>, vector<1x8xf32>
    %17 = vector.broadcast %16 : vector<1x8xf32> to vector<200x8xf32>
    %18 = arith.addf %15, %17 : vector<200x8xf32>
    %cst_15 = arith.constant 0.000000e+00 : f32
    %19 = vector.broadcast %cst_15 : f32 to vector<200x8xf32>
    %20 = arith.maximumf %18, %19 : vector<200x8xf32>
    %21 = arith.truncf %20 : vector<200x8xf32> to vector<200x8xbf16>
    %c0_16 = arith.constant 0 : index
    %c0_17 = arith.constant 0 : index
    %22 = vector.load %arg4[%c0_16, %c0_17] : memref<200x8xbf16, #tpu.memory_space<vmem>>, vector<200x8xbf16>
    tpu.vector_store %arg4[%c0_16, %c0_17], %21 {strides = array<i32>} : memref<200x8xbf16, #tpu.memory_space<vmem>>, vector<200x8xbf16>,
    return
  }
  func.func @transform_0(%arg0: i32) -> (i32, i32, i32) {
    %c0_i32 = arith.constant 0 : i32
    %c0_i32_0 = arith.constant 0 : i32
    %c0_i32_1 = arith.constant 0 : i32
    return %c0_i32, %arg0, %c0_i32_0 : i32, i32, i32
  }
  func.func @transform_1(%arg0: i32) -> (i32, i32) {
    %c0_i32 = arith.constant 0 : i32
    %c0_i32_0 = arith.constant 0 : i32
    %c0_i32_1 = arith.constant 0 : i32
    return %c0_i32, %c0_i32_0 : i32, i32
  }
  func.func @transform_2(%arg0: i32) -> (i32, i32) {
    %c0_i32 = arith.constant 0 : i32
    %c0_i32_0 = arith.constant 0 : i32
    %c0_i32_1 = arith.constant 0 : i32
    return %c0_i32, %c0_i32_0 : i32, i32
  }
  func.func @transform_3(%arg0: i32) -> (i32, i32) {
    %c0_i32 = arith.constant 0 : i32
    %c0_i32_0 = arith.constant 0 : i32
    return %arg0, %c0_i32 : i32, i32
  }
}

module attributes {stable_mosaic.version = 11 : i64} {
  func.func @_conv_pool_relu_kernel(%arg0: i32, %arg1: memref<4x32x200xbf16, #tpu.memory_space<vmem>>, %arg2: memref<200x16xbf16, #tpu.memory_space<vmem>>, %arg3: memref<1x16xf32, #tpu.memory_space<vmem>>, %arg4: memref<32x16xbf16, #tpu.memory_space<vmem>>) attributes {dimension_semantics = [#tpu.dimension_semantics<parallel>], iteration_bounds = array<i64: 2>, scalar_prefetch = 0 : i64, scratch_operands = 0 : i64, tpu.core_type = #tpu.core_type<tc>, window_params = [{transform_indices = @transform_0, window_bounds = array<i64: 4, 32, 200>}, {pipeline_mode = #tpu.pipeline_mode<synchronous>, transform_indices = @transform_1, window_bounds = array<i64: 200, 16>}, {pipeline_mode = #tpu.pipeline_mode<synchronous>, transform_indices = @transform_2, window_bounds = array<i64: 1, 16>}, {transform_indices = @transform_3, window_bounds = array<i64: 32, 16>}]} {
    %c0 = arith.constant 0 : index
    %c0_0 = arith.constant 0 : index
    %0 = vector.load %arg2[%c0, %c0_0] : memref<200x16xbf16, #tpu.memory_space<vmem>>, vector<200x16xbf16>
    %c0_1 = arith.constant 0 : index
    %c0_2 = arith.constant 0 : index
    %c0_3 = arith.constant 0 : index
    %1 = vector.load %arg1[%c0_1, %c0_2, %c0_3] : memref<4x32x200xbf16, #tpu.memory_space<vmem>>, vector<1x32x200xbf16>
    %2 = vector.shape_cast %1 : vector<1x32x200xbf16> to vector<32x200xbf16>
    %cst = arith.constant dense<0.000000e+00> : vector<32x16xf32>
    %3 = tpu.matmul %2, %0, %cst {dimension_numbers = #tpu.dot_dimension_numbers<[1], [0], [0], [1], [0, 0, 1, 1], [], []>} : vector<32x200xbf16>, vector<200x16xbf16>, vector<32x16xf32> -> vector<32x16xf32>
    %c1 = arith.constant 1 : index
    %c0_4 = arith.constant 0 : index
    %c0_5 = arith.constant 0 : index
    %4 = vector.load %arg1[%c1, %c0_4, %c0_5] : memref<4x32x200xbf16, #tpu.memory_space<vmem>>, vector<1x32x200xbf16>
    %5 = vector.shape_cast %4 : vector<1x32x200xbf16> to vector<32x200xbf16>
    %cst_6 = arith.constant dense<0.000000e+00> : vector<32x16xf32>
    %6 = tpu.matmul %5, %0, %cst_6 {dimension_numbers = #tpu.dot_dimension_numbers<[1], [0], [0], [1], [0, 0, 1, 1], [], []>} : vector<32x200xbf16>, vector<200x16xbf16>, vector<32x16xf32> -> vector<32x16xf32>
    %c2 = arith.constant 2 : index
    %c0_7 = arith.constant 0 : index
    %c0_8 = arith.constant 0 : index
    %7 = vector.load %arg1[%c2, %c0_7, %c0_8] : memref<4x32x200xbf16, #tpu.memory_space<vmem>>, vector<1x32x200xbf16>
    %8 = vector.shape_cast %7 : vector<1x32x200xbf16> to vector<32x200xbf16>
    %cst_9 = arith.constant dense<0.000000e+00> : vector<32x16xf32>
    %9 = tpu.matmul %8, %0, %cst_9 {dimension_numbers = #tpu.dot_dimension_numbers<[1], [0], [0], [1], [0, 0, 1, 1], [], []>} : vector<32x200xbf16>, vector<200x16xbf16>, vector<32x16xf32> -> vector<32x16xf32>
    %c3 = arith.constant 3 : index
    %c0_10 = arith.constant 0 : index
    %c0_11 = arith.constant 0 : index
    %10 = vector.load %arg1[%c3, %c0_10, %c0_11] : memref<4x32x200xbf16, #tpu.memory_space<vmem>>, vector<1x32x200xbf16>
    %11 = vector.shape_cast %10 : vector<1x32x200xbf16> to vector<32x200xbf16>
    %cst_12 = arith.constant dense<0.000000e+00> : vector<32x16xf32>
    %12 = tpu.matmul %11, %0, %cst_12 {dimension_numbers = #tpu.dot_dimension_numbers<[1], [0], [0], [1], [0, 0, 1, 1], [], []>} : vector<32x200xbf16>, vector<200x16xbf16>, vector<32x16xf32> -> vector<32x16xf32>
    %13 = arith.maximumf %3, %6 : vector<32x16xf32>
    %14 = arith.maximumf %9, %12 : vector<32x16xf32>
    %15 = arith.maximumf %13, %14 : vector<32x16xf32>
    %c0_13 = arith.constant 0 : index
    %c0_14 = arith.constant 0 : index
    %16 = vector.load %arg3[%c0_13, %c0_14] : memref<1x16xf32, #tpu.memory_space<vmem>>, vector<1x16xf32>
    %17 = vector.broadcast %16 : vector<1x16xf32> to vector<32x16xf32>
    %18 = arith.addf %15, %17 : vector<32x16xf32>
    %cst_15 = arith.constant 0.000000e+00 : f32
    %19 = vector.broadcast %cst_15 : f32 to vector<32x16xf32>
    %20 = arith.maximumf %18, %19 : vector<32x16xf32>
    %21 = arith.truncf %20 : vector<32x16xf32> to vector<32x16xbf16>
    %c0_16 = arith.constant 0 : index
    %c0_17 = arith.constant 0 : index
    %22 = vector.load %arg4[%c0_16, %c0_17] : memref<32x16xbf16, #tpu.memory_space<vmem>>, vector<32x16xbf16>
    tpu.vector_store %arg4[%c0_16, %c0_17], %21 {strides = array<i32>} : memref<32x16xbf16, #tpu.memory_space<vmem>>, vector<32x16xbf16>,
    return
  }
  func.func @transform_0(%arg0: i32) -> (i32, i32, i32) {
    %c0_i32 = arith.constant 0 : i32
    %c0_i32_0 = arith.constant 0 : i32
    %c0_i32_1 = arith.constant 0 : i32
    return %c0_i32, %arg0, %c0_i32_0 : i32, i32, i32
  }
  func.func @transform_1(%arg0: i32) -> (i32, i32) {
    %c0_i32 = arith.constant 0 : i32
    %c0_i32_0 = arith.constant 0 : i32
    %c0_i32_1 = arith.constant 0 : i32
    return %c0_i32, %c0_i32_0 : i32, i32
  }
  func.func @transform_2(%arg0: i32) -> (i32, i32) {
    %c0_i32 = arith.constant 0 : i32
    %c0_i32_0 = arith.constant 0 : i32
    %c0_i32_1 = arith.constant 0 : i32
    return %c0_i32, %c0_i32_0 : i32, i32
  }
  func.func @transform_3(%arg0: i32) -> (i32, i32) {
    %c0_i32 = arith.constant 0 : i32
    %c0_i32_0 = arith.constant 0 : i32
    return %arg0, %c0_i32 : i32, i32
  }
}

module attributes {stable_mosaic.version = 11 : i64} {
  func.func @_mlp_kernel(%arg0: i32, %arg1: memref<8x400xbf16, #tpu.memory_space<vmem>>, %arg2: memref<400x256xbf16, #tpu.memory_space<vmem>>, %arg3: memref<1x256xf32, #tpu.memory_space<vmem>>, %arg4: memref<256x128xbf16, #tpu.memory_space<vmem>>, %arg5: memref<1x128xf32, #tpu.memory_space<vmem>>, %arg6: memref<128x128xbf16, #tpu.memory_space<vmem>>, %arg7: memref<1x128xf32, #tpu.memory_space<vmem>>, %arg8: memref<8x128xf32, #tpu.memory_space<vmem>>) attributes {dimension_semantics = [#tpu.dimension_semantics<parallel>], iteration_bounds = array<i64: 1>, scalar_prefetch = 0 : i64, scratch_operands = 0 : i64, tpu.core_type = #tpu.core_type<tc>, window_params = [{transform_indices = @transform_0, window_bounds = array<i64: 8, 400>}, {pipeline_mode = #tpu.pipeline_mode<synchronous>, transform_indices = @transform_1, window_bounds = array<i64: 400, 256>}, {pipeline_mode = #tpu.pipeline_mode<synchronous>, transform_indices = @transform_2, window_bounds = array<i64: 1, 256>}, {pipeline_mode = #tpu.pipeline_mode<synchronous>, transform_indices = @transform_3, window_bounds = array<i64: 256, 128>}, {pipeline_mode = #tpu.pipeline_mode<synchronous>, transform_indices = @transform_4, window_bounds = array<i64: 1, 128>}, {pipeline_mode = #tpu.pipeline_mode<synchronous>, transform_indices = @transform_5, window_bounds = array<i64: 128, 128>}, {pipeline_mode = #tpu.pipeline_mode<synchronous>, transform_indices = @transform_6, window_bounds = array<i64: 1, 128>}, {transform_indices = @transform_7, window_bounds = array<i64: 8, 128>}]} {
    %c0 = arith.constant 0 : index
    %c0_0 = arith.constant 0 : index
    %0 = vector.load %arg1[%c0, %c0_0] : memref<8x400xbf16, #tpu.memory_space<vmem>>, vector<8x400xbf16>
    %c0_1 = arith.constant 0 : index
    %c0_2 = arith.constant 0 : index
    %1 = vector.load %arg2[%c0_1, %c0_2] : memref<400x256xbf16, #tpu.memory_space<vmem>>, vector<400x256xbf16>
    %cst = arith.constant dense<0.000000e+00> : vector<8x256xf32>
    %2 = tpu.matmul %0, %1, %cst {dimension_numbers = #tpu.dot_dimension_numbers<[1], [0], [0], [1], [0, 0, 1, 1], [], []>} : vector<8x400xbf16>, vector<400x256xbf16>, vector<8x256xf32> -> vector<8x256xf32>
    %c0_3 = arith.constant 0 : index
    %c0_4 = arith.constant 0 : index
    %3 = vector.load %arg3[%c0_3, %c0_4] : memref<1x256xf32, #tpu.memory_space<vmem>>, vector<1x256xf32>
    %4 = vector.broadcast %3 : vector<1x256xf32> to vector<8x256xf32>
    %5 = arith.addf %2, %4 : vector<8x256xf32>
    %cst_5 = arith.constant 0.000000e+00 : f32
    %6 = vector.broadcast %cst_5 : f32 to vector<8x256xf32>
    %7 = arith.maximumf %5, %6 : vector<8x256xf32>
    %8 = arith.truncf %7 : vector<8x256xf32> to vector<8x256xbf16>
    %c0_6 = arith.constant 0 : index
    %c0_7 = arith.constant 0 : index
    %9 = vector.load %arg4[%c0_6, %c0_7] : memref<256x128xbf16, #tpu.memory_space<vmem>>, vector<256x128xbf16>
    %cst_8 = arith.constant dense<0.000000e+00> : vector<8x128xf32>
    %10 = tpu.matmul %8, %9, %cst_8 {dimension_numbers = #tpu.dot_dimension_numbers<[1], [0], [0], [1], [0, 0, 1, 1], [], []>} : vector<8x256xbf16>, vector<256x128xbf16>, vector<8x128xf32> -> vector<8x128xf32>
    %c0_9 = arith.constant 0 : index
    %c0_10 = arith.constant 0 : index
    %11 = vector.load %arg5[%c0_9, %c0_10] : memref<1x128xf32, #tpu.memory_space<vmem>>, vector<1x128xf32>
    %12 = vector.broadcast %11 : vector<1x128xf32> to vector<8x128xf32>
    %13 = arith.addf %10, %12 : vector<8x128xf32>
    %cst_11 = arith.constant 0.000000e+00 : f32
    %14 = vector.broadcast %cst_11 : f32 to vector<8x128xf32>
    %15 = arith.maximumf %13, %14 : vector<8x128xf32>
    %16 = arith.truncf %15 : vector<8x128xf32> to vector<8x128xbf16>
    %c0_12 = arith.constant 0 : index
    %c0_13 = arith.constant 0 : index
    %17 = vector.load %arg6[%c0_12, %c0_13] : memref<128x128xbf16, #tpu.memory_space<vmem>>, vector<128x128xbf16>
    %cst_14 = arith.constant dense<0.000000e+00> : vector<8x128xf32>
    %18 = tpu.matmul %16, %17, %cst_14 {dimension_numbers = #tpu.dot_dimension_numbers<[1], [0], [0], [1], [0, 0, 1, 1], [], []>} : vector<8x128xbf16>, vector<128x128xbf16>, vector<8x128xf32> -> vector<8x128xf32>
    %c0_15 = arith.constant 0 : index
    %c0_16 = arith.constant 0 : index
    %19 = vector.load %arg7[%c0_15, %c0_16] : memref<1x128xf32, #tpu.memory_space<vmem>>, vector<1x128xf32>
    %20 = vector.broadcast %19 : vector<1x128xf32> to vector<8x128xf32>
    %21 = arith.addf %18, %20 : vector<8x128xf32>
    %c0_17 = arith.constant 0 : index
    %c0_18 = arith.constant 0 : index
    %22 = vector.load %arg8[%c0_17, %c0_18] : memref<8x128xf32, #tpu.memory_space<vmem>>, vector<8x128xf32>
    tpu.vector_store %arg8[%c0_17, %c0_18], %21 {strides = array<i32>} : memref<8x128xf32, #tpu.memory_space<vmem>>, vector<8x128xf32>,
    return
  }
  func.func @transform_0(%arg0: i32) -> (i32, i32) {
    %c0_i32 = arith.constant 0 : i32
    %c0_i32_0 = arith.constant 0 : i32
    return %arg0, %c0_i32 : i32, i32
  }
  func.func @transform_1(%arg0: i32) -> (i32, i32) {
    %c0_i32 = arith.constant 0 : i32
    %c0_i32_0 = arith.constant 0 : i32
    %c0_i32_1 = arith.constant 0 : i32
    return %c0_i32, %c0_i32_0 : i32, i32
  }
  func.func @transform_2(%arg0: i32) -> (i32, i32) {
    %c0_i32 = arith.constant 0 : i32
    %c0_i32_0 = arith.constant 0 : i32
    %c0_i32_1 = arith.constant 0 : i32
    return %c0_i32, %c0_i32_0 : i32, i32
  }
  func.func @transform_3(%arg0: i32) -> (i32, i32) {
    %c0_i32 = arith.constant 0 : i32
    %c0_i32_0 = arith.constant 0 : i32
    %c0_i32_1 = arith.constant 0 : i32
    return %c0_i32, %c0_i32_0 : i32, i32
  }
  func.func @transform_4(%arg0: i32) -> (i32, i32) {
    %c0_i32 = arith.constant 0 : i32
    %c0_i32_0 = arith.constant 0 : i32
    %c0_i32_1 = arith.constant 0 : i32
    return %c0_i32, %c0_i32_0 : i32, i32
  }
  func.func @transform_5(%arg0: i32) -> (i32, i32) {
    %c0_i32 = arith.constant 0 : i32
    %c0_i32_0 = arith.constant 0 : i32
    %c0_i32_1 = arith.constant 0 : i32
    return %c0_i32, %c0_i32_0 : i32, i32
  }
  func.func @transform_6(%arg0: i32) -> (i32, i32) {
    %c0_i32 = arith.constant 0 : i32
    %c0_i32_0 = arith.constant 0 : i32
    %c0_i32_1 = arith.constant 0 : i32
    return %c0_i32, %c0_i32_0 : i32, i32
  }
  func.func @transform_7(%arg0: i32) -> (i32, i32) {
    %c0_i32 = arith.constant 0 : i32
    %c0_i32_0 = arith.constant 0 : i32
    return %arg0, %c0_i32 : i32, i32
  }
}

</mosaic_0001>

<llo_original>
// kernel: lenet_logits.3
$region0: #{lenet_logits.3}
  #allocation0 [shape = 'u32[]', space=smem, size = 0x4, offset = 0x4, fixed_abs, tag = 'smem constant byte address 0x4 - core index']
  #allocation1 [shape = 'u32[144,128]{1,0:T(1,128)}', space=vmem, size = 0x12000, scoped, tag = 'internal scratch']
  %s0 = inlined_call_operand.vmem [shape: bf16[4,392,75], index: 0, kind: input, shape index: {}]
  %s1 = inlined_call_operand.vmem [shape: bf16[75,8], index: 1, kind: input, shape index: {}]
  %s2 = inlined_call_operand.vmem [shape: f32[1,8], index: 2, kind: input, shape index: {}]
  %s3 = inlined_call_operand.vmem [shape: bf16[392,8], index: 3, kind: output, shape index: {}]
  %s4 = sld [smem:[#allocation0]]
  $region151: #{lenet_logits.3} parent=0
    _
  %s6 = ssub.s32 1, %s4
  %s7 = scalar_select 0, %s6, %s4
  $region1: #{lenet_logits.3} parent=0
    #allocation2 [shape = 'u8[409600]{0}', space=vmem, size = 0x64000, scoped, tag = 'input window, operand 0']
    #allocation3 [shape = 'u8[102400]{0}', space=vmem, size = 0x19000, scoped, tag = 'output window, operand 0']
    loop: start=0, step=1, limit=4
    $region2: #{lenet_logits.3} parent=1 // loop_pre_header
      _
    $region3: #{lenet_logits.3} parent=1 // loop_header
      %s9 = sphi 0, %s13
      %p10 = scmp.ge.s32.totalorder %s9, 4
      %s19 = sphi 0, %s21
      %s22 = sphi 0, %s19
      %s23 = sphi 0, %s22
      %s39 = sphi 0, %s23
      %s43 = sphi 0, %s43
      %s45 = sphi 0, %s43
      %s46 = sphi 0, %s45
      %s60 = sphi 0, %s46
      %s64 = sphi 0, %s64
      %s66 = sphi 0, %s64
      %s67 = sphi 0, %s66
      %s81 = sphi 0, %s67
      %s87 = sphi 0, %s89
      %s90 = sphi 0, %s87
      %s91 = sphi 0, %s90
      %s107 = sphi 0, %s91
    $region4: #{lenet_logits.3} parent=1 // loop_header_branch
      %12 = sbr.rel (%p10) target = $region8
    $region5: #{lenet_logits.3} parent=1 // loop_body
      %s14 = ssub.s32 %s9, 1
      %s15 = ssub.s32 %s9, 2
      %s16 = sadd.s32 %s9, 1
      %s17 = ssub.s32 %s9, %s16
      %p18 = scmp.eq.s32.totalorder %s17, 0
      %s20 = sadd.s32 %s19, 1
      %s21 = scalar_select %p18, %s19, %s20
      %p24 = pneg %p18
      %p25 = scmp.eq.s32.totalorder %s9, 1
      %p26 = por %p24, %p25
      %p27 = scmp.ne.s32.totalorder %s19, %s22
      %p28 = scmp.eq.s32.totalorder %s9, 0
      %p29 = por %p27, %p28
      %p30 = scmp.ne.s32.totalorder %s19, %s22
      %p31 = scmp.eq.s32.totalorder %s14, 1
      %p32 = por %p30, %p31
      %p33 = scmp.ne.s32.totalorder %s22, %s23
      %p34 = scmp.eq.s32.totalorder %s14, 0
      %p35 = por %p33, %p34
      %p36 = scmp.ne.s32.totalorder %s22, %s23
      %p37 = scmp.eq.s32.totalorder %s15, 1
      %p38 = por %p36, %p37
      %p40 = scmp.ne.s32.totalorder %s23, %s39
      %p41 = scmp.eq.s32.totalorder %s15, 0
      %p42 = por %p40, %p41
      %s44 = sadd.s32 %s43, 1
      %p47 = scmp.eq.s32.totalorder %s9, 1
      %p48 = scmp.ne.s32.totalorder %s43, %s45
      %p49 = scmp.eq.s32.totalorder %s9, 0
      %p50 = por %p48, %p49
      %p51 = scmp.ne.s32.totalorder %s43, %s45
      %p52 = scmp.eq.s32.totalorder %s14, 1
      %p53 = por %p51, %p52
      %p54 = scmp.ne.s32.totalorder %s45, %s46
      %p55 = scmp.eq.s32.totalorder %s14, 0
      %p56 = por %p54, %p55
      %p57 = scmp.ne.s32.totalorder %s45, %s46
      %p58 = scmp.eq.s32.totalorder %s15, 1
      %p59 = por %p57, %p58
      %p61 = scmp.ne.s32.totalorder %s46, %s60
      %p62 = scmp.eq.s32.totalorder %s15, 0
      %p63 = por %p61, %p62
      %s65 = sadd.s32 %s64, 1
      %p68 = scmp.eq.s32.totalorder %s9, 1
      %p69 = scmp.ne.s32.totalorder %s64, %s66
      %p70 = scmp.eq.s32.totalorder %s9, 0
      %p71 = por %p69, %p70
      %p72 = scmp.ne.s32.totalorder %s64, %s66
      %p73 = scmp.eq.s32.totalorder %s14, 1
      %p74 = por %p72, %p73
      %p75 = scmp.ne.s32.totalorder %s66, %s67
      %p76 = scmp.eq.s32.totalorder %s14, 0
      %p77 = por %p75, %p76
      %p78 = scmp.ne.s32.totalorder %s66, %s67
      %p79 = scmp.eq.s32.totalorder %s15, 1
      %p80 = por %p78, %p79
      %p82 = scmp.ne.s32.totalorder %s67, %s81
      %p83 = scmp.eq.s32.totalorder %s15, 0
      %p84 = por %p82, %p83
      %s85 = ssub.s32 %s9, %s16
      %p86 = scmp.eq.s32.totalorder %s85, 0
      %s88 = sadd.s32 %s87, 1
      %s89 = scalar_select %p86, %s87, %s88
      %p92 = pneg %p86
      %p93 = scmp.eq.s32.totalorder %s9, 1
      %p94 = por %p92, %p93
      %p95 = scmp.ne.s32.totalorder %s87, %s90
      %p96 = scmp.eq.s32.totalorder %s9, 0
      %p97 = por %p95, %p96
      %p98 = scmp.ne.s32.totalorder %s87, %s90
      %p99 = scmp.eq.s32.totalorder %s14, 1
      %p100 = por %p98, %p99
      %p101 = scmp.ne.s32.totalorder %s90, %s91
      %p102 = scmp.eq.s32.totalorder %s14, 0
      %p103 = por %p101, %p102
      %p104 = scmp.ne.s32.totalorder %s90, %s91
      %p105 = scmp.eq.s32.totalorder %s15, 1
      %p106 = por %p104, %p105
      %p108 = scmp.ne.s32.totalorder %s91, %s107
      %p109 = scmp.eq.s32.totalorder %s15, 0
      %p110 = por %p108, %p109
      %p111 = scmp.le.s32.totalorder 1, %s9
      %p112 = scmp.lt.s32.totalorder %s9, 3
      %p113 = pnand %p111, %p112
      %p114 = pneg %p113
      // Predicated region
      $region9: #{lenet_logits.3} parent=5 // pred_check
        _
      $region10: #{lenet_logits.3} parent=5 // pred_check_branch
        %116 = sbr.rel (%p113) target = $region12
      $region11: #{lenet_logits.3} parent=5 // pred_region
        %s117 = ssub.s32 %s9, 1
        // Predicated region
        $region13: #{lenet_logits.3} parent=11 // pred_check
          %p118 = pneg %p56
        $region14: #{lenet_logits.3} parent=11 // pred_check_branch
          %120 = sbr.rel (%p118) target = $region16
        $region15: #{lenet_logits.3} parent=11 // pred_region
          _
        $region16: #{lenet_logits.3} parent=11 // pred_fallthru
          _
        // Predicated region
        $region17: #{lenet_logits.3} parent=11 // pred_check
          %p121 = pneg %p77
        $region18: #{lenet_logits.3} parent=11 // pred_check_branch
          %123 = sbr.rel (%p121) target = $region20
        $region19: #{lenet_logits.3} parent=11 // pred_region
          _
        $region20: #{lenet_logits.3} parent=11 // pred_fallthru
          _
      $region12: #{lenet_logits.3} parent=5 // pred_fallthru
        _
      %p124 = scmp.lt.s32.totalorder %s9, 2
      // Predicated region
      $region21: #{lenet_logits.3} parent=5 // pred_check
        %p125 = pneg %p124
      $region22: #{lenet_logits.3} parent=5 // pred_check_branch
        %127 = sbr.rel (%p125) target = $region24
      $region23: #{lenet_logits.3} parent=5 // pred_region
        // Predicated region
        $region25: #{lenet_logits.3} parent=23 // pred_check
          %p128 = pneg %p29
        $region26: #{lenet_logits.3} parent=23 // pred_check_branch
          %130 = sbr.rel (%p128) target = $region28
        $region27: #{lenet_logits.3} parent=23 // pred_region
          %s131 = sand.u32 %s19, 1
          %s132 = sand.u32 %s19, 1
          %s133 = smul.addr %s132, 400
          %s134 = scalar_lea.vmem [#allocation2], %s133
          %s135 = smul.u32 25, %s9
          %s136 = ssub.s32 49, %s135
          %p137 = scmp.lt.s32.totalorder %s136, 25
          %s138 = scalar_select %p137, %s136, 25
          %s139 = smul.u32 256, %s138
          %p140 = scmp.ne.s32.totalorder 0, %s139
          %s141 = smul.addr %s135, 4
          %s142 = scalar_lea.vmem %s0, %s141
          // Predicated region
          $region29: #{lenet_logits.3} parent=27 // pred_check
            %p143 = pneg %p140
          $region30: #{lenet_logits.3} parent=27 // pred_check_branch
            %145 = sbr.rel (%p143) target = $region32
          $region31: #{lenet_logits.3} parent=27 // pred_region
            // Predicated region
            $region33: #{lenet_logits.3} parent=31 // pred_check
              _
            $region34: #{lenet_logits.3} parent=31 // pred_check_branch
              %147 = sbr.rel target = $region36
            $region35: #{lenet_logits.3} parent=31 // pred_region
              // Predicated region
              $region55: #{lenet_logits.3} parent=35 // pred_check
                _
              $region56: #{lenet_logits.3} parent=35 // pred_check_branch
                %328 = sbr.rel (0) target = $region58
              $region57: #{lenet_logits.3} parent=35 // pred_region
                %s329 = sdiv.u32.pop %s138, 25
                %s330 = srem.u32.pop %s138, 25
                // While loop
                $region59: #{lenet_logits.3} parent=57 // loop_pre_header
                  _
                $region60: #{lenet_logits.3} parent=57 // loop_header
                  %s332 = sphi 0, %s334
                  %p333 = scmp.ge.s32.totalorder %s332, %s329
                  %s337 = sphi 0, %s342
                  %s338 = sphi %s142, %s345
                  %s339 = sphi %s134, %s346
                $region61: #{lenet_logits.3} parent=57 // loop_header_branch
                  %336 = sbr.rel (%p333) target = $region65
                $region62: #{lenet_logits.3} parent=57 // loop_body
                  %s340 = sadd.s32 1, %s337
                  %p341 = scmp.ge.s32.totalorder %s340, %s329
                  %s342 = scalar_select %p341, 0, %s340
                  %s343 = smul.u32 %s342, 100
                  %s344 = smul.u32 %s342, 100
                  %s345 = scalar_lea.vmem %s142, %s343
                  %s346 = scalar_lea.vmem %s134, %s344 [#allocation2]
                $region63: #{lenet_logits.3} parent=57 // loop_footer
                  %s334 = sadd.s32 %s332, 1
                $region64: #{lenet_logits.3} parent=57 // loop_footer_branch
                  %331 = sbr.rel target = $region60
                $region65: #{lenet_logits.3} parent=57 // loop_exit
                  _
                %s347 = sdiv.u32.pop %s138, 25
                %s348 = srem.u32.pop %s138, 25
                %s349 = smul.u32 %s347, 25
                %s350 = smul.u32 4, %s349
                %s351 = scalar_lea.vmem %s142, %s350
                %s352 = smul.u32 4, %s349
                %s353 = scalar_lea.vmem %s134, %s352 [#allocation2]
                // While loop
                $region66: #{lenet_logits.3} parent=57 // loop_pre_header
                  _
                $region67: #{lenet_logits.3} parent=57 // loop_header
                  %s355 = sphi 0, %s357
                  %p356 = scmp.ge.s32.totalorder %s355, %s348
                  %s360 = sphi 0, %s365
                  %s361 = sphi %s351, %s368
                  %s362 = sphi %s353, %s369
                $region68: #{lenet_logits.3} parent=57 // loop_header_branch
                  %359 = sbr.rel (%p356) target = $region72
                $region69: #{lenet_logits.3} parent=57 // loop_body
                  %s363 = sadd.s32 1, %s360
                  %p364 = scmp.ge.s32.totalorder %s363, %s348
                  %s365 = scalar_select %p364, 0, %s363
                  %s366 = smul.u32 %s365, 4
                  %s367 = smul.u32 %s365, 4
                  %s368 = scalar_lea.vmem %s351, %s366
                  %s369 = scalar_lea.vmem %s353, %s367 [#allocation2]
                $region70: #{lenet_logits.3} parent=57 // loop_footer
                  %s357 = sadd.s32 %s355, 1
                $region71: #{lenet_logits.3} parent=57 // loop_footer_branch
                  %354 = sbr.rel target = $region67
                $region72: #{lenet_logits.3} parent=57 // loop_exit
                  _
                %s371 = sshrl.u32 %s138, 4
                // While loop
                $region73: #{lenet_logits.3} parent=57 // loop_pre_header
                  _
                $region74: #{lenet_logits.3} parent=57 // loop_header
                  %s373 = sphi 0, %s375
                  %p374 = scmp.ge.s32.totalorder %s373, %s371
                  %s378 = sphi 0, %s511
                  %s379 = sphi %s142, %s514
                  %s380 = sphi %s134, %s515
                $region75: #{lenet_logits.3} parent=57 // loop_header_branch
                  %377 = sbr.rel (%p374) target = $region79
                $region76: #{lenet_logits.3} parent=57 // loop_body
                  %v381 = vld [vmem:[%s379] sm:$0xf]
                  %382 = vst [vmem:[%s380] sm:$0xf] %v381
                  %v383 = vld [vmem:[%s379 + $0x4] sm:$0xf]
                  %384 = vst [vmem:[%s380 + $0x4] sm:$0xf] %v383
                  %v385 = vld [vmem:[%s379 + $0x8] sm:$0xf]
                  %386 = vst [vmem:[%s380 + $0x8] sm:$0xf] %v385
                  %v387 = vld [vmem:[%s379 + $0xc] sm:$0xf]
                  %388 = vst [vmem:[%s380 + $0xc] sm:$0xf] %v387
                  %v389 = vld [vmem:[%s379 + $0x10] sm:$0xf]
                  %390 = vst [vmem:[%s380 + $0x10] sm:$0xf] %v389
                  %v391 = vld [vmem:[%s379 + $0x14] sm:$0xf]
                  %392 = vst [vmem:[%s380 + $0x14] sm:$0xf] %v391
                  %v393 = vld [vmem:[%s379 + $0x18] sm:$0xf]
                  %394 = vst [vmem:[%s380 + $0x18] sm:$0xf] %v393
                  %v395 = vld [vmem:[%s379 + $0x1c] sm:$0xf]
                  %396 = vst [vmem:[%s380 + $0x1c] sm:$0xf] %v395
                  %v397 = vld [vmem:[%s379 + $0x20] sm:$0xf]
                  %398 = vst [vmem:[%s380 + $0x20] sm:$0xf] %v397
                  %v399 = vld [vmem:[%s379 + $0x24] sm:$0xf]
                  %400 = vst [vmem:[%s380 + $0x24] sm:$0xf] %v399
                  %v401 = vld [vmem:[%s379 + $0x28] sm:$0xf]
                  %402 = vst [vmem:[%s380 + $0x28] sm:$0xf] %v401
                  %v403 = vld [vmem:[%s379 + $0x2c] sm:$0xf]
                  %404 = vst [vmem:[%s380 + $0x2c] sm:$0xf] %v403
                  %v405 = vld [vmem:[%s379 + $0x30] sm:$0xf]
                  %406 = vst [vmem:[%s380 + $0x30] sm:$0xf] %v405
                  %v407 = vld [vmem:[%s379 + $0x34] sm:$0xf]
                  %408 = vst [vmem:[%s380 + $0x34] sm:$0xf] %v407
                  %v409 = vld [vmem:[%s379 + $0x38] sm:$0xf]
                  %410 = vst [vmem:[%s380 + $0x38] sm:$0xf] %v409
                  %v411 = vld [vmem:[%s379 + $0x3c] sm:$0xf]
                  %412 = vst [vmem:[%s380 + $0x3c] sm:$0xf] %v411
                  %v413 = vld [vmem:[%s379 + $0xc4] sm:$0xf]
                  %414 = vst [vmem:[%s380 + $0x64] sm:$0xf] %v413
                  %v415 = vld [vmem:[%s379 + $0xc8] sm:$0xf]
                  %416 = vst [vmem:[%s380 + $0x68] sm:$0xf] %v415
                  %v417 = vld [vmem:[%s379 + $0xcc] sm:$0xf]
                  %418 = vst [vmem:[%s380 + $0x6c] sm:$0xf] %v417
                  %v419 = vld [vmem:[%s379 + $0xd0] sm:$0xf]
                  %420 = vst [vmem:[%s380 + $0x70] sm:$0xf] %v419
                  %v421 = vld [vmem:[%s379 + $0xd4] sm:$0xf]
                  %422 = vst [vmem:[%s380 + $0x74] sm:$0xf] %v421
                  %v423 = vld [vmem:[%s379 + $0xd8] sm:$0xf]
                  %424 = vst [vmem:[%s380 + $0x78] sm:$0xf] %v423
                  %v425 = vld [vmem:[%s379 + $0xdc] sm:$0xf]
                  %426 = vst [vmem:[%s380 + $0x7c] sm:$0xf] %v425
                  %v427 = vld [vmem:[%s379 + $0xe0] sm:$0xf]
                  %428 = vst [vmem:[%s380 + $0x80] sm:$0xf] %v427
                  %v429 = vld [vmem:[%s379 + $0xe4] sm:$0xf]
                  %430 = vst [vmem:[%s380 + $0x84] sm:$0xf] %v429
                  %v431 = vld [vmem:[%s379 + $0xe8] sm:$0xf]
                  %432 = vst [vmem:[%s380 + $0x88] sm:$0xf] %v431
                  %v433 = vld [vmem:[%s379 + $0xec] sm:$0xf]
                  %434 = vst [vmem:[%s380 + $0x8c] sm:$0xf] %v433
                  %v435 = vld [vmem:[%s379 + $0xf0] sm:$0xf]
                  %436 = vst [vmem:[%s380 + $0x90] sm:$0xf] %v435
                  %v437 = vld [vmem:[%s379 + $0xf4] sm:$0xf]
                  %438 = vst [vmem:[%s380 + $0x94] sm:$0xf] %v437
                  %v439 = vld [vmem:[%s379 + $0xf8] sm:$0xf]
                  %440 = vst [vmem:[%s380 + $0x98] sm:$0xf] %v439
                  %v441 = vld [vmem:[%s379 + $0xfc] sm:$0xf]
                  %442 = vst [vmem:[%s380 + $0x9c] sm:$0xf] %v441
                  %v443 = vld [vmem:[%s379 + $0x100] sm:$0xf]
                  %444 = vst [vmem:[%s380 + $0xa0] sm:$0xf] %v443
                  %v445 = vld [vmem:[%s379 + $0x188] sm:$0xf]
                  %446 = vst [vmem:[%s380 + $0xc8] sm:$0xf] %v445
                  %v447 = vld [vmem:[%s379 + $0x18c] sm:$0xf]
                  %448 = vst [vmem:[%s380 + $0xcc] sm:$0xf] %v447
                  %v449 = vld [vmem:[%s379 + $0x190] sm:$0xf]
                  %450 = vst [vmem:[%s380 + $0xd0] sm:$0xf] %v449
                  %v451 = vld [vmem:[%s379 + $0x194] sm:$0xf]
                  %452 = vst [vmem:[%s380 + $0xd4] sm:$0xf] %v451
                  %v453 = vld [vmem:[%s379 + $0x198] sm:$0xf]
                  %454 = vst [vmem:[%s380 + $0xd8] sm:$0xf] %v453
                  %v455 = vld [vmem:[%s379 + $0x19c] sm:$0xf]
                  %456 = vst [vmem:[%s380 + $0xdc] sm:$0xf] %v455
                  %v457 = vld [vmem:[%s379 + $0x1a0] sm:$0xf]
                  %458 = vst [vmem:[%s380 + $0xe0] sm:$0xf] %v457
                  %v459 = vld [vmem:[%s379 + $0x1a4] sm:$0xf]
                  %460 = vst [vmem:[%s380 + $0xe4] sm:$0xf] %v459
                  %v461 = vld [vmem:[%s379 + $0x1a8] sm:$0xf]
                  %462 = vst [vmem:[%s380 + $0xe8] sm:$0xf] %v461
                  %v463 = vld [vmem:[%s379 + $0x1ac] sm:$0xf]
                  %464 = vst [vmem:[%s380 + $0xec] sm:$0xf] %v463
                  %v465 = vld [vmem:[%s379 + $0x1b0] sm:$0xf]
                  %466 = vst [vmem:[%s380 + $0xf0] sm:$0xf] %v465
                  %v467 = vld [vmem:[%s379 + $0x1b4] sm:$0xf]
                  %468 = vst [vmem:[%s380 + $0xf4] sm:$0xf] %v467
                  %v469 = vld [vmem:[%s379 + $0x1b8] sm:$0xf]
                  %470 = vst [vmem:[%s380 + $0xf8] sm:$0xf] %v469
                  %v471 = vld [vmem:[%s379 + $0x1bc] sm:$0xf]
                  %472 = vst [vmem:[%s380 + $0xfc] sm:$0xf] %v471
                  %v473 = vld [vmem:[%s379 + $0x1c0] sm:$0xf]
                  %474 = vst [vmem:[%s380 + $0x100] sm:$0xf] %v473
                  %v475 = vld [vmem:[%s379 + $0x1c4] sm:$0xf]
                  %476 = vst [vmem:[%s380 + $0x104] sm:$0xf] %v475
                  %v477 = vld [vmem:[%s379 + $0x24c] sm:$0xf]
                  %478 = vst [vmem:[%s380 + $0x12c] sm:$0xf] %v477
                  %v479 = vld [vmem:[%s379 + $0x250] sm:$0xf]
                  %480 = vst [vmem:[%s380 + $0x130] sm:$0xf] %v479
                  %v481 = vld [vmem:[%s379 + $0x254] sm:$0xf]
                  %482 = vst [vmem:[%s380 + $0x134] sm:$0xf] %v481
                  %v483 = vld [vmem:[%s379 + $0x258] sm:$0xf]
                  %484 = vst [vmem:[%s380 + $0x138] sm:$0xf] %v483
                  %v485 = vld [vmem:[%s379 + $0x25c] sm:$0xf]
                  %486 = vst [vmem:[%s380 + $0x13c] sm:$0xf] %v485
                  %v487 = vld [vmem:[%s379 + $0x260] sm:$0xf]
                  %488 = vst [vmem:[%s380 + $0x140] sm:$0xf] %v487
                  %v489 = vld [vmem:[%s379 + $0x264] sm:$0xf]
                  %490 = vst [vmem:[%s380 + $0x144] sm:$0xf] %v489
                  %v491 = vld [vmem:[%s379 + $0x268] sm:$0xf]
                  %492 = vst [vmem:[%s380 + $0x148] sm:$0xf] %v491
                  %v493 = vld [vmem:[%s379 + $0x26c] sm:$0xf]
                  %494 = vst [vmem:[%s380 + $0x14c] sm:$0xf] %v493
                  %v495 = vld [vmem:[%s379 + $0x270] sm:$0xf]
                  %496 = vst [vmem:[%s380 + $0x150] sm:$0xf] %v495
                  %v497 = vld [vmem:[%s379 + $0x274] sm:$0xf]
                  %498 = vst [vmem:[%s380 + $0x154] sm:$0xf] %v497
                  %v499 = vld [vmem:[%s379 + $0x278] sm:$0xf]
                  %500 = vst [vmem:[%s380 + $0x158] sm:$0xf] %v499
                  %v501 = vld [vmem:[%s379 + $0x27c] sm:$0xf]
                  %502 = vst [vmem:[%s380 + $0x15c] sm:$0xf] %v501
                  %v503 = vld [vmem:[%s379 + $0x280] sm:$0xf]
                  %504 = vst [vmem:[%s380 + $0x160] sm:$0xf] %v503
                  %v505 = vld [vmem:[%s379 + $0x284] sm:$0xf]
                  %506 = vst [vmem:[%s380 + $0x164] sm:$0xf] %v505
                  %v507 = vld [vmem:[%s379 + $0x288] sm:$0xf]
                  %508 = vst [vmem:[%s380 + $0x168] sm:$0xf] %v507
                  %s509 = sadd.s32 1, %s378
                  %p510 = scmp.ge.s32.totalorder %s509, %s371
                  %s511 = scalar_select %p510, 0, %s509
                  %s512 = smul.u32 %s511, 64
                  %s513 = smul.u32 %s511, 64
                  %s514 = scalar_lea.vmem %s142, %s512
                  %s515 = scalar_lea.vmem %s134, %s513 [#allocation2]
                $region77: #{lenet_logits.3} parent=57 // loop_footer
                  %s375 = sadd.s32 %s373, 1
                $region78: #{lenet_logits.3} parent=57 // loop_footer_branch
                  %372 = sbr.rel target = $region74
                $region79: #{lenet_logits.3} parent=57 // loop_exit
                  _
                %s516 = sshrl.u32 %s138, 4
                %s517 = sand.u32 %s138, 15
                %s518 = smul.u32 %s516, 16
                %s519 = smul.u32 4, %s518
                %s520 = scalar_lea.vmem %s142, %s519
                %s521 = smul.u32 4, %s518
                %s522 = scalar_lea.vmem %s134, %s521 [#allocation2]
                // While loop
                $region80: #{lenet_logits.3} parent=57 // loop_pre_header
                  _
                $region81: #{lenet_logits.3} parent=57 // loop_header
                  %s524 = sphi 0, %s526
                  %p525 = scmp.ge.s32.totalorder %s524, %s517
                  %s529 = sphi 0, %s542
                  %s530 = sphi %s520, %s545
                  %s531 = sphi %s522, %s546
                $region82: #{lenet_logits.3} parent=57 // loop_header_branch
                  %528 = sbr.rel (%p525) target = $region86
                $region83: #{lenet_logits.3} parent=57 // loop_body
                  %v532 = vld [vmem:[%s530] sm:$0xf]
                  %533 = vst [vmem:[%s531] sm:$0xf] %v532
                  %v534 = vld [vmem:[%s530 + $0xc4] sm:$0xf]
                  %535 = vst [vmem:[%s531 + $0x64] sm:$0xf] %v534
                  %v536 = vld [vmem:[%s530 + $0x188] sm:$0xf]
                  %537 = vst [vmem:[%s531 + $0xc8] sm:$0xf] %v536
                  %v538 = vld [vmem:[%s530 + $0x24c] sm:$0xf]
                  %539 = vst [vmem:[%s531 + $0x12c] sm:$0xf] %v538
                  %s540 = sadd.s32 1, %s529
                  %p541 = scmp.ge.s32.totalorder %s540, %s517
                  %s542 = scalar_select %p541, 0, %s540
                  %s543 = smul.u32 %s542, 4
                  %s544 = smul.u32 %s542, 4
                  %s545 = scalar_lea.vmem %s520, %s543
                  %s546 = scalar_lea.vmem %s522, %s544 [#allocation2]
                $region84: #{lenet_logits.3} parent=57 // loop_footer
                  %s526 = sadd.s32 %s524, 1
                $region85: #{lenet_logits.3} parent=57 // loop_footer_branch
                  %523 = sbr.rel target = $region81
                $region86: #{lenet_logits.3} parent=57 // loop_exit
                  _
              $region58: #{lenet_logits.3} parent=35 // pred_fallthru
                _
            $region36: #{lenet_logits.3} parent=31 // pred_fallthru
              _
            // Predicated region
            $region37: #{lenet_logits.3} parent=31 // pred_check
              _
            $region38: #{lenet_logits.3} parent=31 // pred_check_branch
              %149 = sbr.rel (0) target = $region40
            $region39: #{lenet_logits.3} parent=31 // pred_region
              %s151 = sshrl.u32 %s138, 4
              // While loop
              $region41: #{lenet_logits.3} parent=39 // loop_pre_header
                _
              $region42: #{lenet_logits.3} parent=39 // loop_header
                %s153 = sphi 0, %s155
                %p154 = scmp.ge.s32.totalorder %s153, %s151
                %s158 = sphi 0, %s291
                %s159 = sphi %s142, %s294
                %s160 = sphi %s134, %s295
              $region43: #{lenet_logits.3} parent=39 // loop_header_branch
                %157 = sbr.rel (%p154) target = $region47
              $region44: #{lenet_logits.3} parent=39 // loop_body
                %v161 = vld [vmem:[%s159] sm:$0xf]
                %162 = vst [vmem:[%s160] sm:$0xf] %v161
                %v163 = vld [vmem:[%s159 + $0x4] sm:$0xf]
                %164 = vst [vmem:[%s160 + $0x4] sm:$0xf] %v163
                %v165 = vld [vmem:[%s159 + $0x8] sm:$0xf]
                %166 = vst [vmem:[%s160 + $0x8] sm:$0xf] %v165
                %v167 = vld [vmem:[%s159 + $0xc] sm:$0xf]
                %168 = vst [vmem:[%s160 + $0xc] sm:$0xf] %v167
                %v169 = vld [vmem:[%s159 + $0x10] sm:$0xf]
                %170 = vst [vmem:[%s160 + $0x10] sm:$0xf] %v169
                %v171 = vld [vmem:[%s159 + $0x14] sm:$0xf]
                %172 = vst [vmem:[%s160 + $0x14] sm:$0xf] %v171
                %v173 = vld [vmem:[%s159 + $0x18] sm:$0xf]
                %174 = vst [vmem:[%s160 + $0x18] sm:$0xf] %v173
                %v175 = vld [vmem:[%s159 + $0x1c] sm:$0xf]
                %176 = vst [vmem:[%s160 + $0x1c] sm:$0xf] %v175
                %v177 = vld [vmem:[%s159 + $0x20] sm:$0xf]
                %178 = vst [vmem:[%s160 + $0x20] sm:$0xf] %v177
                %v179 = vld [vmem:[%s159 + $0x24] sm:$0xf]
                %180 = vst [vmem:[%s160 + $0x24] sm:$0xf] %v179
                %v181 = vld [vmem:[%s159 + $0x28] sm:$0xf]
                %182 = vst [vmem:[%s160 + $0x28] sm:$0xf] %v181
                %v183 = vld [vmem:[%s159 + $0x2c] sm:$0xf]
                %184 = vst [vmem:[%s160 + $0x2c] sm:$0xf] %v183
                %v185 = vld [vmem:[%s159 + $0x30] sm:$0xf]
                %186 = vst [vmem:[%s160 + $0x30] sm:$0xf] %v185
                %v187 = vld [vmem:[%s159 + $0x34] sm:$0xf]
                %188 = vst [vmem:[%s160 + $0x34] sm:$0xf] %v187
                %v189 = vld [vmem:[%s159 + $0x38] sm:$0xf]
                %190 = vst [vmem:[%s160 + $0x38] sm:$0xf] %v189
                %v191 = vld [vmem:[%s159 + $0x3c] sm:$0xf]
                %192 = vst [vmem:[%s160 + $0x3c] sm:$0xf] %v191
                %v193 = vld [vmem:[%s159 + $0xc4] sm:$0xf]
                %194 = vst [vmem:[%s160 + $0x64] sm:$0xf] %v193
                %v195 = vld [vmem:[%s159 + $0xc8] sm:$0xf]
                %196 = vst [vmem:[%s160 + $0x68] sm:$0xf] %v195
                %v197 = vld [vmem:[%s159 + $0xcc] sm:$0xf]
                %198 = vst [vmem:[%s160 + $0x6c] sm:$0xf] %v197
                %v199 = vld [vmem:[%s159 + $0xd0] sm:$0xf]
                %200 = vst [vmem:[%s160 + $0x70] sm:$0xf] %v199
                %v201 = vld [vmem:[%s159 + $0xd4] sm:$0xf]
                %202 = vst [vmem:[%s160 + $0x74] sm:$0xf] %v201
                %v203 = vld [vmem:[%s159 + $0xd8] sm:$0xf]
                %204 = vst [vmem:[%s160 + $0x78] sm:$0xf] %v203
                %v205 = vld [vmem:[%s159 + $0xdc] sm:$0xf]
                %206 = vst [vmem:[%s160 + $0x7c] sm:$0xf] %v205
                %v207 = vld [vmem:[%s159 + $0xe0] sm:$0xf]
                %208 = vst [vmem:[%s160 + $0x80] sm:$0xf] %v207
                %v209 = vld [vmem:[%s159 + $0xe4] sm:$0xf]
                %210 = vst [vmem:[%s160 + $0x84] sm:$0xf] %v209
                %v211 = vld [vmem:[%s159 + $0xe8] sm:$0xf]
                %212 = vst [vmem:[%s160 + $0x88] sm:$0xf] %v211
                %v213 = vld [vmem:[%s159 + $0xec] sm:$0xf]
                %214 = vst [vmem:[%s160 + $0x8c] sm:$0xf] %v213
                %v215 = vld [vmem:[%s159 + $0xf0] sm:$0xf]
                %216 = vst [vmem:[%s160 + $0x90] sm:$0xf] %v215
                %v217 = vld [vmem:[%s159 + $0xf4] sm:$0xf]
                %218 = vst [vmem:[%s160 + $0x94] sm:$0xf] %v217
                %v219 = vld [vmem:[%s159 + $0xf8] sm:$0xf]
                %220 = vst [vmem:[%s160 + $0x98] sm:$0xf] %v219
                %v221 = vld [vmem:[%s159 + $0xfc] sm:$0xf]
                %222 = vst [vmem:[%s160 + $0x9c] sm:$0xf] %v221
                %v223 = vld [vmem:[%s159 + $0x100] sm:$0xf]
                %224 = vst [vmem:[%s160 + $0xa0] sm:$0xf] %v223
                %v225 = vld [vmem:[%s159 + $0x188] sm:$0xf]
                %226 = vst [vmem:[%s160 + $0xc8] sm:$0xf] %v225
                %v227 = vld [vmem:[%s159 + $0x18c] sm:$0xf]
                %228 = vst [vmem:[%s160 + $0xcc] sm:$0xf] %v227
                %v229 = vld [vmem:[%s159 + $0x190] sm:$0xf]
                %230 = vst [vmem:[%s160 + $0xd0] sm:$0xf] %v229
                %v231 = vld [vmem:[%s159 + $0x194] sm:$0xf]
                %232 = vst [vmem:[%s160 + $0xd4] sm:$0xf] %v231
                %v233 = vld [vmem:[%s159 + $0x198] sm:$0xf]
                %234 = vst [vmem:[%s160 + $0xd8] sm:$0xf] %v233
                %v235 = vld [vmem:[%s159 + $0x19c] sm:$0xf]
                %236 = vst [vmem:[%s160 + $0xdc] sm:$0xf] %v235
                %v237 = vld [vmem:[%s159 + $0x1a0] sm:$0xf]
                %238 = vst [vmem:[%s160 + $0xe0] sm:$0xf] %v237
                %v239 = vld [vmem:[%s159 + $0x1a4] sm:$0xf]
                %240 = vst [vmem:[%s160 + $0xe4] sm:$0xf] %v239
                %v241 = vld [vmem:[%s159 + $0x1a8] sm:$0xf]
                %242 = vst [vmem:[%s160 + $0xe8] sm:$0xf] %v241
                %v243 = vld [vmem:[%s159 + $0x1ac] sm:$0xf]
                %244 = vst [vmem:[%s160 + $0xec] sm:$0xf] %v243
                %v245 = vld [vmem:[%s159 + $0x1b0] sm:$0xf]
                %246 = vst [vmem:[%s160 + $0xf0] sm:$0xf] %v245
                %v247 = vld [vmem:[%s159 + $0x1b4] sm:$0xf]
                %248 = vst [vmem:[%s160 + $0xf4] sm:$0xf] %v247
                %v249 = vld [vmem:[%s159 + $0x1b8] sm:$0xf]
                %250 = vst [vmem:[%s160 + $0xf8] sm:$0xf] %v249
                %v251 = vld [vmem:[%s159 + $0x1bc] sm:$0xf]
                %252 = vst [vmem:[%s160 + $0xfc] sm:$0xf] %v251
                %v253 = vld [vmem:[%s159 + $0x1c0] sm:$0xf]
                %254 = vst [vmem:[%s160 + $0x100] sm:$0xf] %v253
                %v255 = vld [vmem:[%s159 + $0x1c4] sm:$0xf]
                %256 = vst [vmem:[%s160 + $0x104] sm:$0xf] %v255
                %v257 = vld [vmem:[%s159 + $0x24c] sm:$0xf]
                %258 = vst [vmem:[%s160 + $0x12c] sm:$0xf] %v257
                %v259 = vld [vmem:[%s159 + $0x250] sm:$0xf]
                %260 = vst [vmem:[%s160 + $0x130] sm:$0xf] %v259
                %v261 = vld [vmem:[%s159 + $0x254] sm:$0xf]
                %262 = vst [vmem:[%s160 + $0x134] sm:$0xf] %v261
                %v263 = vld [vmem:[%s159 + $0x258] sm:$0xf]
                %264 = vst [vmem:[%s160 + $0x138] sm:$0xf] %v263
                %v265 = vld [vmem:[%s159 + $0x25c] sm:$0xf]
                %266 = vst [vmem:[%s160 + $0x13c] sm:$0xf] %v265
                %v267 = vld [vmem:[%s159 + $0x260] sm:$0xf]
                %268 = vst [vmem:[%s160 + $0x140] sm:$0xf] %v267
                %v269 = vld [vmem:[%s159 + $0x264] sm:$0xf]
                %270 = vst [vmem:[%s160 + $0x144] sm:$0xf] %v269
                %v271 = vld [vmem:[%s159 + $0x268] sm:$0xf]
                %272 = vst [vmem:[%s160 + $0x148] sm:$0xf] %v271
                %v273 = vld [vmem:[%s159 + $0x26c] sm:$0xf]
                %274 = vst [vmem:[%s160 + $0x14c] sm:$0xf] %v273
                %v275 = vld [vmem:[%s159 + $0x270] sm:$0xf]
                %276 = vst [vmem:[%s160 + $0x150] sm:$0xf] %v275
                %v277 = vld [vmem:[%s159 + $0x274] sm:$0xf]
                %278 = vst [vmem:[%s160 + $0x154] sm:$0xf] %v277
                %v279 = vld [vmem:[%s159 + $0x278] sm:$0xf]
                %280 = vst [vmem:[%s160 + $0x158] sm:$0xf] %v279
                %v281 = vld [vmem:[%s159 + $0x27c] sm:$0xf]
                %282 = vst [vmem:[%s160 + $0x15c] sm:$0xf] %v281
                %v283 = vld [vmem:[%s159 + $0x280] sm:$0xf]
                %284 = vst [vmem:[%s160 + $0x160] sm:$0xf] %v283
                %v285 = vld [vmem:[%s159 + $0x284] sm:$0xf]
                %286 = vst [vmem:[%s160 + $0x164] sm:$0xf] %v285
                %v287 = vld [vmem:[%s159 + $0x288] sm:$0xf]
                %288 = vst [vmem:[%s160 + $0x168] sm:$0xf] %v287
                %s289 = sadd.s32 1, %s158
                %p290 = scmp.ge.s32.totalorder %s289, %s151
                %s291 = scalar_select %p290, 0, %s289
                %s292 = smul.u32 %s291, 64
                %s293 = smul.u32 %s291, 64
                %s294 = scalar_lea.vmem %s142, %s292
                %s295 = scalar_lea.vmem %s134, %s293 [#allocation2]
              $region45: #{lenet_logits.3} parent=39 // loop_footer
                %s155 = sadd.s32 %s153, 1
              $region46: #{lenet_logits.3} parent=39 // loop_footer_branch
                %152 = sbr.rel target = $region42
              $region47: #{lenet_logits.3} parent=39 // loop_exit
                _
              %s296 = sshrl.u32 %s138, 4
              %s297 = sand.u32 %s138, 15
              %s298 = smul.u32 %s296, 16
              %s299 = smul.u32 4, %s298
              %s300 = scalar_lea.vmem %s142, %s299
              %s301 = smul.u32 4, %s298
              %s302 = scalar_lea.vmem %s134, %s301 [#allocation2]
              // While loop
              $region48: #{lenet_logits.3} parent=39 // loop_pre_header
                _
              $region49: #{lenet_logits.3} parent=39 // loop_header
                %s304 = sphi 0, %s306
                %p305 = scmp.ge.s32.totalorder %s304, %s297
                %s309 = sphi 0, %s322
                %s310 = sphi %s300, %s325
                %s311 = sphi %s302, %s326
              $region50: #{lenet_logits.3} parent=39 // loop_header_branch
                %308 = sbr.rel (%p305) target = $region54
              $region51: #{lenet_logits.3} parent=39 // loop_body
                %v312 = vld [vmem:[%s310] sm:$0xf]
                %313 = vst [vmem:[%s311] sm:$0xf] %v312
                %v314 = vld [vmem:[%s310 + $0xc4] sm:$0xf]
                %315 = vst [vmem:[%s311 + $0x64] sm:$0xf] %v314
                %v316 = vld [vmem:[%s310 + $0x188] sm:$0xf]
                %317 = vst [vmem:[%s311 + $0xc8] sm:$0xf] %v316
                %v318 = vld [vmem:[%s310 + $0x24c] sm:$0xf]
                %319 = vst [vmem:[%s311 + $0x12c] sm:$0xf] %v318
                %s320 = sadd.s32 1, %s309
                %p321 = scmp.ge.s32.totalorder %s320, %s297
                %s322 = scalar_select %p321, 0, %s320
                %s323 = smul.u32 %s322, 4
                %s324 = smul.u32 %s322, 4
                %s325 = scalar_lea.vmem %s300, %s323
                %s326 = scalar_lea.vmem %s302, %s324 [#allocation2]
              $region52: #{lenet_logits.3} parent=39 // loop_footer
                %s306 = sadd.s32 %s304, 1
              $region53: #{lenet_logits.3} parent=39 // loop_footer_branch
                %303 = sbr.rel target = $region49
              $region54: #{lenet_logits.3} parent=39 // loop_exit
                _
            $region40: #{lenet_logits.3} parent=31 // pred_fallthru
              _
          $region32: #{lenet_logits.3} parent=27 // pred_fallthru
            _
          %547 = vnop
        $region28: #{lenet_logits.3} parent=23 // pred_fallthru
          _
      $region24: #{lenet_logits.3} parent=5 // pred_fallthru
        _
      %p548 = scmp.le.s32.totalorder 1, %s9
      %p549 = scmp.lt.s32.totalorder %s9, 3
      %p550 = pnand %p548, %p549
      %p551 = pneg %p550
      // Predicated region
      $region87: #{lenet_logits.3} parent=5 // pred_check
        _
      $region88: #{lenet_logits.3} parent=5 // pred_check_branch
        %553 = sbr.rel (%p550) target = $region90
      $region89: #{lenet_logits.3} parent=5 // pred_region
        %s554 = ssub.s32 %s9, 1
        %s555 = sand.u32 %s22, 1
        %s556 = sand.u32 %s22, 1
        %s557 = smul.addr %s556, 400
        %s558 = scalar_lea.vmem [#allocation2], %s557
        // Predicated region
        $region91: #{lenet_logits.3} parent=89 // pred_check
          %p559 = pneg %p35
        $region92: #{lenet_logits.3} parent=89 // pred_check_branch
          %561 = sbr.rel (%p559) target = $region94
        $region93: #{lenet_logits.3} parent=89 // pred_region
          _
        $region94: #{lenet_logits.3} parent=89 // pred_fallthru
          _
        %s562 = sand.u32 %s22, 1
        %s563 = sand.u32 %s22, 1
        %s564 = smul.addr %s563, 400
        %s565 = scalar_lea.vmem [#allocation2], %s564
        %p566 = pneg %p35
        %p567 = pneg %p32
        %p568 = pneg %p56
        %p569 = pneg %p53
        %p570 = pneg %p77
        %p571 = pneg %p74
        %p572 = pneg %p103
        %p573 = pneg %p100
        %s574 = sand.u32 %s90, 1
        %s575 = sand.u32 %s90, 1
        %s576 = smul.addr %s575, 100
        %s577 = scalar_lea.vmem [#allocation3], %s576
        %s578 = smul.u32 25, %s14
        %s579 = ssub.s32 49, %s578
        %p580 = scmp.lt.s32.totalorder %s579, 25
        %s581 = scalar_select %p580, %s579, 25
        %s582 = smul.u32 256, %s581
        %s583 = smul.u32 25, %s14
        %s584 = ssub.s32 49, %s583
        %p585 = scmp.lt.s32.totalorder %s584, 25
        %s586 = scalar_select %p585, %s584, 25
        %s587 = smul.u32 64, %s586
        %v589 = vld [vmem:[%s1] sm:$0xf]
        %v590 = vld [vmem:[%s1 + $0x4] sm:$0xf]
        %v591 = vld [vmem:[%s1 + $0x8] sm:$0xf]
        %v592 = vld [vmem:[%s1 + $0xc] sm:$0xf]
        %v593 = vld [vmem:[%s1 + $0x10] sm:$0xf]
        %v594 = vld [vmem:[%s1 + $0x14] sm:$0xf]
        %v595 = vld [vmem:[%s1 + $0x18] sm:$0xf]
        %v596 = vld [vmem:[%s1 + $0x1c] sm:$0xf]
        %v597 = vld [vmem:[%s1 + $0x20] sm:$0xf]
        %v598 = vld [vmem:[%s1 + $0x24] sm:$0x3]
        %v599 = vld [vmem:[%s558] sm:$0xf]
        %v600 = vld [vmem:[%s558 + $0x4] sm:$0xf]
        %v601 = vld [vmem:[%s558 + $0x8] sm:$0xf]
        %v602 = vld [vmem:[%s558 + $0xc] sm:$0xf]
        %v603 = vld [vmem:[%s558 + $0x10] sm:$0xf]
        %v604 = vld [vmem:[%s558 + $0x14] sm:$0xf]
        %v605 = vld [vmem:[%s558 + $0x18] sm:$0xf]
        %v606 = vld [vmem:[%s558 + $0x1c] sm:$0xf]
        %v607 = vld [vmem:[%s558 + $0x20] sm:$0xf]
        %v608 = vld [vmem:[%s558 + $0x24] sm:$0xf]
        %v609 = vld [vmem:[%s558 + $0x28] sm:$0xf]
        %v610 = vld [vmem:[%s558 + $0x2c] sm:$0xf]
        %v611 = vld [vmem:[%s558 + $0x30] sm:$0xf]
        %v612 = vld [vmem:[%s558 + $0x34] sm:$0xf]
        %v613 = vld [vmem:[%s558 + $0x38] sm:$0xf]
        %v614 = vld [vmem:[%s558 + $0x3c] sm:$0xf]
        %v615 = vld [vmem:[%s558 + $0x40] sm:$0xf]
        %v616 = vld [vmem:[%s558 + $0x44] sm:$0xf]
        %v617 = vld [vmem:[%s558 + $0x48] sm:$0xf]
        %v618 = vld [vmem:[%s558 + $0x4c] sm:$0xf]
        %v619 = vld [vmem:[%s558 + $0x50] sm:$0xf]
        %v620 = vld [vmem:[%s558 + $0x54] sm:$0xf]
        %v621 = vld [vmem:[%s558 + $0x58] sm:$0xf]
        %v622 = vld [vmem:[%s558 + $0x5c] sm:$0xf]
        %v623 = vld [vmem:[%s558 + $0x60] sm:$0xf]
        %v649 = vunpack.c.l.b16 %v599
        %v650 = vunpack.c.l.b16 %v600
        %v651 = vunpack.c.l.b16 %v601
        %v652 = vunpack.c.l.b16 %v602
        %v653 = vunpack.c.l.b16 %v603
        %v654 = vunpack.c.l.b16 %v604
        %v655 = vunpack.c.l.b16 %v605
        %v656 = vunpack.c.l.b16 %v606
        %v657 = vunpack.c.l.b16 %v607
        %v658 = vunpack.c.l.b16 %v608
        %v659 = vunpack.c.l.b16 %v609
        %v660 = vunpack.c.l.b16 %v610
        %v661 = vunpack.c.l.b16 %v611
        %v662 = vunpack.c.l.b16 %v612
        %v663 = vunpack.c.l.b16 %v613
        %v664 = vunpack.c.l.b16 %v614
        %v665 = vunpack.c.l.b16 %v615
        %v666 = vunpack.c.l.b16 %v616
        %v667 = vunpack.c.l.b16 %v617
        %v668 = vunpack.c.l.b16 %v618
        %v669 = vunpack.c.l.b16 %v619
        %v670 = vunpack.c.l.b16 %v620
        %v671 = vunpack.c.l.b16 %v621
        %v672 = vunpack.c.l.b16 %v622
        %v673 = vunpack.c.l.b16 %v623
        %v674 = vpack.c.b16 %v650, %v649
        %v675 = vpack.c.b16 %v652, %v651
        %v676 = vpack.c.b16 %v654, %v653
        %v677 = vpack.c.b16 %v656, %v655
        %v678 = vpack.c.b16 %v658, %v657
        %v679 = vpack.c.b16 %v660, %v659
        %v680 = vpack.c.b16 %v662, %v661
        %v681 = vpack.c.b16 %v664, %v663
        %v682 = vpack.c.b16 %v666, %v665
        %v683 = vpack.c.b16 %v668, %v667
        %v684 = vpack.c.b16 %v670, %v669
        %v685 = vpack.c.b16 %v672, %v671
        %v686 = vpack.c.b16 %v673, %v673
        %v697 = vunpack.c.l.b16 %v589
        %v698 = vunpack.c.l.b16 %v590
        %v699 = vunpack.c.l.b16 %v591
        %v700 = vunpack.c.l.b16 %v592
        %v701 = vunpack.c.l.b16 %v593
        %v702 = vunpack.c.l.b16 %v594
        %v703 = vunpack.c.l.b16 %v595
        %v704 = vunpack.c.l.b16 %v596
        %v705 = vunpack.c.l.b16 %v597
        %v706 = vunpack.c.l.b16 %v598
        %v707 = vpack.c.b16 %v698, %v697
        %v708 = vpack.c.b16 %v700, %v699
        %v709 = vpack.c.b16 %v702, %v701
        %v710 = vpack.c.b16 %v704, %v703
        %v711 = vpack.c.b16 %v706, %v705
        %vm716 = vcmask 613376
        %v718 = vsel %vm716, %v674, 0
        %v721 = vsel %vm716, %v675, 0
        %v724 = vsel %vm716, %v676, 0
        %v727 = vsel %vm716, %v677, 0
        %v730 = vsel %vm716, %v678, 0
        %v733 = vsel %vm716, %v679, 0
        %v736 = vsel %vm716, %v680, 0
        %v739 = vsel %vm716, %v681, 0
        %v742 = vsel %vm716, %v682, 0
        %v745 = vsel %vm716, %v683, 0
        %v748 = vsel %vm716, %v684, 0
        %v751 = vsel %vm716, %v685, 0
        %v754 = vsel %vm716, %v686, 0
        %vm756 = vcmask 1044480
        %vm757 = vcmask 1045504
        %v758 = vsel %vm756, 4294967295, 65535
        %v759 = vsel %vm757, %v758, 0
        %v761 = vand.u32 %v711, %v759
        %763 = vmatprep.subr.bf16.mxu0 0
        %764 = vmatpush1.bf16.msra.mxu0 %v707
        %765 = vmatprep.subr.bf16.mxu0 0
        %766 = vmatpush1.bf16.msra.mxu0 %v708
        %767 = vmatprep.subr.bf16.mxu0 0
        %768 = vmatpush1.bf16.msra.mxu0 %v709
        %769 = vmatprep.subr.bf16.mxu0 0
        %770 = vmatpush1.bf16.msra.mxu0 %v710
        %771 = vmatprep.subr.bf16.mxu0 0
        %772 = vmatpush1.bf16.msra.mxu0 %v761
        %773 = vmatprep.subr.bf16.mxu0 0
        %774 = vmatpush1.bf16.msra.mxu0 0
        %775 = vmatprep.subr.bf16.mxu0 0
        %776 = vmatpush1.bf16.msra.mxu0 0
        %777 = vmatprep.subr.bf16.mxu0 0
        %778 = vmatpush1.bf16.msra.mxu0 0
        %779 = vmatprep.subr.bf16.mxu0 0
        %780 = vmatpush1.bf16.msra.mxu0 0
        %781 = vmatprep.subr.bf16.mxu0 0
        %782 = vmatpush1.bf16.msra.mxu0 0
        %783 = vmatprep.subr.bf16.mxu0 0
        %784 = vmatpush1.bf16.msra.mxu0 0
        %785 = vmatprep.subr.bf16.mxu0 0
        %786 = vmatpush1.bf16.msra.mxu0 0
        %787 = vmatprep.subr.bf16.mxu0 0
        %788 = vmatpush1.bf16.msra.mxu0 0
        %789 = vmatprep.subr.bf16.mxu0 0
        %790 = vmatpush1.bf16.msra.mxu0 0
        %791 = vmatprep.subr.bf16.mxu0 0
        %792 = vmatpush1.bf16.msra.mxu0 0
        %793 = vmatprep.subr.bf16.mxu0 0
        %794 = vmatpush1.bf16.msra.mxu0 0
        %795 = vmatprep.mubr.bf16.mxu0 0
        %796 = vmatmul.mubr.bf16.gmra.mrb[0].mxu0 %v718
        %v797 = vpop.f32.mrb[0].mxu0
        %v798 = vadd.f32 0.0, %v797
        %v799 = vpop.f32.mrb[0].mxu0
        %v800 = vpop.f32.mrb[0].mxu0
        %v801 = vadd.f32 0.0, %v800
        %v802 = vpop.f32.mrb[0].mxu0
        %803 = vmatprep.mubr.bf16.mxu0 0
        %804 = vmatmul.mubr.bf16.gmra.mrb[0].mxu0 %v721
        %v805 = vpop.f32.mrb[0].mxu0
        %v806 = vadd.f32 0.0, %v805
        %v807 = vpop.f32.mrb[0].mxu0
        %v808 = vpop.f32.mrb[0].mxu0
        %v809 = vadd.f32 0.0, %v808
        %v810 = vpop.f32.mrb[0].mxu0
        %811 = vmatprep.mubr.bf16.mxu0 0
        %812 = vmatmul.mubr.bf16.gmra.mrb[0].mxu0 %v724
        %v813 = vpop.f32.mrb[0].mxu0
        %v814 = vadd.f32 0.0, %v813
        %v815 = vpop.f32.mrb[0].mxu0
        %v816 = vpop.f32.mrb[0].mxu0
        %v817 = vadd.f32 0.0, %v816
        %v818 = vpop.f32.mrb[0].mxu0
        %819 = vmatprep.mubr.bf16.mxu0 0
        %820 = vmatmul.mubr.bf16.gmra.mrb[0].mxu0 %v727
        %v821 = vpop.f32.mrb[0].mxu0
        %v822 = vadd.f32 0.0, %v821
        %v823 = vpop.f32.mrb[0].mxu0
        %v824 = vpop.f32.mrb[0].mxu0
        %v825 = vadd.f32 0.0, %v824
        %v826 = vpop.f32.mrb[0].mxu0
        %827 = vmatprep.mubr.bf16.mxu0 0
        %828 = vmatmul.mubr.bf16.gmra.mrb[0].mxu0 %v730
        %v829 = vpop.f32.mrb[0].mxu0
        %v830 = vadd.f32 0.0, %v829
        %v831 = vpop.f32.mrb[0].mxu0
        %v832 = vpop.f32.mrb[0].mxu0
        %v833 = vadd.f32 0.0, %v832
        %v834 = vpop.f32.mrb[0].mxu0
        %835 = vmatprep.mubr.bf16.mxu0 0
        %836 = vmatmul.mubr.bf16.gmra.mrb[0].mxu0 %v733
        %v837 = vpop.f32.mrb[0].mxu0
        %v838 = vadd.f32 0.0, %v837
        %v839 = vpop.f32.mrb[0].mxu0
        %v840 = vpop.f32.mrb[0].mxu0
        %v841 = vadd.f32 0.0, %v840
        %v842 = vpop.f32.mrb[0].mxu0
        %843 = vmatprep.mubr.bf16.mxu0 0
        %844 = vmatmul.mubr.bf16.gmra.mrb[0].mxu0 %v736
        %v845 = vpop.f32.mrb[0].mxu0
        %v846 = vadd.f32 0.0, %v845
        %v847 = vpop.f32.mrb[0].mxu0
        %v848 = vpop.f32.mrb[0].mxu0
        %v849 = vadd.f32 0.0, %v848
        %v850 = vpop.f32.mrb[0].mxu0
        %851 = vmatprep.mubr.bf16.mxu0 0
        %852 = vmatmul.mubr.bf16.gmra.mrb[0].mxu0 %v739
        %v853 = vpop.f32.mrb[0].mxu0
        %v854 = vadd.f32 0.0, %v853
        %v855 = vpop.f32.mrb[0].mxu0
        %v856 = vpop.f32.mrb[0].mxu0
        %v857 = vadd.f32 0.0, %v856
        %v858 = vpop.f32.mrb[0].mxu0
        %859 = vmatprep.mubr.bf16.mxu0 0
        %860 = vmatmul.mubr.bf16.gmra.mrb[0].mxu0 %v742
        %v861 = vpop.f32.mrb[0].mxu0
        %v862 = vadd.f32 0.0, %v861
        %v863 = vpop.f32.mrb[0].mxu0
        %v864 = vpop.f32.mrb[0].mxu0
        %v865 = vadd.f32 0.0, %v864
        %v866 = vpop.f32.mrb[0].mxu0
        %867 = vmatprep.mubr.bf16.mxu0 0
        %868 = vmatmul.mubr.bf16.gmra.mrb[0].mxu0 %v745
        %v869 = vpop.f32.mrb[0].mxu0
        %v870 = vadd.f32 0.0, %v869
        %v871 = vpop.f32.mrb[0].mxu0
        %v872 = vpop.f32.mrb[0].mxu0
        %v873 = vadd.f32 0.0, %v872
        %v874 = vpop.f32.mrb[0].mxu0
        %875 = vmatprep.mubr.bf16.mxu0 0
        %876 = vmatmul.mubr.bf16.gmra.mrb[0].mxu0 %v748
        %v877 = vpop.f32.mrb[0].mxu0
        %v878 = vadd.f32 0.0, %v877
        %v879 = vpop.f32.mrb[0].mxu0
        %v880 = vpop.f32.mrb[0].mxu0
        %v881 = vadd.f32 0.0, %v880
        %v882 = vpop.f32.mrb[0].mxu0
        %883 = vmatprep.mubr.bf16.mxu0 0
        %884 = vmatmul.mubr.bf16.gmra.mrb[0].mxu0 %v751
        %v885 = vpop.f32.mrb[0].mxu0
        %v886 = vadd.f32 0.0, %v885
        %v887 = vpop.f32.mrb[0].mxu0
        %v888 = vpop.f32.mrb[0].mxu0
        %v889 = vadd.f32 0.0, %v888
        %v890 = vpop.f32.mrb[0].mxu0
        %891 = vmatprep.mubr.bf16.mxu0 0
        %892 = vmatmul.mubr.bf16.gmra.mrb[0].mxu0 %v754
        %v893 = vpop.f32.mrb[0].mxu0
        %v894 = vadd.f32 0.0, %v893
        %v895 = vpop.f32.mrb[0].mxu0
        %v896 = vpop.f32.mrb[0].mxu0
        %v897 = vpop.f32.mrb[0].mxu0
        %898 = vdwg.mxu0
        %s899 = scalar_lea.vmem %s558, 100 [#allocation2]
        %v900 = vld [vmem:[%s899] sm:$0xf]
        %v901 = vld [vmem:[%s899 + $0x4] sm:$0xf]
        %v902 = vld [vmem:[%s899 + $0x8] sm:$0xf]
        %v903 = vld [vmem:[%s899 + $0xc] sm:$0xf]
        %v904 = vld [vmem:[%s899 + $0x10] sm:$0xf]
        %v905 = vld [vmem:[%s899 + $0x14] sm:$0xf]
        %v906 = vld [vmem:[%s899 + $0x18] sm:$0xf]
        %v907 = vld [vmem:[%s899 + $0x1c] sm:$0xf]
        %v908 = vld [vmem:[%s899 + $0x20] sm:$0xf]
        %v909 = vld [vmem:[%s899 + $0x24] sm:$0xf]
        %v910 = vld [vmem:[%s899 + $0x28] sm:$0xf]
        %v911 = vld [vmem:[%s899 + $0x2c] sm:$0xf]
        %v912 = vld [vmem:[%s899 + $0x30] sm:$0xf]
        %v913 = vld [vmem:[%s899 + $0x34] sm:$0xf]
        %v914 = vld [vmem:[%s899 + $0x38] sm:$0xf]
        %v915 = vld [vmem:[%s899 + $0x3c] sm:$0xf]
        %v916 = vld [vmem:[%s899 + $0x40] sm:$0xf]
        %v917 = vld [vmem:[%s899 + $0x44] sm:$0xf]
        %v918 = vld [vmem:[%s899 + $0x48] sm:$0xf]
        %v919 = vld [vmem:[%s899 + $0x4c] sm:$0xf]
        %v920 = vld [vmem:[%s899 + $0x50] sm:$0xf]
        %v921 = vld [vmem:[%s899 + $0x54] sm:$0xf]
        %v922 = vld [vmem:[%s899 + $0x58] sm:$0xf]
        %v923 = vld [vmem:[%s899 + $0x5c] sm:$0xf]
        %v924 = vld [vmem:[%s899 + $0x60] sm:$0xf]
        %v950 = vunpack.c.l.b16 %v900
        %v951 = vunpack.c.l.b16 %v901
        %v952 = vunpack.c.l.b16 %v902
        %v953 = vunpack.c.l.b16 %v903
        %v954 = vunpack.c.l.b16 %v904
        %v955 = vunpack.c.l.b16 %v905
        %v956 = vunpack.c.l.b16 %v906
        %v957 = vunpack.c.l.b16 %v907
        %v958 = vunpack.c.l.b16 %v908
        %v959 = vunpack.c.l.b16 %v909
        %v960 = vunpack.c.l.b16 %v910
        %v961 = vunpack.c.l.b16 %v911
        %v962 = vunpack.c.l.b16 %v912
        %v963 = vunpack.c.l.b16 %v913
        %v964 = vunpack.c.l.b16 %v914
        %v965 = vunpack.c.l.b16 %v915
        %v966 = vunpack.c.l.b16 %v916
        %v967 = vunpack.c.l.b16 %v917
        %v968 = vunpack.c.l.b16 %v918
        %v969 = vunpack.c.l.b16 %v919
        %v970 = vunpack.c.l.b16 %v920
        %v971 = vunpack.c.l.b16 %v921
        %v972 = vunpack.c.l.b16 %v922
        %v973 = vunpack.c.l.b16 %v923
        %v974 = vunpack.c.l.b16 %v924
        %v975 = vpack.c.b16 %v951, %v950
        %v976 = vpack.c.b16 %v953, %v952
        %v977 = vpack.c.b16 %v955, %v954
        %v978 = vpack.c.b16 %v957, %v956
        %v979 = vpack.c.b16 %v959, %v958
        %v980 = vpack.c.b16 %v961, %v960
        %v981 = vpack.c.b16 %v963, %v962
        %v982 = vpack.c.b16 %v965, %v964
        %v983 = vpack.c.b16 %v967, %v966
        %v984 = vpack.c.b16 %v969, %v968
        %v985 = vpack.c.b16 %v971, %v970
        %v986 = vpack.c.b16 %v973, %v972
        %v987 = vpack.c.b16 %v974, %v974
        %v989 = vsel %vm716, %v975, 0
        %v992 = vsel %vm716, %v976, 0
        %v995 = vsel %vm716, %v977, 0
        %v998 = vsel %vm716, %v978, 0
        %v1001 = vsel %vm716, %v979, 0
        %v1004 = vsel %vm716, %v980, 0
        %v1007 = vsel %vm716, %v981, 0
        %v1010 = vsel %vm716, %v982, 0
        %v1013 = vsel %vm716, %v983, 0
        %v1016 = vsel %vm716, %v984, 0
        %v1019 = vsel %vm716, %v985, 0
        %v1022 = vsel %vm716, %v986, 0
        %v1025 = vsel %vm716, %v987, 0
        %1027 = vmatprep.subr.bf16.mxu0 0
        %1028 = vmatpush1.bf16.msra.mxu0 %v707
        %1029 = vmatprep.subr.bf16.mxu0 0
        %1030 = vmatpush1.bf16.msra.mxu0 %v708
        %1031 = vmatprep.subr.bf16.mxu0 0
        %1032 = vmatpush1.bf16.msra.mxu0 %v709
        %1033 = vmatprep.subr.bf16.mxu0 0
        %1034 = vmatpush1.bf16.msra.mxu0 %v710
        %1035 = vmatprep.subr.bf16.mxu0 0
        %1036 = vmatpush1.bf16.msra.mxu0 %v761
        %1037 = vmatprep.subr.bf16.mxu0 0
        %1038 = vmatpush1.bf16.msra.mxu0 0
        %1039 = vmatprep.subr.bf16.mxu0 0
        %1040 = vmatpush1.bf16.msra.mxu0 0
        %1041 = vmatprep.subr.bf16.mxu0 0
        %1042 = vmatpush1.bf16.msra.mxu0 0
        %1043 = vmatprep.subr.bf16.mxu0 0
        %1044 = vmatpush1.bf16.msra.mxu0 0
        %1045 = vmatprep.subr.bf16.mxu0 0
        %1046 = vmatpush1.bf16.msra.mxu0 0
        %1047 = vmatprep.subr.bf16.mxu0 0
        %1048 = vmatpush1.bf16.msra.mxu0 0
        %1049 = vmatprep.subr.bf16.mxu0 0
        %1050 = vmatpush1.bf16.msra.mxu0 0
        %1051 = vmatprep.subr.bf16.mxu0 0
        %1052 = vmatpush1.bf16.msra.mxu0 0
        %1053 = vmatprep.subr.bf16.mxu0 0
        %1054 = vmatpush1.bf16.msra.mxu0 0
        %1055 = vmatprep.subr.bf16.mxu0 0
        %1056 = vmatpush1.bf16.msra.mxu0 0
        %1057 = vmatprep.subr.bf16.mxu0 0
        %1058 = vmatpush1.bf16.msra.mxu0 0
        %1059 = vmatprep.mubr.bf16.mxu0 0
        %1060 = vmatmul.mubr.bf16.gmra.mrb[0].mxu0 %v989
        %v1061 = vpop.f32.mrb[0].mxu0
        %v1062 = vadd.f32 0.0, %v1061
        %v1063 = vpop.f32.mrb[0].mxu0
        %v1064 = vpop.f32.mrb[0].mxu0
        %v1065 = vadd.f32 0.0, %v1064
        %v1066 = vpop.f32.mrb[0].mxu0
        %1067 = vmatprep.mubr.bf16.mxu0 0
        %1068 = vmatmul.mubr.bf16.gmra.mrb[0].mxu0 %v992
        %v1069 = vpop.f32.mrb[0].mxu0
        %v1070 = vadd.f32 0.0, %v1069
        %v1071 = vpop.f32.mrb[0].mxu0
        %v1072 = vpop.f32.mrb[0].mxu0
        %v1073 = vadd.f32 0.0, %v1072
        %v1074 = vpop.f32.mrb[0].mxu0
        %1075 = vmatprep.mubr.bf16.mxu0 0
        %1076 = vmatmul.mubr.bf16.gmra.mrb[0].mxu0 %v995
        %v1077 = vpop.f32.mrb[0].mxu0
        %v1078 = vadd.f32 0.0, %v1077
        %v1079 = vpop.f32.mrb[0].mxu0
        %v1080 = vpop.f32.mrb[0].mxu0
        %v1081 = vadd.f32 0.0, %v1080
        %v1082 = vpop.f32.mrb[0].mxu0
        %1083 = vmatprep.mubr.bf16.mxu0 0
        %1084 = vmatmul.mubr.bf16.gmra.mrb[0].mxu0 %v998
        %v1085 = vpop.f32.mrb[0].mxu0
        %v1086 = vadd.f32 0.0, %v1085
        %v1087 = vpop.f32.mrb[0].mxu0
        %v1088 = vpop.f32.mrb[0].mxu0
        %v1089 = vadd.f32 0.0, %v1088
        %v1090 = vpop.f32.mrb[0].mxu0
        %1091 = vmatprep.mubr.bf16.mxu0 0
        %1092 = vmatmul.mubr.bf16.gmra.mrb[0].mxu0 %v1001
        %v1093 = vpop.f32.mrb[0].mxu0
        %v1094 = vadd.f32 0.0, %v1093
        %v1095 = vpop.f32.mrb[0].mxu0
        %v1096 = vpop.f32.mrb[0].mxu0
        %v1097 = vadd.f32 0.0, %v1096
        %v1098 = vpop.f32.mrb[0].mxu0
        %1099 = vmatprep.mubr.bf16.mxu0 0
        %1100 = vmatmul.mubr.bf16.gmra.mrb[0].mxu0 %v1004
        %v1101 = vpop.f32.mrb[0].mxu0
        %v1102 = vadd.f32 0.0, %v1101
        %v1103 = vpop.f32.mrb[0].mxu0
        %v1104 = vpop.f32.mrb[0].mxu0
        %v1105 = vadd.f32 0.0, %v1104
        %v1106 = vpop.f32.mrb[0].mxu0
        %1107 = vmatprep.mubr.bf16.mxu0 0
        %1108 = vmatmul.mubr.bf16.gmra.mrb[0].mxu0 %v1007
        %v1109 = vpop.f32.mrb[0].mxu0
        %v1110 = vadd.f32 0.0, %v1109
        %v1111 = vpop.f32.mrb[0].mxu0
        %v1112 = vpop.f32.mrb[0].mxu0
        %v1113 = vadd.f32 0.0, %v1112
        %v1114 = vpop.f32.mrb[0].mxu0
        %1115 = vmatprep.mubr.bf16.mxu0 0
        %1116 = vmatmul.mubr.bf16.gmra.mrb[0].mxu0 %v1010
        %v1117 = vpop.f32.mrb[0].mxu0
        %v1118 = vadd.f32 0.0, %v1117
        %v1119 = vpop.f32.mrb[0].mxu0
        %v1120 = vpop.f32.mrb[0].mxu0
        %v1121 = vadd.f32 0.0, %v1120
        %v1122 = vpop.f32.mrb[0].mxu0
        %1123 = vmatprep.mubr.bf16.mxu0 0
        %1124 = vmatmul.mubr.bf16.gmra.mrb[0].mxu0 %v1013
        %v1125 = vpop.f32.mrb[0].mxu0
        %v1126 = vadd.f32 0.0, %v1125
        %v1127 = vpop.f32.mrb[0].mxu0
        %v1128 = vpop.f32.mrb[0].mxu0
        %v1129 = vadd.f32 0.0, %v1128
        %v1130 = vpop.f32.mrb[0].mxu0
        %1131 = vmatprep.mubr.bf16.mxu0 0
        %1132 = vmatmul.mubr.bf16.gmra.mrb[0].mxu0 %v1016
        %v1133 = vpop.f32.mrb[0].mxu0
        %v1134 = vadd.f32 0.0, %v1133
        %v1135 = vpop.f32.mrb[0].mxu0
        %v1136 = vpop.f32.mrb[0].mxu0
        %v1137 = vadd.f32 0.0, %v1136
        %v1138 = vpop.f32.mrb[0].mxu0
        %1139 = vmatprep.mubr.bf16.mxu0 0
        %1140 = vmatmul.mubr.bf16.gmra.mrb[0].mxu0 %v1019
        %v1141 = vpop.f32.mrb[0].mxu0
        %v1142 = vadd.f32 0.0, %v1141
        %v1143 = vpop.f32.mrb[0].mxu0
        %v1144 = vpop.f32.mrb[0].mxu0
        %v1145 = vadd.f32 0.0, %v1144
        %v1146 = vpop.f32.mrb[0].mxu0
        %1147 = vmatprep.mubr.bf16.mxu0 0
        %1148 = vmatmul.mubr.bf16.gmra.mrb[0].mxu0 %v1022
        %v1149 = vpop.f32.mrb[0].mxu0
        %v1150 = vadd.f32 0.0, %v1149
        %v1151 = vpop.f32.mrb[0].mxu0
        %v1152 = vpop.f32.mrb[0].mxu0
        %v1153 = vadd.f32 0.0, %v1152
        %v1154 = vpop.f32.mrb[0].mxu0
        %1155 = vmatprep.mubr.bf16.mxu0 0
        %1156 = vmatmul.mubr.bf16.gmra.mrb[0].mxu0 %v1025
        %v1157 = vpop.f32.mrb[0].mxu0
        %v1158 = vadd.f32 0.0, %v1157
        %v1159 = vpop.f32.mrb[0].mxu0
        %v1160 = vpop.f32.mrb[0].mxu0
        %v1161 = vpop.f32.mrb[0].mxu0
        %1162 = vdwg.mxu0
        %s1163 = scalar_lea.vmem %s558, 200 [#allocation2]
        %v1164 = vld [vmem:[%s1163] sm:$0xf]
        %v1165 = vld [vmem:[%s1163 + $0x4] sm:$0xf]
        %v1166 = vld [vmem:[%s1163 + $0x8] sm:$0xf]
        %v1167 = vld [vmem:[%s1163 + $0xc] sm:$0xf]
        %v1168 = vld [vmem:[%s1163 + $0x10] sm:$0xf]
        %v1169 = vld [vmem:[%s1163 + $0x14] sm:$0xf]
        %v1170 = vld [vmem:[%s1163 + $0x18] sm:$0xf]
        %v1171 = vld [vmem:[%s1163 + $0x1c] sm:$0xf]
        %v1172 = vld [vmem:[%s1163 + $0x20] sm:$0xf]
        %v1173 = vld [vmem:[%s1163 + $0x24] sm:$0xf]
        %v1174 = vld [vmem:[%s1163 + $0x28] sm:$0xf]
        %v1175 = vld [vmem:[%s1163 + $0x2c] sm:$0xf]
        %v1176 = vld [vmem:[%s1163 + $0x30] sm:$0xf]
        %v1177 = vld [vmem:[%s1163 + $0x34] sm:$0xf]
        %v1178 = vld [vmem:[%s1163 + $0x38] sm:$0xf]
        %v1179 = vld [vmem:[%s1163 + $0x3c] sm:$0xf]
        %v1180 = vld [vmem:[%s1163 + $0x40] sm:$0xf]
        %v1181 = vld [vmem:[%s1163 + $0x44] sm:$0xf]
        %v1182 = vld [vmem:[%s1163 + $0x48] sm:$0xf]
        %v1183 = vld [vmem:[%s1163 + $0x4c] sm:$0xf]
        %v1184 = vld [vmem:[%s1163 + $0x50] sm:$0xf]
        %v1185 = vld [vmem:[%s1163 + $0x54] sm:$0xf]
        %v1186 = vld [vmem:[%s1163 + $0x58] sm:$0xf]
        %v1187 = vld [vmem:[%s1163 + $0x5c] sm:$0xf]
        %v1188 = vld [vmem:[%s1163 + $0x60] sm:$0xf]
        %v1214 = vunpack.c.l.b16 %v1164
        %v1215 = vunpack.c.l.b16 %v1165
        %v1216 = vunpack.c.l.b16 %v1166
        %v1217 = vunpack.c.l.b16 %v1167
        %v1218 = vunpack.c.l.b16 %v1168
        %v1219 = vunpack.c.l.b16 %v1169
        %v1220 = vunpack.c.l.b16 %v1170
        %v1221 = vunpack.c.l.b16 %v1171
        %v1222 = vunpack.c.l.b16 %v1172
        %v1223 = vunpack.c.l.b16 %v1173
        %v1224 = vunpack.c.l.b16 %v1174
        %v1225 = vunpack.c.l.b16 %v1175
        %v1226 = vunpack.c.l.b16 %v1176
        %v1227 = vunpack.c.l.b16 %v1177
        %v1228 = vunpack.c.l.b16 %v1178
        %v1229 = vunpack.c.l.b16 %v1179
        %v1230 = vunpack.c.l.b16 %v1180
        %v1231 = vunpack.c.l.b16 %v1181
        %v1232 = vunpack.c.l.b16 %v1182
        %v1233 = vunpack.c.l.b16 %v1183
        %v1234 = vunpack.c.l.b16 %v1184
        %v1235 = vunpack.c.l.b16 %v1185
        %v1236 = vunpack.c.l.b16 %v1186
        %v1237 = vunpack.c.l.b16 %v1187
        %v1238 = vunpack.c.l.b16 %v1188
        %v1239 = vpack.c.b16 %v1215, %v1214
        %v1240 = vpack.c.b16 %v1217, %v1216
        %v1241 = vpack.c.b16 %v1219, %v1218
        %v1242 = vpack.c.b16 %v1221, %v1220
        %v1243 = vpack.c.b16 %v1223, %v1222
        %v1244 = vpack.c.b16 %v1225, %v1224
        %v1245 = vpack.c.b16 %v1227, %v1226
        %v1246 = vpack.c.b16 %v1229, %v1228
        %v1247 = vpack.c.b16 %v1231, %v1230
        %v1248 = vpack.c.b16 %v1233, %v1232
        %v1249 = vpack.c.b16 %v1235, %v1234
        %v1250 = vpack.c.b16 %v1237, %v1236
        %v1251 = vpack.c.b16 %v1238, %v1238
        %v1253 = vsel %vm716, %v1239, 0
        %v1256 = vsel %vm716, %v1240, 0
        %v1259 = vsel %vm716, %v1241, 0
        %v1262 = vsel %vm716, %v1242, 0
        %v1265 = vsel %vm716, %v1243, 0
        %v1268 = vsel %vm716, %v1244, 0
        %v1271 = vsel %vm716, %v1245, 0
        %v1274 = vsel %vm716, %v1246, 0
        %v1277 = vsel %vm716, %v1247, 0
        %v1280 = vsel %vm716, %v1248, 0
        %v1283 = vsel %vm716, %v1249, 0
        %v1286 = vsel %vm716, %v1250, 0
        %v1289 = vsel %vm716, %v1251, 0
        %1291 = vmatprep.subr.bf16.mxu0 0
        %1292 = vmatpush1.bf16.msra.mxu0 %v707
        %1293 = vmatprep.subr.bf16.mxu0 0
        %1294 = vmatpush1.bf16.msra.mxu0 %v708
        %1295 = vmatprep.subr.bf16.mxu0 0
        %1296 = vmatpush1.bf16.msra.mxu0 %v709
        %1297 = vmatprep.subr.bf16.mxu0 0
        %1298 = vmatpush1.bf16.msra.mxu0 %v710
        %1299 = vmatprep.subr.bf16.mxu0 0
        %1300 = vmatpush1.bf16.msra.mxu0 %v761
        %1301 = vmatprep.subr.bf16.mxu0 0
        %1302 = vmatpush1.bf16.msra.mxu0 0
        %1303 = vmatprep.subr.bf16.mxu0 0
        %1304 = vmatpush1.bf16.msra.mxu0 0
        %1305 = vmatprep.subr.bf16.mxu0 0
        %1306 = vmatpush1.bf16.msra.mxu0 0
        %1307 = vmatprep.subr.bf16.mxu0 0
        %1308 = vmatpush1.bf16.msra.mxu0 0
        %1309 = vmatprep.subr.bf16.mxu0 0
        %1310 = vmatpush1.bf16.msra.mxu0 0
        %1311 = vmatprep.subr.bf16.mxu0 0
        %1312 = vmatpush1.bf16.msra.mxu0 0
        %1313 = vmatprep.subr.bf16.mxu0 0
        %1314 = vmatpush1.bf16.msra.mxu0 0
        %1315 = vmatprep.subr.bf16.mxu0 0
        %1316 = vmatpush1.bf16.msra.mxu0 0
        %1317 = vmatprep.subr.bf16.mxu0 0
        %1318 = vmatpush1.bf16.msra.mxu0 0
        %1319 = vmatprep.subr.bf16.mxu0 0
        %1320 = vmatpush1.bf16.msra.mxu0 0
        %1321 = vmatprep.subr.bf16.mxu0 0
        %1322 = vmatpush1.bf16.msra.mxu0 0
        %1323 = vmatprep.mubr.bf16.mxu0 0
        %1324 = vmatmul.mubr.bf16.gmra.mrb[0].mxu0 %v1253
        %v1325 = vpop.f32.mrb[0].mxu0
        %v1326 = vadd.f32 0.0, %v1325
        %v1327 = vpop.f32.mrb[0].mxu0
        %v1328 = vpop.f32.mrb[0].mxu0
        %v1329 = vadd.f32 0.0, %v1328
        %v1330 = vpop.f32.mrb[0].mxu0
        %1331 = vmatprep.mubr.bf16.mxu0 0
        %1332 = vmatmul.mubr.bf16.gmra.mrb[0].mxu0 %v1256
        %v1333 = vpop.f32.mrb[0].mxu0
        %v1334 = vadd.f32 0.0, %v1333
        %v1335 = vpop.f32.mrb[0].mxu0
        %v1336 = vpop.f32.mrb[0].mxu0
        %v1337 = vadd.f32 0.0, %v1336
        %v1338 = vpop.f32.mrb[0].mxu0
        %1339 = vmatprep.mubr.bf16.mxu0 0
        %1340 = vmatmul.mubr.bf16.gmra.mrb[0].mxu0 %v1259
        %v1341 = vpop.f32.mrb[0].mxu0
        %v1342 = vadd.f32 0.0, %v1341
        %v1343 = vpop.f32.mrb[0].mxu0
        %v1344 = vpop.f32.mrb[0].mxu0
        %v1345 = vadd.f32 0.0, %v1344
        %v1346 = vpop.f32.mrb[0].mxu0
        %1347 = vmatprep.mubr.bf16.mxu0 0
        %1348 = vmatmul.mubr.bf16.gmra.mrb[0].mxu0 %v1262
        %v1349 = vpop.f32.mrb[0].mxu0
        %v1350 = vadd.f32 0.0, %v1349
        %v1351 = vpop.f32.mrb[0].mxu0
        %v1352 = vpop.f32.mrb[0].mxu0
        %v1353 = vadd.f32 0.0, %v1352
        %v1354 = vpop.f32.mrb[0].mxu0
        %1355 = vmatprep.mubr.bf16.mxu0 0
        %1356 = vmatmul.mubr.bf16.gmra.mrb[0].mxu0 %v1265
        %v1357 = vpop.f32.mrb[0].mxu0
        %v1358 = vadd.f32 0.0, %v1357
        %v1359 = vpop.f32.mrb[0].mxu0
        %v1360 = vpop.f32.mrb[0].mxu0
        %v1361 = vadd.f32 0.0, %v1360
        %v1362 = vpop.f32.mrb[0].mxu0
        %1363 = vmatprep.mubr.bf16.mxu0 0
        %1364 = vmatmul.mubr.bf16.gmra.mrb[0].mxu0 %v1268
        %v1365 = vpop.f32.mrb[0].mxu0
        %v1366 = vadd.f32 0.0, %v1365
        %v1367 = vpop.f32.mrb[0].mxu0
        %v1368 = vpop.f32.mrb[0].mxu0
        %v1369 = vadd.f32 0.0, %v1368
        %v1370 = vpop.f32.mrb[0].mxu0
        %1371 = vmatprep.mubr.bf16.mxu0 0
        %1372 = vmatmul.mubr.bf16.gmra.mrb[0].mxu0 %v1271
        %v1373 = vpop.f32.mrb[0].mxu0
        %v1374 = vadd.f32 0.0, %v1373
        %v1375 = vpop.f32.mrb[0].mxu0
        %v1376 = vpop.f32.mrb[0].mxu0
        %v1377 = vadd.f32 0.0, %v1376
        %v1378 = vpop.f32.mrb[0].mxu0
        %1379 = vmatprep.mubr.bf16.mxu0 0
        %1380 = vmatmul.mubr.bf16.gmra.mrb[0].mxu0 %v1274
        %v1381 = vpop.f32.mrb[0].mxu0
        %v1382 = vadd.f32 0.0, %v1381
        %v1383 = vpop.f32.mrb[0].mxu0
        %v1384 = vpop.f32.mrb[0].mxu0
        %v1385 = vadd.f32 0.0, %v1384
        %v1386 = vpop.f32.mrb[0].mxu0
        %1387 = vmatprep.mubr.bf16.mxu0 0
        %1388 = vmatmul.mubr.bf16.gmra.mrb[0].mxu0 %v1277
        %v1389 = vpop.f32.mrb[0].mxu0
        %v1390 = vadd.f32 0.0, %v1389
        %v1391 = vpop.f32.mrb[0].mxu0
        %v1392 = vpop.f32.mrb[0].mxu0
        %v1393 = vadd.f32 0.0, %v1392
        %v1394 = vpop.f32.mrb[0].mxu0
        %1395 = vmatprep.mubr.bf16.mxu0 0
        %1396 = vmatmul.mubr.bf16.gmra.mrb[0].mxu0 %v1280
        %v1397 = vpop.f32.mrb[0].mxu0
        %v1398 = vadd.f32 0.0, %v1397
        %v1399 = vpop.f32.mrb[0].mxu0
        %v1400 = vpop.f32.mrb[0].mxu0
        %v1401 = vadd.f32 0.0, %v1400
        %v1402 = vpop.f32.mrb[0].mxu0
        %1403 = vmatprep.mubr.bf16.mxu0 0
        %1404 = vmatmul.mubr.bf16.gmra.mrb[0].mxu0 %v1283
        %v1405 = vpop.f32.mrb[0].mxu0
        %v1406 = vadd.f32 0.0, %v1405
        %v1407 = vpop.f32.mrb[0].mxu0
        %v1408 = vpop.f32.mrb[0].mxu0
        %v1409 = vadd.f32 0.0, %v1408
        %v1410 = vpop.f32.mrb[0].mxu0
        %1411 = vmatprep.mubr.bf16.mxu0 0
        %1412 = vmatmul.mubr.bf16.gmra.mrb[0].mxu0 %v1286
        %v1413 = vpop.f32.mrb[0].mxu0
        %v1414 = vadd.f32 0.0, %v1413
        %v1415 = vpop.f32.mrb[0].mxu0
        %v1416 = vpop.f32.mrb[0].mxu0
        %v1417 = vadd.f32 0.0, %v1416
        %v1418 = vpop.f32.mrb[0].mxu0
        %1419 = vmatprep.mubr.bf16.mxu0 0
        %1420 = vmatmul.mubr.bf16.gmra.mrb[0].mxu0 %v1289
        %v1421 = vpop.f32.mrb[0].mxu0
        %v1422 = vadd.f32 0.0, %v1421
        %v1423 = vpop.f32.mrb[0].mxu0
        %v1424 = vpop.f32.mrb[0].mxu0
        %v1425 = vpop.f32.mrb[0].mxu0
        %1426 = vdwg.mxu0
        %s1427 = scalar_lea.vmem %s558, 300 [#allocation2]
        %v1428 = vld [vmem:[%s1427] sm:$0xf]
        %v1429 = vld [vmem:[%s1427 + $0x4] sm:$0xf]
        %v1430 = vld [vmem:[%s1427 + $0x8] sm:$0xf]
        %v1431 = vld [vmem:[%s1427 + $0xc] sm:$0xf]
        %v1432 = vld [vmem:[%s1427 + $0x10] sm:$0xf]
        %v1433 = vld [vmem:[%s1427 + $0x14] sm:$0xf]
        %v1434 = vld [vmem:[%s1427 + $0x18] sm:$0xf]
        %v1435 = vld [vmem:[%s1427 + $0x1c] sm:$0xf]
        %v1436 = vld [vmem:[%s1427 + $0x20] sm:$0xf]
        %v1437 = vld [vmem:[%s1427 + $0x24] sm:$0xf]
        %v1438 = vld [vmem:[%s1427 + $0x28] sm:$0xf]
        %v1439 = vld [vmem:[%s1427 + $0x2c] sm:$0xf]
        %v1440 = vld [vmem:[%s1427 + $0x30] sm:$0xf]
        %v1441 = vld [vmem:[%s1427 + $0x34] sm:$0xf]
        %v1442 = vld [vmem:[%s1427 + $0x38] sm:$0xf]
        %v1443 = vld [vmem:[%s1427 + $0x3c] sm:$0xf]
        %v1444 = vld [vmem:[%s1427 + $0x40] sm:$0xf]
        %v1445 = vld [vmem:[%s1427 + $0x44] sm:$0xf]
        %v1446 = vld [vmem:[%s1427 + $0x48] sm:$0xf]
        %v1447 = vld [vmem:[%s1427 + $0x4c] sm:$0xf]
        %v1448 = vld [vmem:[%s1427 + $0x50] sm:$0xf]
        %v1449 = vld [vmem:[%s1427 + $0x54] sm:$0xf]
        %v1450 = vld [vmem:[%s1427 + $0x58] sm:$0xf]
        %v1451 = vld [vmem:[%s1427 + $0x5c] sm:$0xf]
        %v1452 = vld [vmem:[%s1427 + $0x60] sm:$0xf]
        %v1478 = vunpack.c.l.b16 %v1428
        %v1479 = vunpack.c.l.b16 %v1429
        %v1480 = vunpack.c.l.b16 %v1430
        %v1481 = vunpack.c.l.b16 %v1431
        %v1482 = vunpack.c.l.b16 %v1432
        %v1483 = vunpack.c.l.b16 %v1433
        %v1484 = vunpack.c.l.b16 %v1434
        %v1485 = vunpack.c.l.b16 %v1435
        %v1486 = vunpack.c.l.b16 %v1436
        %v1487 = vunpack.c.l.b16 %v1437
        %v1488 = vunpack.c.l.b16 %v1438
        %v1489 = vunpack.c.l.b16 %v1439
        %v1490 = vunpack.c.l.b16 %v1440
        %v1491 = vunpack.c.l.b16 %v1441
        %v1492 = vunpack.c.l.b16 %v1442
        %v1493 = vunpack.c.l.b16 %v1443
        %v1494 = vunpack.c.l.b16 %v1444
        %v1495 = vunpack.c.l.b16 %v1445
        %v1496 = vunpack.c.l.b16 %v1446
        %v1497 = vunpack.c.l.b16 %v1447
        %v1498 = vunpack.c.l.b16 %v1448
        %v1499 = vunpack.c.l.b16 %v1449
        %v1500 = vunpack.c.l.b16 %v1450
        %v1501 = vunpack.c.l.b16 %v1451
        %v1502 = vunpack.c.l.b16 %v1452
        %v1503 = vpack.c.b16 %v1479, %v1478
        %v1504 = vpack.c.b16 %v1481, %v1480
        %v1505 = vpack.c.b16 %v1483, %v1482
        %v1506 = vpack.c.b16 %v1485, %v1484
        %v1507 = vpack.c.b16 %v1487, %v1486
        %v1508 = vpack.c.b16 %v1489, %v1488
        %v1509 = vpack.c.b16 %v1491, %v1490
        %v1510 = vpack.c.b16 %v1493, %v1492
        %v1511 = vpack.c.b16 %v1495, %v1494
        %v1512 = vpack.c.b16 %v1497, %v1496
        %v1513 = vpack.c.b16 %v1499, %v1498
        %v1514 = vpack.c.b16 %v1501, %v1500
        %v1515 = vpack.c.b16 %v1502, %v1502
        %v1517 = vsel %vm716, %v1503, 0
        %v1520 = vsel %vm716, %v1504, 0
        %v1523 = vsel %vm716, %v1505, 0
        %v1526 = vsel %vm716, %v1506, 0
        %v1529 = vsel %vm716, %v1507, 0
        %v1532 = vsel %vm716, %v1508, 0
        %v1535 = vsel %vm716, %v1509, 0
        %v1538 = vsel %vm716, %v1510, 0
        %v1541 = vsel %vm716, %v1511, 0
        %v1544 = vsel %vm716, %v1512, 0
        %v1547 = vsel %vm716, %v1513, 0
        %v1550 = vsel %vm716, %v1514, 0
        %v1553 = vsel %vm716, %v1515, 0
        %1555 = vmatprep.subr.bf16.mxu0 0
        %1556 = vmatpush1.bf16.msra.mxu0 %v707
        %1557 = vmatprep.subr.bf16.mxu0 0
        %1558 = vmatpush1.bf16.msra.mxu0 %v708
        %1559 = vmatprep.subr.bf16.mxu0 0
        %1560 = vmatpush1.bf16.msra.mxu0 %v709
        %1561 = vmatprep.subr.bf16.mxu0 0
        %1562 = vmatpush1.bf16.msra.mxu0 %v710
        %1563 = vmatprep.subr.bf16.mxu0 0
        %1564 = vmatpush1.bf16.msra.mxu0 %v761
        %1565 = vmatprep.subr.bf16.mxu0 0
        %1566 = vmatpush1.bf16.msra.mxu0 0
        %1567 = vmatprep.subr.bf16.mxu0 0
        %1568 = vmatpush1.bf16.msra.mxu0 0
        %1569 = vmatprep.subr.bf16.mxu0 0
        %1570 = vmatpush1.bf16.msra.mxu0 0
        %1571 = vmatprep.subr.bf16.mxu0 0
        %1572 = vmatpush1.bf16.msra.mxu0 0
        %1573 = vmatprep.subr.bf16.mxu0 0
        %1574 = vmatpush1.bf16.msra.mxu0 0
        %1575 = vmatprep.subr.bf16.mxu0 0
        %1576 = vmatpush1.bf16.msra.mxu0 0
        %1577 = vmatprep.subr.bf16.mxu0 0
        %1578 = vmatpush1.bf16.msra.mxu0 0
        %1579 = vmatprep.subr.bf16.mxu0 0
        %1580 = vmatpush1.bf16.msra.mxu0 0
        %1581 = vmatprep.subr.bf16.mxu0 0
        %1582 = vmatpush1.bf16.msra.mxu0 0
        %1583 = vmatprep.subr.bf16.mxu0 0
        %1584 = vmatpush1.bf16.msra.mxu0 0
        %1585 = vmatprep.subr.bf16.mxu0 0
        %1586 = vmatpush1.bf16.msra.mxu0 0
        %1587 = vmatprep.mubr.bf16.mxu0 0
        %1588 = vmatmul.mubr.bf16.gmra.mrb[0].mxu0 %v1517
        %v1589 = vpop.f32.mrb[0].mxu0
        %v1590 = vadd.f32 0.0, %v1589
        %v1591 = vpop.f32.mrb[0].mxu0
        %v1592 = vpop.f32.mrb[0].mxu0
        %v1593 = vadd.f32 0.0, %v1592
        %v1594 = vpop.f32.mrb[0].mxu0
        %1595 = vmatprep.mubr.bf16.mxu0 0
        %1596 = vmatmul.mubr.bf16.gmra.mrb[0].mxu0 %v1520
        %v1597 = vpop.f32.mrb[0].mxu0
        %v1598 = vadd.f32 0.0, %v1597
        %v1599 = vpop.f32.mrb[0].mxu0
        %v1600 = vpop.f32.mrb[0].mxu0
        %v1601 = vadd.f32 0.0, %v1600
        %v1602 = vpop.f32.mrb[0].mxu0
        %1603 = vmatprep.mubr.bf16.mxu0 0
        %1604 = vmatmul.mubr.bf16.gmra.mrb[0].mxu0 %v1523
        %v1605 = vpop.f32.mrb[0].mxu0
        %v1606 = vadd.f32 0.0, %v1605
        %v1607 = vpop.f32.mrb[0].mxu0
        %v1608 = vpop.f32.mrb[0].mxu0
        %v1609 = vadd.f32 0.0, %v1608
        %v1610 = vpop.f32.mrb[0].mxu0
        %1611 = vmatprep.mubr.bf16.mxu0 0
        %1612 = vmatmul.mubr.bf16.gmra.mrb[0].mxu0 %v1526
        %v1613 = vpop.f32.mrb[0].mxu0
        %v1614 = vadd.f32 0.0, %v1613
        %v1615 = vpop.f32.mrb[0].mxu0
        %v1616 = vpop.f32.mrb[0].mxu0
        %v1617 = vadd.f32 0.0, %v1616
        %v1618 = vpop.f32.mrb[0].mxu0
        %1619 = vmatprep.mubr.bf16.mxu0 0
        %1620 = vmatmul.mubr.bf16.gmra.mrb[0].mxu0 %v1529
        %v1621 = vpop.f32.mrb[0].mxu0
        %v1622 = vadd.f32 0.0, %v1621
        %v1623 = vpop.f32.mrb[0].mxu0
        %v1624 = vpop.f32.mrb[0].mxu0
        %v1625 = vadd.f32 0.0, %v1624
        %v1626 = vpop.f32.mrb[0].mxu0
        %1627 = vmatprep.mubr.bf16.mxu0 0
        %1628 = vmatmul.mubr.bf16.gmra.mrb[0].mxu0 %v1532
        %v1629 = vpop.f32.mrb[0].mxu0
        %v1630 = vadd.f32 0.0, %v1629
        %v1631 = vpop.f32.mrb[0].mxu0
        %v1632 = vpop.f32.mrb[0].mxu0
        %v1633 = vadd.f32 0.0, %v1632
        %v1634 = vpop.f32.mrb[0].mxu0
        %1635 = vmatprep.mubr.bf16.mxu0 0
        %1636 = vmatmul.mubr.bf16.gmra.mrb[0].mxu0 %v1535
        %v1637 = vpop.f32.mrb[0].mxu0
        %v1638 = vadd.f32 0.0, %v1637
        %v1639 = vpop.f32.mrb[0].mxu0
        %v1640 = vpop.f32.mrb[0].mxu0
        %v1641 = vadd.f32 0.0, %v1640
        %v1642 = vpop.f32.mrb[0].mxu0
        %1643 = vmatprep.mubr.bf16.mxu0 0
        %1644 = vmatmul.mubr.bf16.gmra.mrb[0].mxu0 %v1538
        %v1645 = vpop.f32.mrb[0].mxu0
        %v1646 = vadd.f32 0.0, %v1645
        %v1647 = vpop.f32.mrb[0].mxu0
        %v1648 = vpop.f32.mrb[0].mxu0
        %v1649 = vadd.f32 0.0, %v1648
        %v1650 = vpop.f32.mrb[0].mxu0
        %1651 = vmatprep.mubr.bf16.mxu0 0
        %1652 = vmatmul.mubr.bf16.gmra.mrb[0].mxu0 %v1541
        %v1653 = vpop.f32.mrb[0].mxu0
        %v1654 = vadd.f32 0.0, %v1653
        %v1655 = vpop.f32.mrb[0].mxu0
        %v1656 = vpop.f32.mrb[0].mxu0
        %v1657 = vadd.f32 0.0, %v1656
        %v1658 = vpop.f32.mrb[0].mxu0
        %1659 = vmatprep.mubr.bf16.mxu0 0
        %1660 = vmatmul.mubr.bf16.gmra.mrb[0].mxu0 %v1544
        %v1661 = vpop.f32.mrb[0].mxu0
        %v1662 = vadd.f32 0.0, %v1661
        %v1663 = vpop.f32.mrb[0].mxu0
        %v1664 = vpop.f32.mrb[0].mxu0
        %v1665 = vadd.f32 0.0, %v1664
        %v1666 = vpop.f32.mrb[0].mxu0
        %1667 = vmatprep.mubr.bf16.mxu0 0
        %1668 = vmatmul.mubr.bf16.gmra.mrb[0].mxu0 %v1547
        %v1669 = vpop.f32.mrb[0].mxu0
        %v1670 = vadd.f32 0.0, %v1669
        %v1671 = vpop.f32.mrb[0].mxu0
        %v1672 = vpop.f32.mrb[0].mxu0
        %v1673 = vadd.f32 0.0, %v1672
        %v1674 = vpop.f32.mrb[0].mxu0
        %1675 = vmatprep.mubr.bf16.mxu0 0
        %1676 = vmatmul.mubr.bf16.gmra.mrb[0].mxu0 %v1550
        %v1677 = vpop.f32.mrb[0].mxu0
        %v1678 = vadd.f32 0.0, %v1677
        %v1679 = vpop.f32.mrb[0].mxu0
        %v1680 = vpop.f32.mrb[0].mxu0
        %v1681 = vadd.f32 0.0, %v1680
        %v1682 = vpop.f32.mrb[0].mxu0
        %1683 = vmatprep.mubr.bf16.mxu0 0
        %1684 = vmatmul.mubr.bf16.gmra.mrb[0].mxu0 %v1553
        %v1685 = vpop.f32.mrb[0].mxu0
        %v1686 = vadd.f32 0.0, %v1685
        %v1687 = vpop.f32.mrb[0].mxu0
        %v1688 = vpop.f32.mrb[0].mxu0
        %v1689 = vpop.f32.mrb[0].mxu0
        %1690 = vdwg.mxu0
        %v1691 = vmax.f32 %v798, %v1062
        %v1692 = vmax.f32 %v801, %v1065
        %v1693 = vmax.f32 %v806, %v1070
        %v1694 = vmax.f32 %v809, %v1073
        %v1695 = vmax.f32 %v814, %v1078
        %v1696 = vmax.f32 %v817, %v1081
        %v1697 = vmax.f32 %v822, %v1086
        %v1698 = vmax.f32 %v825, %v1089
        %v1699 = vmax.f32 %v830, %v1094
        %v1700 = vmax.f32 %v833, %v1097
        %v1701 = vmax.f32 %v838, %v1102
        %v1702 = vmax.f32 %v841, %v1105
        %v1703 = vmax.f32 %v846, %v1110
        %v1704 = vmax.f32 %v849, %v1113
        %v1705 = vmax.f32 %v854, %v1118
        %v1706 = vmax.f32 %v857, %v1121
        %v1707 = vmax.f32 %v862, %v1126
        %v1708 = vmax.f32 %v865, %v1129
        %v1709 = vmax.f32 %v870, %v1134
        %v1710 = vmax.f32 %v873, %v1137
        %v1711 = vmax.f32 %v878, %v1142
        %v1712 = vmax.f32 %v881, %v1145
        %v1713 = vmax.f32 %v886, %v1150
        %v1714 = vmax.f32 %v889, %v1153
        %v1715 = vmax.f32 %v894, %v1158
        %v1716 = vmax.f32 %v1326, %v1590
        %v1717 = vmax.f32 %v1329, %v1593
        %v1718 = vmax.f32 %v1334, %v1598
        %v1719 = vmax.f32 %v1337, %v1601
        %v1720 = vmax.f32 %v1342, %v1606
        %v1721 = vmax.f32 %v1345, %v1609
        %v1722 = vmax.f32 %v1350, %v1614
        %v1723 = vmax.f32 %v1353, %v1617
        %v1724 = vmax.f32 %v1358, %v1622
        %v1725 = vmax.f32 %v1361, %v1625
        %v1726 = vmax.f32 %v1366, %v1630
        %v1727 = vmax.f32 %v1369, %v1633
        %v1728 = vmax.f32 %v1374, %v1638
        %v1729 = vmax.f32 %v1377, %v1641
        %v1730 = vmax.f32 %v1382, %v1646
        %v1731 = vmax.f32 %v1385, %v1649
        %v1732 = vmax.f32 %v1390, %v1654
        %v1733 = vmax.f32 %v1393, %v1657
        %v1734 = vmax.f32 %v1398, %v1662
        %v1735 = vmax.f32 %v1401, %v1665
        %v1736 = vmax.f32 %v1406, %v1670
        %v1737 = vmax.f32 %v1409, %v1673
        %v1738 = vmax.f32 %v1414, %v1678
        %v1739 = vmax.f32 %v1417, %v1681
        %v1740 = vmax.f32 %v1422, %v1686
        %v1741 = vmax.f32 %v1691, %v1716
        %v1742 = vmax.f32 %v1692, %v1717
        %v1743 = vmax.f32 %v1693, %v1718
        %v1744 = vmax.f32 %v1694, %v1719
        %v1745 = vmax.f32 %v1695, %v1720
        %v1746 = vmax.f32 %v1696, %v1721
        %v1747 = vmax.f32 %v1697, %v1722
        %v1748 = vmax.f32 %v1698, %v1723
        %v1749 = vmax.f32 %v1699, %v1724
        %v1750 = vmax.f32 %v1700, %v1725
        %v1751 = vmax.f32 %v1701, %v1726
        %v1752 = vmax.f32 %v1702, %v1727
        %v1753 = vmax.f32 %v1703, %v1728
        %v1754 = vmax.f32 %v1704, %v1729
        %v1755 = vmax.f32 %v1705, %v1730
        %v1756 = vmax.f32 %v1706, %v1731
        %v1757 = vmax.f32 %v1707, %v1732
        %v1758 = vmax.f32 %v1708, %v1733
        %v1759 = vmax.f32 %v1709, %v1734
        %v1760 = vmax.f32 %v1710, %v1735
        %v1761 = vmax.f32 %v1711, %v1736
        %v1762 = vmax.f32 %v1712, %v1737
        %v1763 = vmax.f32 %v1713, %v1738
        %v1764 = vmax.f32 %v1714, %v1739
        %v1765 = vmax.f32 %v1715, %v1740
        %v1766 = vld [vmem:[%s2] sm:$0x1]
        %v1768 = vlaneseq
        %v1769 = vshrl.u32 %v1768, 7
        %v1770 = vsub.s32 0, %v1769
        %v1771 = vrot.slane %v1766, %v1770
        %v1773 = vadd.f32 %v1741, %v1771
        %v1774 = vadd.f32 %v1742, %v1771
        %v1775 = vadd.f32 %v1743, %v1771
        %v1776 = vadd.f32 %v1744, %v1771
        %v1777 = vadd.f32 %v1745, %v1771
        %v1778 = vadd.f32 %v1746, %v1771
        %v1779 = vadd.f32 %v1747, %v1771
        %v1780 = vadd.f32 %v1748, %v1771
        %v1781 = vadd.f32 %v1749, %v1771
        %v1782 = vadd.f32 %v1750, %v1771
        %v1783 = vadd.f32 %v1751, %v1771
        %v1784 = vadd.f32 %v1752, %v1771
        %v1785 = vadd.f32 %v1753, %v1771
        %v1786 = vadd.f32 %v1754, %v1771
        %v1787 = vadd.f32 %v1755, %v1771
        %v1788 = vadd.f32 %v1756, %v1771
        %v1789 = vadd.f32 %v1757, %v1771
        %v1790 = vadd.f32 %v1758, %v1771
        %v1791 = vadd.f32 %v1759, %v1771
        %v1792 = vadd.f32 %v1760, %v1771
        %v1793 = vadd.f32 %v1761, %v1771
        %v1794 = vadd.f32 %v1762, %v1771
        %v1795 = vadd.f32 %v1763, %v1771
        %v1796 = vadd.f32 %v1764, %v1771
        %v1797 = vadd.f32 %v1765, %v1771
        %v1798 = vmax.f32 %v1773, 0.0
        %v1799 = vmax.f32 %v1774, 0.0
        %v1800 = vmax.f32 %v1775, 0.0
        %v1801 = vmax.f32 %v1776, 0.0
        %v1802 = vmax.f32 %v1777, 0.0
        %v1803 = vmax.f32 %v1778, 0.0
        %v1804 = vmax.f32 %v1779, 0.0
        %v1805 = vmax.f32 %v1780, 0.0
        %v1806 = vmax.f32 %v1781, 0.0
        %v1807 = vmax.f32 %v1782, 0.0
        %v1808 = vmax.f32 %v1783, 0.0
        %v1809 = vmax.f32 %v1784, 0.0
        %v1810 = vmax.f32 %v1785, 0.0
        %v1811 = vmax.f32 %v1786, 0.0
        %v1812 = vmax.f32 %v1787, 0.0
        %v1813 = vmax.f32 %v1788, 0.0
        %v1814 = vmax.f32 %v1789, 0.0
        %v1815 = vmax.f32 %v1790, 0.0
        %v1816 = vmax.f32 %v1791, 0.0
        %v1817 = vmax.f32 %v1792, 0.0
        %v1818 = vmax.f32 %v1793, 0.0
        %v1819 = vmax.f32 %v1794, 0.0
        %v1820 = vmax.f32 %v1795, 0.0
        %v1821 = vmax.f32 %v1796, 0.0
        %v1822 = vmax.f32 %v1797, 0.0
        %v1823 = vpack.c.bf16 %v1799, %v1798
        %v1824 = vpack.c.bf16 %v1801, %v1800
        %v1825 = vpack.c.bf16 %v1803, %v1802
        %v1826 = vpack.c.bf16 %v1805, %v1804
        %v1827 = vpack.c.bf16 %v1807, %v1806
        %v1828 = vpack.c.bf16 %v1809, %v1808
        %v1829 = vpack.c.bf16 %v1811, %v1810
        %v1830 = vpack.c.bf16 %v1813, %v1812
        %v1831 = vpack.c.bf16 %v1815, %v1814
        %v1832 = vpack.c.bf16 %v1817, %v1816
        %v1833 = vpack.c.bf16 %v1819, %v1818
        %v1834 = vpack.c.bf16 %v1821, %v1820
        %v1835 = vpack.c.bf16 %v1822, %v1822
        %v1849 = vunpack.c.l.b16 %v1823
        %v1850 = vunpack.c.h.b16 %v1823
        %v1851 = vunpack.c.l.b16 %v1824
        %v1852 = vunpack.c.h.b16 %v1824
        %v1853 = vunpack.c.l.b16 %v1825
        %v1854 = vunpack.c.h.b16 %v1825
        %v1855 = vunpack.c.l.b16 %v1826
        %v1856 = vunpack.c.h.b16 %v1826
        %v1857 = vunpack.c.l.b16 %v1827
        %v1858 = vunpack.c.h.b16 %v1827
        %v1859 = vunpack.c.l.b16 %v1828
        %v1860 = vunpack.c.h.b16 %v1828
        %v1861 = vunpack.c.l.b16 %v1829
        %v1862 = vunpack.c.h.b16 %v1829
        %v1863 = vunpack.c.l.b16 %v1830
        %v1864 = vunpack.c.h.b16 %v1830
        %v1865 = vunpack.c.l.b16 %v1831
        %v1866 = vunpack.c.h.b16 %v1831
        %v1867 = vunpack.c.l.b16 %v1832
        %v1868 = vunpack.c.h.b16 %v1832
        %v1869 = vunpack.c.l.b16 %v1833
        %v1870 = vunpack.c.h.b16 %v1833
        %v1871 = vunpack.c.l.b16 %v1834
        %v1872 = vunpack.c.h.b16 %v1834
        %v1873 = vunpack.c.l.b16 %v1835
        %v1874 = vpack.c.b16 %v1849, %v1849
        %v1875 = vpack.c.b16 %v1850, %v1850
        %v1876 = vpack.c.b16 %v1851, %v1851
        %v1877 = vpack.c.b16 %v1852, %v1852
        %v1878 = vpack.c.b16 %v1853, %v1853
        %v1879 = vpack.c.b16 %v1854, %v1854
        %v1880 = vpack.c.b16 %v1855, %v1855
        %v1881 = vpack.c.b16 %v1856, %v1856
        %v1882 = vpack.c.b16 %v1857, %v1857
        %v1883 = vpack.c.b16 %v1858, %v1858
        %v1884 = vpack.c.b16 %v1859, %v1859
        %v1885 = vpack.c.b16 %v1860, %v1860
        %v1886 = vpack.c.b16 %v1861, %v1861
        %v1887 = vpack.c.b16 %v1862, %v1862
        %v1888 = vpack.c.b16 %v1863, %v1863
        %v1889 = vpack.c.b16 %v1864, %v1864
        %v1890 = vpack.c.b16 %v1865, %v1865
        %v1891 = vpack.c.b16 %v1866, %v1866
        %v1892 = vpack.c.b16 %v1867, %v1867
        %v1893 = vpack.c.b16 %v1868, %v1868
        %v1894 = vpack.c.b16 %v1869, %v1869
        %v1895 = vpack.c.b16 %v1870, %v1870
        %v1896 = vpack.c.b16 %v1871, %v1871
        %v1897 = vpack.c.b16 %v1872, %v1872
        %v1898 = vpack.c.b16 %v1873, %v1873
        %vm1924 = vcmask 60416
        %1925 = vst.msk [vmem:[%s577] sm:$0xf] %vm1924, %v1874
        %1926 = vst.msk [vmem:[%s577 + $0x4] sm:$0xf] %vm1924, %v1875
        %1927 = vst.msk [vmem:[%s577 + $0x8] sm:$0xf] %vm1924, %v1876
        %1928 = vst.msk [vmem:[%s577 + $0xc] sm:$0xf] %vm1924, %v1877
        %1929 = vst.msk [vmem:[%s577 + $0x10] sm:$0xf] %vm1924, %v1878
        %1930 = vst.msk [vmem:[%s577 + $0x14] sm:$0xf] %vm1924, %v1879
        %1931 = vst.msk [vmem:[%s577 + $0x18] sm:$0xf] %vm1924, %v1880
        %1932 = vst.msk [vmem:[%s577 + $0x1c] sm:$0xf] %vm1924, %v1881
        %1933 = vst.msk [vmem:[%s577 + $0x20] sm:$0xf] %vm1924, %v1882
        %1934 = vst.msk [vmem:[%s577 + $0x24] sm:$0xf] %vm1924, %v1883
        %1935 = vst.msk [vmem:[%s577 + $0x28] sm:$0xf] %vm1924, %v1884
        %1936 = vst.msk [vmem:[%s577 + $0x2c] sm:$0xf] %vm1924, %v1885
        %1937 = vst.msk [vmem:[%s577 + $0x30] sm:$0xf] %vm1924, %v1886
        %1938 = vst.msk [vmem:[%s577 + $0x34] sm:$0xf] %vm1924, %v1887
        %1939 = vst.msk [vmem:[%s577 + $0x38] sm:$0xf] %vm1924, %v1888
        %1940 = vst.msk [vmem:[%s577 + $0x3c] sm:$0xf] %vm1924, %v1889
        %1941 = vst.msk [vmem:[%s577 + $0x40] sm:$0xf] %vm1924, %v1890
        %1942 = vst.msk [vmem:[%s577 + $0x44] sm:$0xf] %vm1924, %v1891
        %1943 = vst.msk [vmem:[%s577 + $0x48] sm:$0xf] %vm1924, %v1892
        %1944 = vst.msk [vmem:[%s577 + $0x4c] sm:$0xf] %vm1924, %v1893
        %1945 = vst.msk [vmem:[%s577 + $0x50] sm:$0xf] %vm1924, %v1894
        %1946 = vst.msk [vmem:[%s577 + $0x54] sm:$0xf] %vm1924, %v1895
        %1947 = vst.msk [vmem:[%s577 + $0x58] sm:$0xf] %vm1924, %v1896
        %1948 = vst.msk [vmem:[%s577 + $0x5c] sm:$0xf] %vm1924, %v1897
        %1949 = vst.msk [vmem:[%s577 + $0x60] sm:$0xf] %vm1924, %v1898
        %s1950 = sand.u32 %s90, 1
        %s1951 = sand.u32 %s90, 1
        %s1952 = smul.addr %s1951, 100
        %s1953 = scalar_lea.vmem [#allocation3], %s1952
        // Predicated region
        $region95: #{lenet_logits.3} parent=89 // pred_check
          %p1954 = pneg %p100
        $region96: #{lenet_logits.3} parent=89 // pred_check_branch
          %1956 = sbr.rel (%p1954) target = $region98
        $region97: #{lenet_logits.3} parent=89 // pred_region
          %s1957 = smul.u32 25, %s14
          %s1958 = ssub.s32 49, %s1957
          %p1959 = scmp.lt.s32.totalorder %s1958, 25
          %s1960 = scalar_select %p1959, %s1958, 25
          %s1961 = smul.u32 64, %s1960
          %p1962 = scmp.ne.s32.totalorder 0, %s1961
          %s1963 = smul.addr %s1957, 4
          %s1964 = scalar_lea.vmem %s3, %s1963
          // Predicated region
          $region99: #{lenet_logits.3} parent=97 // pred_check
            %p1965 = pneg %p1962
          $region100: #{lenet_logits.3} parent=97 // pred_check_branch
            %1967 = sbr.rel (%p1965) target = $region102
          $region101: #{lenet_logits.3} parent=97 // pred_region
            // Predicated region
            $region103: #{lenet_logits.3} parent=101 // pred_check
              _
            $region104: #{lenet_logits.3} parent=101 // pred_check_branch
              %1969 = sbr.rel target = $region106
            $region105: #{lenet_logits.3} parent=101 // pred_region
              // Predicated region
              $region125: #{lenet_logits.3} parent=105 // pred_check
                _
              $region126: #{lenet_logits.3} parent=105 // pred_check_branch
                %2067 = sbr.rel (0) target = $region128
              $region127: #{lenet_logits.3} parent=105 // pred_region
                %s2069 = sdiv.u32.pop %s1960, 25
                %s2070 = srem.u32.pop %s1960, 25
                // While loop
                $region129: #{lenet_logits.3} parent=127 // loop_pre_header
                  _
                $region130: #{lenet_logits.3} parent=127 // loop_header
                  %s2072 = sphi 0, %s2074
                  %p2073 = scmp.ge.s32.totalorder %s2072, %s2069
                  %s2077 = sphi 0, %s2132
                  %s2078 = sphi %s1953, %s2135
                  %s2079 = sphi %s1964, %s2136
                $region131: #{lenet_logits.3} parent=127 // loop_header_branch
                  %2076 = sbr.rel (%p2073) target = $region135
                $region132: #{lenet_logits.3} parent=127 // loop_body
                  %v2080 = vld [vmem:[%s2078] sm:$0xf]
                  %2081 = vst [vmem:[%s2079] sm:$0xf] %v2080
                  %v2082 = vld [vmem:[%s2078 + $0x4] sm:$0xf]
                  %2083 = vst [vmem:[%s2079 + $0x4] sm:$0xf] %v2082
                  %v2084 = vld [vmem:[%s2078 + $0x8] sm:$0xf]
                  %2085 = vst [vmem:[%s2079 + $0x8] sm:$0xf] %v2084
                  %v2086 = vld [vmem:[%s2078 + $0xc] sm:$0xf]
                  %2087 = vst [vmem:[%s2079 + $0xc] sm:$0xf] %v2086
                  %v2088 = vld [vmem:[%s2078 + $0x10] sm:$0xf]
                  %2089 = vst [vmem:[%s2079 + $0x10] sm:$0xf] %v2088
                  %v2090 = vld [vmem:[%s2078 + $0x14] sm:$0xf]
                  %2091 = vst [vmem:[%s2079 + $0x14] sm:$0xf] %v2090
                  %v2092 = vld [vmem:[%s2078 + $0x18] sm:$0xf]
                  %2093 = vst [vmem:[%s2079 + $0x18] sm:$0xf] %v2092
                  %v2094 = vld [vmem:[%s2078 + $0x1c] sm:$0xf]
                  %2095 = vst [vmem:[%s2079 + $0x1c] sm:$0xf] %v2094
                  %v2096 = vld [vmem:[%s2078 + $0x20] sm:$0xf]
                  %2097 = vst [vmem:[%s2079 + $0x20] sm:$0xf] %v2096
                  %v2098 = vld [vmem:[%s2078 + $0x24] sm:$0xf]
                  %2099 = vst [vmem:[%s2079 + $0x24] sm:$0xf] %v2098
                  %v2100 = vld [vmem:[%s2078 + $0x28] sm:$0xf]
                  %2101 = vst [vmem:[%s2079 + $0x28] sm:$0xf] %v2100
                  %v2102 = vld [vmem:[%s2078 + $0x2c] sm:$0xf]
                  %2103 = vst [vmem:[%s2079 + $0x2c] sm:$0xf] %v2102
                  %v2104 = vld [vmem:[%s2078 + $0x30] sm:$0xf]
                  %2105 = vst [vmem:[%s2079 + $0x30] sm:$0xf] %v2104
                  %v2106 = vld [vmem:[%s2078 + $0x34] sm:$0xf]
                  %2107 = vst [vmem:[%s2079 + $0x34] sm:$0xf] %v2106
                  %v2108 = vld [vmem:[%s2078 + $0x38] sm:$0xf]
                  %2109 = vst [vmem:[%s2079 + $0x38] sm:$0xf] %v2108
                  %v2110 = vld [vmem:[%s2078 + $0x3c] sm:$0xf]
                  %2111 = vst [vmem:[%s2079 + $0x3c] sm:$0xf] %v2110
                  %v2112 = vld [vmem:[%s2078 + $0x40] sm:$0xf]
                  %2113 = vst [vmem:[%s2079 + $0x40] sm:$0xf] %v2112
                  %v2114 = vld [vmem:[%s2078 + $0x44] sm:$0xf]
                  %2115 = vst [vmem:[%s2079 + $0x44] sm:$0xf] %v2114
                  %v2116 = vld [vmem:[%s2078 + $0x48] sm:$0xf]
                  %2117 = vst [vmem:[%s2079 + $0x48] sm:$0xf] %v2116
                  %v2118 = vld [vmem:[%s2078 + $0x4c] sm:$0xf]
                  %2119 = vst [vmem:[%s2079 + $0x4c] sm:$0xf] %v2118
                  %v2120 = vld [vmem:[%s2078 + $0x50] sm:$0xf]
                  %2121 = vst [vmem:[%s2079 + $0x50] sm:$0xf] %v2120
                  %v2122 = vld [vmem:[%s2078 + $0x54] sm:$0xf]
                  %2123 = vst [vmem:[%s2079 + $0x54] sm:$0xf] %v2122
                  %v2124 = vld [vmem:[%s2078 + $0x58] sm:$0xf]
                  %2125 = vst [vmem:[%s2079 + $0x58] sm:$0xf] %v2124
                  %v2126 = vld [vmem:[%s2078 + $0x5c] sm:$0xf]
                  %2127 = vst [vmem:[%s2079 + $0x5c] sm:$0xf] %v2126
                  %v2128 = vld [vmem:[%s2078 + $0x60] sm:$0xf]
                  %2129 = vst [vmem:[%s2079 + $0x60] sm:$0xf] %v2128
                  %s2130 = sadd.s32 1, %s2077
                  %p2131 = scmp.ge.s32.totalorder %s2130, %s2069
                  %s2132 = scalar_select %p2131, 0, %s2130
                  %s2133 = smul.u32 %s2132, 100
                  %s2134 = smul.u32 %s2132, 100
                  %s2135 = scalar_lea.vmem %s1953, %s2133 [#allocation3]
                  %s2136 = scalar_lea.vmem %s1964, %s2134
                $region133: #{lenet_logits.3} parent=127 // loop_footer
                  %s2074 = sadd.s32 %s2072, 1
                $region134: #{lenet_logits.3} parent=127 // loop_footer_branch
                  %2071 = sbr.rel target = $region130
                $region135: #{lenet_logits.3} parent=127 // loop_exit
                  _
                %s2137 = sdiv.u32.pop %s1960, 25
                %s2138 = srem.u32.pop %s1960, 25
                %s2139 = smul.u32 %s2137, 25
                %s2140 = smul.u32 4, %s2139
                %s2141 = scalar_lea.vmem %s1953, %s2140 [#allocation3]
                %s2142 = smul.u32 4, %s2139
                %s2143 = scalar_lea.vmem %s1964, %s2142
                // While loop
                $region136: #{lenet_logits.3} parent=127 // loop_pre_header
                  _
                $region137: #{lenet_logits.3} parent=127 // loop_header
                  %s2145 = sphi 0, %s2147
                  %p2146 = scmp.ge.s32.totalorder %s2145, %s2138
                  %s2150 = sphi 0, %s2157
                  %s2151 = sphi %s2141, %s2160
                  %s2152 = sphi %s2143, %s2161
                $region138: #{lenet_logits.3} parent=127 // loop_header_branch
                  %2149 = sbr.rel (%p2146) target = $region142
                $region139: #{lenet_logits.3} parent=127 // loop_body
                  %v2153 = vld [vmem:[%s2151] sm:$0xf]
                  %2154 = vst [vmem:[%s2152] sm:$0xf] %v2153
                  %s2155 = sadd.s32 1, %s2150
                  %p2156 = scmp.ge.s32.totalorder %s2155, %s2138
                  %s2157 = scalar_select %p2156, 0, %s2155
                  %s2158 = smul.u32 %s2157, 4
                  %s2159 = smul.u32 %s2157, 4
                  %s2160 = scalar_lea.vmem %s2141, %s2158 [#allocation3]
                  %s2161 = scalar_lea.vmem %s2143, %s2159
                $region140: #{lenet_logits.3} parent=127 // loop_footer
                  %s2147 = sadd.s32 %s2145, 1
                $region141: #{lenet_logits.3} parent=127 // loop_footer_branch
                  %2144 = sbr.rel target = $region137
                $region142: #{lenet_logits.3} parent=127 // loop_exit
                  _
              $region128: #{lenet_logits.3} parent=105 // pred_fallthru
                _
            $region106: #{lenet_logits.3} parent=101 // pred_fallthru
              _
            // Predicated region
            $region107: #{lenet_logits.3} parent=101 // pred_check
              _
            $region108: #{lenet_logits.3} parent=101 // pred_check_branch
              %1971 = sbr.rel (0) target = $region110
            $region109: #{lenet_logits.3} parent=101 // pred_region
              %s1973 = sdiv.u32.pop %s1960, 25
              %s1974 = srem.u32.pop %s1960, 25
              // While loop
              $region111: #{lenet_logits.3} parent=109 // loop_pre_header
                _
              $region112: #{lenet_logits.3} parent=109 // loop_header
                %s1976 = sphi 0, %s1978
                %p1977 = scmp.ge.s32.totalorder %s1976, %s1973
                %s1981 = sphi 0, %s2036
                %s1982 = sphi %s1953, %s2039
                %s1983 = sphi %s1964, %s2040
              $region113: #{lenet_logits.3} parent=109 // loop_header_branch
                %1980 = sbr.rel (%p1977) target = $region117
              $region114: #{lenet_logits.3} parent=109 // loop_body
                %v1984 = vld [vmem:[%s1982] sm:$0xf]
                %1985 = vst [vmem:[%s1983] sm:$0xf] %v1984
                %v1986 = vld [vmem:[%s1982 + $0x4] sm:$0xf]
                %1987 = vst [vmem:[%s1983 + $0x4] sm:$0xf] %v1986
                %v1988 = vld [vmem:[%s1982 + $0x8] sm:$0xf]
                %1989 = vst [vmem:[%s1983 + $0x8] sm:$0xf] %v1988
                %v1990 = vld [vmem:[%s1982 + $0xc] sm:$0xf]
                %1991 = vst [vmem:[%s1983 + $0xc] sm:$0xf] %v1990
                %v1992 = vld [vmem:[%s1982 + $0x10] sm:$0xf]
                %1993 = vst [vmem:[%s1983 + $0x10] sm:$0xf] %v1992
                %v1994 = vld [vmem:[%s1982 + $0x14] sm:$0xf]
                %1995 = vst [vmem:[%s1983 + $0x14] sm:$0xf] %v1994
                %v1996 = vld [vmem:[%s1982 + $0x18] sm:$0xf]
                %1997 = vst [vmem:[%s1983 + $0x18] sm:$0xf] %v1996
                %v1998 = vld [vmem:[%s1982 + $0x1c] sm:$0xf]
                %1999 = vst [vmem:[%s1983 + $0x1c] sm:$0xf] %v1998
                %v2000 = vld [vmem:[%s1982 + $0x20] sm:$0xf]
                %2001 = vst [vmem:[%s1983 + $0x20] sm:$0xf] %v2000
                %v2002 = vld [vmem:[%s1982 + $0x24] sm:$0xf]
                %2003 = vst [vmem:[%s1983 + $0x24] sm:$0xf] %v2002
                %v2004 = vld [vmem:[%s1982 + $0x28] sm:$0xf]
                %2005 = vst [vmem:[%s1983 + $0x28] sm:$0xf] %v2004
                %v2006 = vld [vmem:[%s1982 + $0x2c] sm:$0xf]
                %2007 = vst [vmem:[%s1983 + $0x2c] sm:$0xf] %v2006
                %v2008 = vld [vmem:[%s1982 + $0x30] sm:$0xf]
                %2009 = vst [vmem:[%s1983 + $0x30] sm:$0xf] %v2008
                %v2010 = vld [vmem:[%s1982 + $0x34] sm:$0xf]
                %2011 = vst [vmem:[%s1983 + $0x34] sm:$0xf] %v2010
                %v2012 = vld [vmem:[%s1982 + $0x38] sm:$0xf]
                %2013 = vst [vmem:[%s1983 + $0x38] sm:$0xf] %v2012
                %v2014 = vld [vmem:[%s1982 + $0x3c] sm:$0xf]
                %2015 = vst [vmem:[%s1983 + $0x3c] sm:$0xf] %v2014
                %v2016 = vld [vmem:[%s1982 + $0x40] sm:$0xf]
                %2017 = vst [vmem:[%s1983 + $0x40] sm:$0xf] %v2016
                %v2018 = vld [vmem:[%s1982 + $0x44] sm:$0xf]
                %2019 = vst [vmem:[%s1983 + $0x44] sm:$0xf] %v2018
                %v2020 = vld [vmem:[%s1982 + $0x48] sm:$0xf]
                %2021 = vst [vmem:[%s1983 + $0x48] sm:$0xf] %v2020
                %v2022 = vld [vmem:[%s1982 + $0x4c] sm:$0xf]
                %2023 = vst [vmem:[%s1983 + $0x4c] sm:$0xf] %v2022
                %v2024 = vld [vmem:[%s1982 + $0x50] sm:$0xf]
                %2025 = vst [vmem:[%s1983 + $0x50] sm:$0xf] %v2024
                %v2026 = vld [vmem:[%s1982 + $0x54] sm:$0xf]
                %2027 = vst [vmem:[%s1983 + $0x54] sm:$0xf] %v2026
                %v2028 = vld [vmem:[%s1982 + $0x58] sm:$0xf]
                %2029 = vst [vmem:[%s1983 + $0x58] sm:$0xf] %v2028
                %v2030 = vld [vmem:[%s1982 + $0x5c] sm:$0xf]
                %2031 = vst [vmem:[%s1983 + $0x5c] sm:$0xf] %v2030
                %v2032 = vld [vmem:[%s1982 + $0x60] sm:$0xf]
                %2033 = vst [vmem:[%s1983 + $0x60] sm:$0xf] %v2032
                %s2034 = sadd.s32 1, %s1981
                %p2035 = scmp.ge.s32.totalorder %s2034, %s1973
                %s2036 = scalar_select %p2035, 0, %s2034
                %s2037 = smul.u32 %s2036, 100
                %s2038 = smul.u32 %s2036, 100
                %s2039 = scalar_lea.vmem %s1953, %s2037 [#allocation3]
                %s2040 = scalar_lea.vmem %s1964, %s2038
              $region115: #{lenet_logits.3} parent=109 // loop_footer
                %s1978 = sadd.s32 %s1976, 1
              $region116: #{lenet_logits.3} parent=109 // loop_footer_branch
                %1975 = sbr.rel target = $region112
              $region117: #{lenet_logits.3} parent=109 // loop_exit
                _
              %s2041 = sdiv.u32.pop %s1960, 25
              %s2042 = srem.u32.pop %s1960, 25
              %s2043 = smul.u32 %s2041, 25
              %s2044 = smul.u32 4, %s2043
              %s2045 = scalar_lea.vmem %s1953, %s2044 [#allocation3]
              %s2046 = smul.u32 4, %s2043
              %s2047 = scalar_lea.vmem %s1964, %s2046
              // While loop
              $region118: #{lenet_logits.3} parent=109 // loop_pre_header
                _
              $region119: #{lenet_logits.3} parent=109 // loop_header
                %s2049 = sphi 0, %s2051
                %p2050 = scmp.ge.s32.totalorder %s2049, %s2042
                %s2054 = sphi 0, %s2061
                %s2055 = sphi %s2045, %s2064
                %s2056 = sphi %s2047, %s2065
              $region120: #{lenet_logits.3} parent=109 // loop_header_branch
                %2053 = sbr.rel (%p2050) target = $region124
              $region121: #{lenet_logits.3} parent=109 // loop_body
                %v2057 = vld [vmem:[%s2055] sm:$0xf]
                %2058 = vst [vmem:[%s2056] sm:$0xf] %v2057
                %s2059 = sadd.s32 1, %s2054
                %p2060 = scmp.ge.s32.totalorder %s2059, %s2042
                %s2061 = scalar_select %p2060, 0, %s2059
                %s2062 = smul.u32 %s2061, 4
                %s2063 = smul.u32 %s2061, 4
                %s2064 = scalar_lea.vmem %s2045, %s2062 [#allocation3]
                %s2065 = scalar_lea.vmem %s2047, %s2063
              $region122: #{lenet_logits.3} parent=109 // loop_footer
                %s2051 = sadd.s32 %s2049, 1
              $region123: #{lenet_logits.3} parent=109 // loop_footer_branch
                %2048 = sbr.rel target = $region119
              $region124: #{lenet_logits.3} parent=109 // loop_exit
                _
            $region110: #{lenet_logits.3} parent=101 // pred_fallthru
              _
          $region102: #{lenet_logits.3} parent=97 // pred_fallthru
            _
          %2162 = vnop
        $region98: #{lenet_logits.3} parent=89 // pred_fallthru
          _
      $region90: #{lenet_logits.3} parent=5 // pred_fallthru
        _
      %p2163 = scmp.le.s32.totalorder 2, %s9
      // Predicated region
      $region143: #{lenet_logits.3} parent=5 // pred_check
        %p2164 = pneg %p2163
      $region144: #{lenet_logits.3} parent=5 // pred_check_branch
        %2166 = sbr.rel (%p2164) target = $region146
      $region145: #{lenet_logits.3} parent=5 // pred_region
        %s2167 = ssub.s32 %s9, 2
        // Predicated region
        $region147: #{lenet_logits.3} parent=145 // pred_check
          %p2168 = pneg %p106
        $region148: #{lenet_logits.3} parent=145 // pred_check_branch
          %2170 = sbr.rel (%p2168) target = $region150
        $region149: #{lenet_logits.3} parent=145 // pred_region
          %s2171 = sand.u32 %s91, 1
          %s2172 = sand.u32 %s91, 1
          %s2173 = smul.addr %s2172, 100
          %s2174 = scalar_lea.vmem [#allocation3], %s2173
        $region150: #{lenet_logits.3} parent=145 // pred_fallthru
          _
      $region146: #{lenet_logits.3} parent=5 // pred_fallthru
        _
    $region6: #{lenet_logits.3} parent=1 // loop_footer
      %s13 = sadd.s32 1, %s9
    $region7: #{lenet_logits.3} parent=1 // loop_footer_branch
      %8 = sbr.rel target = $region3
    $region8: #{lenet_logits.3} parent=1 // loop_exit
      _

// kernel: lenet_logits.4
$region0: #{lenet_logits.4}
  #allocation0 [shape = 'u32[]', space=smem, size = 0x4, offset = 0x4, fixed_abs, tag = 'smem constant byte address 0x4 - core index']
  #allocation1 [shape = 'u32[144,128]{1,0:T(1,128)}', space=vmem, size = 0x12000, scoped, tag = 'internal scratch']
  %s0 = inlined_call_operand.vmem [shape: bf16[4,50,200], index: 0, kind: input, shape index: {}]
  %s1 = inlined_call_operand.vmem [shape: bf16[200,16], index: 1, kind: input, shape index: {}]
  %s2 = inlined_call_operand.vmem [shape: f32[1,16], index: 2, kind: input, shape index: {}]
  %s3 = inlined_call_operand.vmem [shape: bf16[50,16], index: 3, kind: output, shape index: {}]
  %s4 = sld [smem:[#allocation0]]
  $region141: #{lenet_logits.4} parent=0
    _
  %s6 = ssub.s32 1, %s4
  %s7 = scalar_select 0, %s6, %s4
  $region1: #{lenet_logits.4} parent=0
    #allocation2 [shape = 'u8[131072]{0}', space=vmem, size = 0x20000, scoped, tag = 'input window, operand 0']
    #allocation3 [shape = 'u8[16384]{0}', space=vmem, size = 0x4000, scoped, tag = 'output window, operand 0']
    loop: start=0, step=1, limit=4
    $region2: #{lenet_logits.4} parent=1 // loop_pre_header
      _
    $region3: #{lenet_logits.4} parent=1 // loop_header
      %s9 = sphi 0, %s13
      %p10 = scmp.ge.s32.totalorder %s9, 4
      %s19 = sphi 0, %s21
      %s22 = sphi 0, %s19
      %s23 = sphi 0, %s22
      %s39 = sphi 0, %s23
      %s43 = sphi 0, %s43
      %s45 = sphi 0, %s43
      %s46 = sphi 0, %s45
      %s60 = sphi 0, %s46
      %s64 = sphi 0, %s64
      %s66 = sphi 0, %s64
      %s67 = sphi 0, %s66
      %s81 = sphi 0, %s67
      %s87 = sphi 0, %s89
      %s90 = sphi 0, %s87
      %s91 = sphi 0, %s90
      %s107 = sphi 0, %s91
    $region4: #{lenet_logits.4} parent=1 // loop_header_branch
      %12 = sbr.rel (%p10) target = $region8
    $region5: #{lenet_logits.4} parent=1 // loop_body
      %s14 = ssub.s32 %s9, 1
      %s15 = ssub.s32 %s9, 2
      %s16 = sadd.s32 %s9, 1
      %s17 = ssub.s32 %s9, %s16
      %p18 = scmp.eq.s32.totalorder %s17, 0
      %s20 = sadd.s32 %s19, 1
      %s21 = scalar_select %p18, %s19, %s20
      %p24 = pneg %p18
      %p25 = scmp.eq.s32.totalorder %s9, 1
      %p26 = por %p24, %p25
      %p27 = scmp.ne.s32.totalorder %s19, %s22
      %p28 = scmp.eq.s32.totalorder %s9, 0
      %p29 = por %p27, %p28
      %p30 = scmp.ne.s32.totalorder %s19, %s22
      %p31 = scmp.eq.s32.totalorder %s14, 1
      %p32 = por %p30, %p31
      %p33 = scmp.ne.s32.totalorder %s22, %s23
      %p34 = scmp.eq.s32.totalorder %s14, 0
      %p35 = por %p33, %p34
      %p36 = scmp.ne.s32.totalorder %s22, %s23
      %p37 = scmp.eq.s32.totalorder %s15, 1
      %p38 = por %p36, %p37
      %p40 = scmp.ne.s32.totalorder %s23, %s39
      %p41 = scmp.eq.s32.totalorder %s15, 0
      %p42 = por %p40, %p41
      %s44 = sadd.s32 %s43, 1
      %p47 = scmp.eq.s32.totalorder %s9, 1
      %p48 = scmp.ne.s32.totalorder %s43, %s45
      %p49 = scmp.eq.s32.totalorder %s9, 0
      %p50 = por %p48, %p49
      %p51 = scmp.ne.s32.totalorder %s43, %s45
      %p52 = scmp.eq.s32.totalorder %s14, 1
      %p53 = por %p51, %p52
      %p54 = scmp.ne.s32.totalorder %s45, %s46
      %p55 = scmp.eq.s32.totalorder %s14, 0
      %p56 = por %p54, %p55
      %p57 = scmp.ne.s32.totalorder %s45, %s46
      %p58 = scmp.eq.s32.totalorder %s15, 1
      %p59 = por %p57, %p58
      %p61 = scmp.ne.s32.totalorder %s46, %s60
      %p62 = scmp.eq.s32.totalorder %s15, 0
      %p63 = por %p61, %p62
      %s65 = sadd.s32 %s64, 1
      %p68 = scmp.eq.s32.totalorder %s9, 1
      %p69 = scmp.ne.s32.totalorder %s64, %s66
      %p70 = scmp.eq.s32.totalorder %s9, 0
      %p71 = por %p69, %p70
      %p72 = scmp.ne.s32.totalorder %s64, %s66
      %p73 = scmp.eq.s32.totalorder %s14, 1
      %p74 = por %p72, %p73
      %p75 = scmp.ne.s32.totalorder %s66, %s67
      %p76 = scmp.eq.s32.totalorder %s14, 0
      %p77 = por %p75, %p76
      %p78 = scmp.ne.s32.totalorder %s66, %s67
      %p79 = scmp.eq.s32.totalorder %s15, 1
      %p80 = por %p78, %p79
      %p82 = scmp.ne.s32.totalorder %s67, %s81
      %p83 = scmp.eq.s32.totalorder %s15, 0
      %p84 = por %p82, %p83
      %s85 = ssub.s32 %s9, %s16
      %p86 = scmp.eq.s32.totalorder %s85, 0
      %s88 = sadd.s32 %s87, 1
      %s89 = scalar_select %p86, %s87, %s88
      %p92 = pneg %p86
      %p93 = scmp.eq.s32.totalorder %s9, 1
      %p94 = por %p92, %p93
      %p95 = scmp.ne.s32.totalorder %s87, %s90
      %p96 = scmp.eq.s32.totalorder %s9, 0
      %p97 = por %p95, %p96
      %p98 = scmp.ne.s32.totalorder %s87, %s90
      %p99 = scmp.eq.s32.totalorder %s14, 1
      %p100 = por %p98, %p99
      %p101 = scmp.ne.s32.totalorder %s90, %s91
      %p102 = scmp.eq.s32.totalorder %s14, 0
      %p103 = por %p101, %p102
      %p104 = scmp.ne.s32.totalorder %s90, %s91
      %p105 = scmp.eq.s32.totalorder %s15, 1
      %p106 = por %p104, %p105
      %p108 = scmp.ne.s32.totalorder %s91, %s107
      %p109 = scmp.eq.s32.totalorder %s15, 0
      %p110 = por %p108, %p109
      %p111 = scmp.le.s32.totalorder 1, %s9
      %p112 = scmp.lt.s32.totalorder %s9, 3
      %p113 = pnand %p111, %p112
      %p114 = pneg %p113
      // Predicated region
      $region9: #{lenet_logits.4} parent=5 // pred_check
        _
      $region10: #{lenet_logits.4} parent=5 // pred_check_branch
        %116 = sbr.rel (%p113) target = $region12
      $region11: #{lenet_logits.4} parent=5 // pred_region
        %s117 = ssub.s32 %s9, 1
        // Predicated region
        $region13: #{lenet_logits.4} parent=11 // pred_check
          %p118 = pneg %p56
        $region14: #{lenet_logits.4} parent=11 // pred_check_branch
          %120 = sbr.rel (%p118) target = $region16
        $region15: #{lenet_logits.4} parent=11 // pred_region
          _
        $region16: #{lenet_logits.4} parent=11 // pred_fallthru
          _
        // Predicated region
        $region17: #{lenet_logits.4} parent=11 // pred_check
          %p121 = pneg %p77
        $region18: #{lenet_logits.4} parent=11 // pred_check_branch
          %123 = sbr.rel (%p121) target = $region20
        $region19: #{lenet_logits.4} parent=11 // pred_region
          _
        $region20: #{lenet_logits.4} parent=11 // pred_fallthru
          _
      $region12: #{lenet_logits.4} parent=5 // pred_fallthru
        _
      %p124 = scmp.lt.s32.totalorder %s9, 2
      // Predicated region
      $region21: #{lenet_logits.4} parent=5 // pred_check
        %p125 = pneg %p124
      $region22: #{lenet_logits.4} parent=5 // pred_check_branch
        %127 = sbr.rel (%p125) target = $region24
      $region23: #{lenet_logits.4} parent=5 // pred_region
        // Predicated region
        $region25: #{lenet_logits.4} parent=23 // pred_check
          %p128 = pneg %p29
        $region26: #{lenet_logits.4} parent=23 // pred_check_branch
          %130 = sbr.rel (%p128) target = $region28
        $region27: #{lenet_logits.4} parent=23 // pred_region
          %s131 = sand.u32 %s19, 1
          %s132 = sand.u32 %s19, 1
          %s133 = smul.addr %s132, 128
          %s134 = scalar_lea.vmem [#allocation2], %s133
          %s135 = smul.u32 4, %s9
          %s136 = ssub.s32 7, %s135
          %p137 = scmp.lt.s32.totalorder %s136, 4
          %s138 = scalar_select %p137, %s136, 4
          %s139 = smul.u32 256, %s138
          %s140 = smul.u32 %s139, 2
          %p141 = scmp.ne.s32.totalorder 0, %s140
          %s142 = smul.addr %s135, 2
          %s143 = smul.addr %s142, 4
          %s144 = scalar_lea.vmem %s0, %s143
          // Predicated region
          $region29: #{lenet_logits.4} parent=27 // pred_check
            %p145 = pneg %p141
          $region30: #{lenet_logits.4} parent=27 // pred_check_branch
            %147 = sbr.rel (%p145) target = $region32
          $region31: #{lenet_logits.4} parent=27 // pred_region
            // Predicated region
            $region33: #{lenet_logits.4} parent=31 // pred_check
              _
            $region34: #{lenet_logits.4} parent=31 // pred_check_branch
              %149 = sbr.rel (0) target = $region36
            $region35: #{lenet_logits.4} parent=31 // pred_region
              // Predicated region
              $region55: #{lenet_logits.4} parent=35 // pred_check
                _
              $region56: #{lenet_logits.4} parent=35 // pred_check_branch
                %234 = sbr.rel (0) target = $region58
              $region57: #{lenet_logits.4} parent=35 // pred_region
                %s235 = sshrl.u32 %s138, 2
                // While loop
                $region59: #{lenet_logits.4} parent=57 // loop_pre_header
                  _
                $region60: #{lenet_logits.4} parent=57 // loop_header
                  %s237 = sphi 0, %s239
                  %p238 = scmp.ge.s32.totalorder %s237, %s235
                  %s242 = sphi 0, %s279
                  %s243 = sphi %s144, %s282
                  %s244 = sphi %s134, %s283
                $region61: #{lenet_logits.4} parent=57 // loop_header_branch
                  %241 = sbr.rel (%p238) target = $region65
                $region62: #{lenet_logits.4} parent=57 // loop_body
                  %v245 = vld [vmem:[%s243] sm:$0xff]
                  %246 = vst [vmem:[%s244] sm:$0xff] %v245
                  %v247 = vld [vmem:[%s243 + $0x8] sm:$0xff]
                  %248 = vst [vmem:[%s244 + $0x8] sm:$0xff] %v247
                  %v249 = vld [vmem:[%s243 + $0x10] sm:$0xff]
                  %250 = vst [vmem:[%s244 + $0x10] sm:$0xff] %v249
                  %v251 = vld [vmem:[%s243 + $0x18] sm:$0xff]
                  %252 = vst [vmem:[%s244 + $0x18] sm:$0xff] %v251
                  %v253 = vld [vmem:[%s243 + $0x38] sm:$0xff]
                  %254 = vst [vmem:[%s244 + $0x20] sm:$0xff] %v253
                  %v255 = vld [vmem:[%s243 + $0x40] sm:$0xff]
                  %256 = vst [vmem:[%s244 + $0x28] sm:$0xff] %v255
                  %v257 = vld [vmem:[%s243 + $0x48] sm:$0xff]
                  %258 = vst [vmem:[%s244 + $0x30] sm:$0xff] %v257
                  %v259 = vld [vmem:[%s243 + $0x50] sm:$0xff]
                  %260 = vst [vmem:[%s244 + $0x38] sm:$0xff] %v259
                  %v261 = vld [vmem:[%s243 + $0x70] sm:$0xff]
                  %262 = vst [vmem:[%s244 + $0x40] sm:$0xff] %v261
                  %v263 = vld [vmem:[%s243 + $0x78] sm:$0xff]
                  %264 = vst [vmem:[%s244 + $0x48] sm:$0xff] %v263
                  %v265 = vld [vmem:[%s243 + $0x80] sm:$0xff]
                  %266 = vst [vmem:[%s244 + $0x50] sm:$0xff] %v265
                  %v267 = vld [vmem:[%s243 + $0x88] sm:$0xff]
                  %268 = vst [vmem:[%s244 + $0x58] sm:$0xff] %v267
                  %v269 = vld [vmem:[%s243 + $0xa8] sm:$0xff]
                  %270 = vst [vmem:[%s244 + $0x60] sm:$0xff] %v269
                  %v271 = vld [vmem:[%s243 + $0xb0] sm:$0xff]
                  %272 = vst [vmem:[%s244 + $0x68] sm:$0xff] %v271
                  %v273 = vld [vmem:[%s243 + $0xb8] sm:$0xff]
                  %274 = vst [vmem:[%s244 + $0x70] sm:$0xff] %v273
                  %v275 = vld [vmem:[%s243 + $0xc0] sm:$0xff]
                  %276 = vst [vmem:[%s244 + $0x78] sm:$0xff] %v275
                  %s277 = sadd.s32 1, %s242
                  %p278 = scmp.ge.s32.totalorder %s277, %s235
                  %s279 = scalar_select %p278, 0, %s277
                  %s280 = smul.u32 %s279, 32
                  %s281 = smul.u32 %s279, 32
                  %s282 = scalar_lea.vmem %s144, %s280
                  %s283 = scalar_lea.vmem %s134, %s281 [#allocation2]
                $region63: #{lenet_logits.4} parent=57 // loop_footer
                  %s239 = sadd.s32 %s237, 1
                $region64: #{lenet_logits.4} parent=57 // loop_footer_branch
                  %236 = sbr.rel target = $region60
                $region65: #{lenet_logits.4} parent=57 // loop_exit
                  _
                %s284 = sshrl.u32 %s138, 2
                %s285 = sand.u32 %s138, 3
                %s286 = smul.u32 %s284, 4
                %s287 = smul.u32 8, %s286
                %s288 = scalar_lea.vmem %s144, %s287
                %s289 = smul.u32 8, %s286
                %s290 = scalar_lea.vmem %s134, %s289 [#allocation2]
                // While loop
                $region66: #{lenet_logits.4} parent=57 // loop_pre_header
                  _
                $region67: #{lenet_logits.4} parent=57 // loop_header
                  %s292 = sphi 0, %s294
                  %p293 = scmp.ge.s32.totalorder %s292, %s285
                  %s297 = sphi 0, %s310
                  %s298 = sphi %s288, %s313
                  %s299 = sphi %s290, %s314
                $region68: #{lenet_logits.4} parent=57 // loop_header_branch
                  %296 = sbr.rel (%p293) target = $region72
                $region69: #{lenet_logits.4} parent=57 // loop_body
                  %v300 = vld [vmem:[%s298] sm:$0xff]
                  %301 = vst [vmem:[%s299] sm:$0xff] %v300
                  %v302 = vld [vmem:[%s298 + $0x38] sm:$0xff]
                  %303 = vst [vmem:[%s299 + $0x20] sm:$0xff] %v302
                  %v304 = vld [vmem:[%s298 + $0x70] sm:$0xff]
                  %305 = vst [vmem:[%s299 + $0x40] sm:$0xff] %v304
                  %v306 = vld [vmem:[%s298 + $0xa8] sm:$0xff]
                  %307 = vst [vmem:[%s299 + $0x60] sm:$0xff] %v306
                  %s308 = sadd.s32 1, %s297
                  %p309 = scmp.ge.s32.totalorder %s308, %s285
                  %s310 = scalar_select %p309, 0, %s308
                  %s311 = smul.u32 %s310, 8
                  %s312 = smul.u32 %s310, 8
                  %s313 = scalar_lea.vmem %s288, %s311
                  %s314 = scalar_lea.vmem %s290, %s312 [#allocation2]
                $region70: #{lenet_logits.4} parent=57 // loop_footer
                  %s294 = sadd.s32 %s292, 1
                $region71: #{lenet_logits.4} parent=57 // loop_footer_branch
                  %291 = sbr.rel target = $region67
                $region72: #{lenet_logits.4} parent=57 // loop_exit
                  _
              $region58: #{lenet_logits.4} parent=35 // pred_fallthru
                _
              // Predicated region
              $region73: #{lenet_logits.4} parent=35 // pred_check
                _
              $region74: #{lenet_logits.4} parent=35 // pred_check_branch
                %316 = sbr.rel target = $region76
              $region75: #{lenet_logits.4} parent=35 // pred_region
                _
              $region76: #{lenet_logits.4} parent=35 // pred_fallthru
                _
            $region36: #{lenet_logits.4} parent=31 // pred_fallthru
              _
            // Predicated region
            $region37: #{lenet_logits.4} parent=31 // pred_check
              _
            $region38: #{lenet_logits.4} parent=31 // pred_check_branch
              %151 = sbr.rel target = $region40
            $region39: #{lenet_logits.4} parent=31 // pred_region
              %s153 = sshrl.u32 %s138, 2
              // While loop
              $region41: #{lenet_logits.4} parent=39 // loop_pre_header
                _
              $region42: #{lenet_logits.4} parent=39 // loop_header
                %s155 = sphi 0, %s157
                %p156 = scmp.ge.s32.totalorder %s155, %s153
                %s160 = sphi 0, %s197
                %s161 = sphi %s144, %s200
                %s162 = sphi %s134, %s201
              $region43: #{lenet_logits.4} parent=39 // loop_header_branch
                %159 = sbr.rel (%p156) target = $region47
              $region44: #{lenet_logits.4} parent=39 // loop_body
                %v163 = vld [vmem:[%s161] sm:$0xff]
                %164 = vst [vmem:[%s162] sm:$0xff] %v163
                %v165 = vld [vmem:[%s161 + $0x8] sm:$0xff]
                %166 = vst [vmem:[%s162 + $0x8] sm:$0xff] %v165
                %v167 = vld [vmem:[%s161 + $0x10] sm:$0xff]
                %168 = vst [vmem:[%s162 + $0x10] sm:$0xff] %v167
                %v169 = vld [vmem:[%s161 + $0x18] sm:$0xff]
                %170 = vst [vmem:[%s162 + $0x18] sm:$0xff] %v169
                %v171 = vld [vmem:[%s161 + $0x38] sm:$0xff]
                %172 = vst [vmem:[%s162 + $0x20] sm:$0xff] %v171
                %v173 = vld [vmem:[%s161 + $0x40] sm:$0xff]
                %174 = vst [vmem:[%s162 + $0x28] sm:$0xff] %v173
                %v175 = vld [vmem:[%s161 + $0x48] sm:$0xff]
                %176 = vst [vmem:[%s162 + $0x30] sm:$0xff] %v175
                %v177 = vld [vmem:[%s161 + $0x50] sm:$0xff]
                %178 = vst [vmem:[%s162 + $0x38] sm:$0xff] %v177
                %v179 = vld [vmem:[%s161 + $0x70] sm:$0xff]
                %180 = vst [vmem:[%s162 + $0x40] sm:$0xff] %v179
                %v181 = vld [vmem:[%s161 + $0x78] sm:$0xff]
                %182 = vst [vmem:[%s162 + $0x48] sm:$0xff] %v181
                %v183 = vld [vmem:[%s161 + $0x80] sm:$0xff]
                %184 = vst [vmem:[%s162 + $0x50] sm:$0xff] %v183
                %v185 = vld [vmem:[%s161 + $0x88] sm:$0xff]
                %186 = vst [vmem:[%s162 + $0x58] sm:$0xff] %v185
                %v187 = vld [vmem:[%s161 + $0xa8] sm:$0xff]
                %188 = vst [vmem:[%s162 + $0x60] sm:$0xff] %v187
                %v189 = vld [vmem:[%s161 + $0xb0] sm:$0xff]
                %190 = vst [vmem:[%s162 + $0x68] sm:$0xff] %v189
                %v191 = vld [vmem:[%s161 + $0xb8] sm:$0xff]
                %192 = vst [vmem:[%s162 + $0x70] sm:$0xff] %v191
                %v193 = vld [vmem:[%s161 + $0xc0] sm:$0xff]
                %194 = vst [vmem:[%s162 + $0x78] sm:$0xff] %v193
                %s195 = sadd.s32 1, %s160
                %p196 = scmp.ge.s32.totalorder %s195, %s153
                %s197 = scalar_select %p196, 0, %s195
                %s198 = smul.u32 %s197, 32
                %s199 = smul.u32 %s197, 32
                %s200 = scalar_lea.vmem %s144, %s198
                %s201 = scalar_lea.vmem %s134, %s199 [#allocation2]
              $region45: #{lenet_logits.4} parent=39 // loop_footer
                %s157 = sadd.s32 %s155, 1
              $region46: #{lenet_logits.4} parent=39 // loop_footer_branch
                %154 = sbr.rel target = $region42
              $region47: #{lenet_logits.4} parent=39 // loop_exit
                _
              %s202 = sshrl.u32 %s138, 2
              %s203 = sand.u32 %s138, 3
              %s204 = smul.u32 %s202, 4
              %s205 = smul.u32 8, %s204
              %s206 = scalar_lea.vmem %s144, %s205
              %s207 = smul.u32 8, %s204
              %s208 = scalar_lea.vmem %s134, %s207 [#allocation2]
              // While loop
              $region48: #{lenet_logits.4} parent=39 // loop_pre_header
                _
              $region49: #{lenet_logits.4} parent=39 // loop_header
                %s210 = sphi 0, %s212
                %p211 = scmp.ge.s32.totalorder %s210, %s203
                %s215 = sphi 0, %s228
                %s216 = sphi %s206, %s231
                %s217 = sphi %s208, %s232
              $region50: #{lenet_logits.4} parent=39 // loop_header_branch
                %214 = sbr.rel (%p211) target = $region54
              $region51: #{lenet_logits.4} parent=39 // loop_body
                %v218 = vld [vmem:[%s216] sm:$0xff]
                %219 = vst [vmem:[%s217] sm:$0xff] %v218
                %v220 = vld [vmem:[%s216 + $0x38] sm:$0xff]
                %221 = vst [vmem:[%s217 + $0x20] sm:$0xff] %v220
                %v222 = vld [vmem:[%s216 + $0x70] sm:$0xff]
                %223 = vst [vmem:[%s217 + $0x40] sm:$0xff] %v222
                %v224 = vld [vmem:[%s216 + $0xa8] sm:$0xff]
                %225 = vst [vmem:[%s217 + $0x60] sm:$0xff] %v224
                %s226 = sadd.s32 1, %s215
                %p227 = scmp.ge.s32.totalorder %s226, %s203
                %s228 = scalar_select %p227, 0, %s226
                %s229 = smul.u32 %s228, 8
                %s230 = smul.u32 %s228, 8
                %s231 = scalar_lea.vmem %s206, %s229
                %s232 = scalar_lea.vmem %s208, %s230 [#allocation2]
              $region52: #{lenet_logits.4} parent=39 // loop_footer
                %s212 = sadd.s32 %s210, 1
              $region53: #{lenet_logits.4} parent=39 // loop_footer_branch
                %209 = sbr.rel target = $region49
              $region54: #{lenet_logits.4} parent=39 // loop_exit
                _
            $region40: #{lenet_logits.4} parent=31 // pred_fallthru
              _
          $region32: #{lenet_logits.4} parent=27 // pred_fallthru
            _
          %317 = vnop
        $region28: #{lenet_logits.4} parent=23 // pred_fallthru
          _
      $region24: #{lenet_logits.4} parent=5 // pred_fallthru
        _
      %p318 = scmp.le.s32.totalorder 1, %s9
      %p319 = scmp.lt.s32.totalorder %s9, 3
      %p320 = pnand %p318, %p319
      %p321 = pneg %p320
      // Predicated region
      $region77: #{lenet_logits.4} parent=5 // pred_check
        _
      $region78: #{lenet_logits.4} parent=5 // pred_check_branch
        %323 = sbr.rel (%p320) target = $region80
      $region79: #{lenet_logits.4} parent=5 // pred_region
        %s324 = ssub.s32 %s9, 1
        %s325 = sand.u32 %s22, 1
        %s326 = sand.u32 %s22, 1
        %s327 = smul.addr %s326, 128
        %s328 = scalar_lea.vmem [#allocation2], %s327
        // Predicated region
        $region81: #{lenet_logits.4} parent=79 // pred_check
          %p329 = pneg %p35
        $region82: #{lenet_logits.4} parent=79 // pred_check_branch
          %331 = sbr.rel (%p329) target = $region84
        $region83: #{lenet_logits.4} parent=79 // pred_region
          _
        $region84: #{lenet_logits.4} parent=79 // pred_fallthru
          _
        %s332 = sand.u32 %s22, 1
        %s333 = sand.u32 %s22, 1
        %s334 = smul.addr %s333, 128
        %s335 = scalar_lea.vmem [#allocation2], %s334
        %p336 = pneg %p35
        %p337 = pneg %p32
        %p338 = pneg %p56
        %p339 = pneg %p53
        %p340 = pneg %p77
        %p341 = pneg %p74
        %p342 = pneg %p103
        %p343 = pneg %p100
        %s344 = sand.u32 %s90, 1
        %s345 = sand.u32 %s90, 1
        %s346 = smul.addr %s345, 16
        %s347 = scalar_lea.vmem [#allocation3], %s346
        %s348 = smul.u32 4, %s14
        %s349 = ssub.s32 7, %s348
        %p350 = scmp.lt.s32.totalorder %s349, 4
        %s351 = scalar_select %p350, %s349, 4
        %s352 = smul.u32 256, %s351
        %s353 = smul.u32 %s352, 2
        %s354 = smul.u32 4, %s14
        %s355 = ssub.s32 7, %s354
        %p356 = scmp.lt.s32.totalorder %s355, 4
        %s357 = scalar_select %p356, %s355, 4
        %s358 = smul.u32 64, %s357
        %v360 = vld [vmem:[%s1] sm:$0xf]
        %v361 = vld [vmem:[%s1 + $0x4] sm:$0xf]
        %v362 = vld [vmem:[%s1 + $0x8] sm:$0xf]
        %v363 = vld [vmem:[%s1 + $0xc] sm:$0xf]
        %v364 = vld [vmem:[%s1 + $0x10] sm:$0xf]
        %v365 = vld [vmem:[%s1 + $0x14] sm:$0xf]
        %v366 = vld [vmem:[%s1 + $0x18] sm:$0xf]
        %v367 = vld [vmem:[%s1 + $0x1c] sm:$0xf]
        %v368 = vld [vmem:[%s1 + $0x20] sm:$0xf]
        %v369 = vld [vmem:[%s1 + $0x24] sm:$0xf]
        %v370 = vld [vmem:[%s1 + $0x28] sm:$0xf]
        %v371 = vld [vmem:[%s1 + $0x2c] sm:$0xf]
        %v372 = vld [vmem:[%s1 + $0x30] sm:$0xf]
        %v373 = vld [vmem:[%s1 + $0x34] sm:$0xf]
        %v374 = vld [vmem:[%s1 + $0x38] sm:$0xf]
        %v375 = vld [vmem:[%s1 + $0x3c] sm:$0xf]
        %v376 = vld [vmem:[%s1 + $0x40] sm:$0xf]
        %v377 = vld [vmem:[%s1 + $0x44] sm:$0xf]
        %v378 = vld [vmem:[%s1 + $0x48] sm:$0xf]
        %v379 = vld [vmem:[%s1 + $0x4c] sm:$0xf]
        %v380 = vld [vmem:[%s1 + $0x50] sm:$0xf]
        %v381 = vld [vmem:[%s1 + $0x54] sm:$0xf]
        %v382 = vld [vmem:[%s1 + $0x58] sm:$0xf]
        %v383 = vld [vmem:[%s1 + $0x5c] sm:$0xf]
        %v384 = vld [vmem:[%s1 + $0x60] sm:$0xf]
        %v385 = vld [vmem:[%s328] sm:$0xff]
        %v386 = vld [vmem:[%s328 + $0x8] sm:$0xff]
        %v387 = vld [vmem:[%s328 + $0x10] sm:$0xff]
        %v388 = vld [vmem:[%s328 + $0x18] sm:$0xff]
        %v393 = vunpack.c.l.b16 %v385
        %v394 = vunpack.c.h.b16 %v385
        %v395 = vunpack.c.l.b16 %v386
        %v396 = vunpack.c.h.b16 %v386
        %v397 = vunpack.c.l.b16 %v387
        %v398 = vunpack.c.h.b16 %v387
        %v399 = vunpack.c.l.b16 %v388
        %v400 = vunpack.c.h.b16 %v388
        %v401 = vpack.c.b16 %v395, %v393
        %v402 = vpack.c.b16 %v396, %v394
        %v403 = vpack.c.b16 %v399, %v397
        %v404 = vpack.c.b16 %v400, %v398
        %v432 = vunpack.c.l.b16 %v360
        %v433 = vunpack.c.l.b16 %v361
        %v434 = vunpack.c.l.b16 %v362
        %v435 = vunpack.c.l.b16 %v363
        %v436 = vunpack.c.l.b16 %v364
        %v437 = vunpack.c.l.b16 %v365
        %v438 = vunpack.c.l.b16 %v366
        %v439 = vunpack.c.l.b16 %v367
        %v440 = vunpack.c.l.b16 %v368
        %v441 = vunpack.c.l.b16 %v369
        %v442 = vunpack.c.l.b16 %v370
        %v443 = vunpack.c.l.b16 %v371
        %v444 = vunpack.c.l.b16 %v372
        %v445 = vunpack.c.l.b16 %v373
        %v446 = vunpack.c.l.b16 %v374
        %v447 = vunpack.c.l.b16 %v375
        %v448 = vunpack.c.l.b16 %v376
        %v449 = vunpack.c.l.b16 %v377
        %v450 = vunpack.c.l.b16 %v378
        %v451 = vunpack.c.l.b16 %v379
        %v452 = vunpack.c.l.b16 %v380
        %v453 = vunpack.c.l.b16 %v381
        %v454 = vunpack.c.l.b16 %v382
        %v455 = vunpack.c.l.b16 %v383
        %v456 = vunpack.c.l.b16 %v384
        %v457 = vpack.c.b16 %v433, %v432
        %v458 = vpack.c.b16 %v435, %v434
        %v459 = vpack.c.b16 %v437, %v436
        %v460 = vpack.c.b16 %v439, %v438
        %v461 = vpack.c.b16 %v441, %v440
        %v462 = vpack.c.b16 %v443, %v442
        %v463 = vpack.c.b16 %v445, %v444
        %v464 = vpack.c.b16 %v447, %v446
        %v465 = vpack.c.b16 %v449, %v448
        %v466 = vpack.c.b16 %v451, %v450
        %v467 = vpack.c.b16 %v453, %v452
        %v468 = vpack.c.b16 %v455, %v454
        %v469 = vpack.c.b16 %v456, %v456
        %vm482 = vcmask 588800
        %v484 = vsel %vm482, %v402, 0
        %v487 = vsel %vm482, %v404, 0
        %vm489 = vcmask 1043456
        %v491 = vsel %vm489, %v469, 0
        %493 = vmatprep.subr.bf16.mxu0 0
        %494 = vmatpush1.bf16.msra.mxu0 %v457
        %495 = vmatprep.subr.bf16.mxu0 0
        %496 = vmatpush1.bf16.msra.mxu0 %v458
        %497 = vmatprep.subr.bf16.mxu0 0
        %498 = vmatpush1.bf16.msra.mxu0 %v459
        %499 = vmatprep.subr.bf16.mxu0 0
        %500 = vmatpush1.bf16.msra.mxu0 %v460
        %501 = vmatprep.subr.bf16.mxu0 0
        %502 = vmatpush1.bf16.msra.mxu0 %v461
        %503 = vmatprep.subr.bf16.mxu0 0
        %504 = vmatpush1.bf16.msra.mxu0 %v462
        %505 = vmatprep.subr.bf16.mxu0 0
        %506 = vmatpush1.bf16.msra.mxu0 %v463
        %507 = vmatprep.subr.bf16.mxu0 0
        %508 = vmatpush1.bf16.msra.mxu0 %v464
        %509 = vmatprep.subr.bf16.mxu0 0
        %510 = vmatpush1.bf16.msra.mxu0 %v465
        %511 = vmatprep.subr.bf16.mxu0 0
        %512 = vmatpush1.bf16.msra.mxu0 %v466
        %513 = vmatprep.subr.bf16.mxu0 0
        %514 = vmatpush1.bf16.msra.mxu0 %v467
        %515 = vmatprep.subr.bf16.mxu0 0
        %516 = vmatpush1.bf16.msra.mxu0 %v468
        %517 = vmatprep.subr.bf16.mxu0 0
        %518 = vmatpush1.bf16.msra.mxu0 %v491
        %519 = vmatprep.subr.bf16.mxu0 0
        %520 = vmatpush1.bf16.msra.mxu0 0
        %521 = vmatprep.subr.bf16.mxu0 0
        %522 = vmatpush1.bf16.msra.mxu0 0
        %523 = vmatprep.subr.bf16.mxu0 0
        %524 = vmatpush1.bf16.msra.mxu0 0
        %525 = vmatprep.mubr.bf16.mxu0 %v484
        %526 = vmatmul.mubr.bf16.gmra.mrb[0].mxu0 %v401
        %v527 = vpop.f32.mrb[0].mxu0
        %v528 = vadd.f32 0.0, %v527
        %v529 = vpop.f32.mrb[0].mxu0
        %v530 = vpop.f32.mrb[0].mxu0
        %v531 = vadd.f32 0.0, %v530
        %v532 = vpop.f32.mrb[0].mxu0
        %533 = vmatprep.mubr.bf16.mxu0 %v487
        %534 = vmatmul.mubr.bf16.gmra.mrb[0].mxu0 %v403
        %v535 = vpop.f32.mrb[0].mxu0
        %v536 = vadd.f32 0.0, %v535
        %v537 = vpop.f32.mrb[0].mxu0
        %v538 = vpop.f32.mrb[0].mxu0
        %v539 = vadd.f32 0.0, %v538
        %v540 = vpop.f32.mrb[0].mxu0
        %541 = vdwg.mxu0
        %s542 = scalar_lea.vmem %s328, 32 [#allocation2]
        %v543 = vld [vmem:[%s542] sm:$0xff]
        %v544 = vld [vmem:[%s542 + $0x8] sm:$0xff]
        %v545 = vld [vmem:[%s542 + $0x10] sm:$0xff]
        %v546 = vld [vmem:[%s542 + $0x18] sm:$0xff]
        %v551 = vunpack.c.l.b16 %v543
        %v552 = vunpack.c.h.b16 %v543
        %v553 = vunpack.c.l.b16 %v544
        %v554 = vunpack.c.h.b16 %v544
        %v555 = vunpack.c.l.b16 %v545
        %v556 = vunpack.c.h.b16 %v545
        %v557 = vunpack.c.l.b16 %v546
        %v558 = vunpack.c.h.b16 %v546
        %v559 = vpack.c.b16 %v553, %v551
        %v560 = vpack.c.b16 %v554, %v552
        %v561 = vpack.c.b16 %v557, %v555
        %v562 = vpack.c.b16 %v558, %v556
        %v566 = vsel %vm482, %v560, 0
        %v569 = vsel %vm482, %v562, 0
        %571 = vmatprep.subr.bf16.mxu0 0
        %572 = vmatpush1.bf16.msra.mxu0 %v457
        %573 = vmatprep.subr.bf16.mxu0 0
        %574 = vmatpush1.bf16.msra.mxu0 %v458
        %575 = vmatprep.subr.bf16.mxu0 0
        %576 = vmatpush1.bf16.msra.mxu0 %v459
        %577 = vmatprep.subr.bf16.mxu0 0
        %578 = vmatpush1.bf16.msra.mxu0 %v460
        %579 = vmatprep.subr.bf16.mxu0 0
        %580 = vmatpush1.bf16.msra.mxu0 %v461
        %581 = vmatprep.subr.bf16.mxu0 0
        %582 = vmatpush1.bf16.msra.mxu0 %v462
        %583 = vmatprep.subr.bf16.mxu0 0
        %584 = vmatpush1.bf16.msra.mxu0 %v463
        %585 = vmatprep.subr.bf16.mxu0 0
        %586 = vmatpush1.bf16.msra.mxu0 %v464
        %587 = vmatprep.subr.bf16.mxu0 0
        %588 = vmatpush1.bf16.msra.mxu0 %v465
        %589 = vmatprep.subr.bf16.mxu0 0
        %590 = vmatpush1.bf16.msra.mxu0 %v466
        %591 = vmatprep.subr.bf16.mxu0 0
        %592 = vmatpush1.bf16.msra.mxu0 %v467
        %593 = vmatprep.subr.bf16.mxu0 0
        %594 = vmatpush1.bf16.msra.mxu0 %v468
        %595 = vmatprep.subr.bf16.mxu0 0
        %596 = vmatpush1.bf16.msra.mxu0 %v491
        %597 = vmatprep.subr.bf16.mxu0 0
        %598 = vmatpush1.bf16.msra.mxu0 0
        %599 = vmatprep.subr.bf16.mxu0 0
        %600 = vmatpush1.bf16.msra.mxu0 0
        %601 = vmatprep.subr.bf16.mxu0 0
        %602 = vmatpush1.bf16.msra.mxu0 0
        %603 = vmatprep.mubr.bf16.mxu0 %v566
        %604 = vmatmul.mubr.bf16.gmra.mrb[0].mxu0 %v559
        %v605 = vpop.f32.mrb[0].mxu0
        %v606 = vadd.f32 0.0, %v605
        %v607 = vpop.f32.mrb[0].mxu0
        %v608 = vpop.f32.mrb[0].mxu0
        %v609 = vadd.f32 0.0, %v608
        %v610 = vpop.f32.mrb[0].mxu0
        %611 = vmatprep.mubr.bf16.mxu0 %v569
        %612 = vmatmul.mubr.bf16.gmra.mrb[0].mxu0 %v561
        %v613 = vpop.f32.mrb[0].mxu0
        %v614 = vadd.f32 0.0, %v613
        %v615 = vpop.f32.mrb[0].mxu0
        %v616 = vpop.f32.mrb[0].mxu0
        %v617 = vadd.f32 0.0, %v616
        %v618 = vpop.f32.mrb[0].mxu0
        %619 = vdwg.mxu0
        %s620 = scalar_lea.vmem %s328, 64 [#allocation2]
        %v621 = vld [vmem:[%s620] sm:$0xff]
        %v622 = vld [vmem:[%s620 + $0x8] sm:$0xff]
        %v623 = vld [vmem:[%s620 + $0x10] sm:$0xff]
        %v624 = vld [vmem:[%s620 + $0x18] sm:$0xff]
        %v629 = vunpack.c.l.b16 %v621
        %v630 = vunpack.c.h.b16 %v621
        %v631 = vunpack.c.l.b16 %v622
        %v632 = vunpack.c.h.b16 %v622
        %v633 = vunpack.c.l.b16 %v623
        %v634 = vunpack.c.h.b16 %v623
        %v635 = vunpack.c.l.b16 %v624
        %v636 = vunpack.c.h.b16 %v624
        %v637 = vpack.c.b16 %v631, %v629
        %v638 = vpack.c.b16 %v632, %v630
        %v639 = vpack.c.b16 %v635, %v633
        %v640 = vpack.c.b16 %v636, %v634
        %v644 = vsel %vm482, %v638, 0
        %v647 = vsel %vm482, %v640, 0
        %649 = vmatprep.subr.bf16.mxu0 0
        %650 = vmatpush1.bf16.msra.mxu0 %v457
        %651 = vmatprep.subr.bf16.mxu0 0
        %652 = vmatpush1.bf16.msra.mxu0 %v458
        %653 = vmatprep.subr.bf16.mxu0 0
        %654 = vmatpush1.bf16.msra.mxu0 %v459
        %655 = vmatprep.subr.bf16.mxu0 0
        %656 = vmatpush1.bf16.msra.mxu0 %v460
        %657 = vmatprep.subr.bf16.mxu0 0
        %658 = vmatpush1.bf16.msra.mxu0 %v461
        %659 = vmatprep.subr.bf16.mxu0 0
        %660 = vmatpush1.bf16.msra.mxu0 %v462
        %661 = vmatprep.subr.bf16.mxu0 0
        %662 = vmatpush1.bf16.msra.mxu0 %v463
        %663 = vmatprep.subr.bf16.mxu0 0
        %664 = vmatpush1.bf16.msra.mxu0 %v464
        %665 = vmatprep.subr.bf16.mxu0 0
        %666 = vmatpush1.bf16.msra.mxu0 %v465
        %667 = vmatprep.subr.bf16.mxu0 0
        %668 = vmatpush1.bf16.msra.mxu0 %v466
        %669 = vmatprep.subr.bf16.mxu0 0
        %670 = vmatpush1.bf16.msra.mxu0 %v467
        %671 = vmatprep.subr.bf16.mxu0 0
        %672 = vmatpush1.bf16.msra.mxu0 %v468
        %673 = vmatprep.subr.bf16.mxu0 0
        %674 = vmatpush1.bf16.msra.mxu0 %v491
        %675 = vmatprep.subr.bf16.mxu0 0
        %676 = vmatpush1.bf16.msra.mxu0 0
        %677 = vmatprep.subr.bf16.mxu0 0
        %678 = vmatpush1.bf16.msra.mxu0 0
        %679 = vmatprep.subr.bf16.mxu0 0
        %680 = vmatpush1.bf16.msra.mxu0 0
        %681 = vmatprep.mubr.bf16.mxu0 %v644
        %682 = vmatmul.mubr.bf16.gmra.mrb[0].mxu0 %v637
        %v683 = vpop.f32.mrb[0].mxu0
        %v684 = vadd.f32 0.0, %v683
        %v685 = vpop.f32.mrb[0].mxu0
        %v686 = vpop.f32.mrb[0].mxu0
        %v687 = vadd.f32 0.0, %v686
        %v688 = vpop.f32.mrb[0].mxu0
        %689 = vmatprep.mubr.bf16.mxu0 %v647
        %690 = vmatmul.mubr.bf16.gmra.mrb[0].mxu0 %v639
        %v691 = vpop.f32.mrb[0].mxu0
        %v692 = vadd.f32 0.0, %v691
        %v693 = vpop.f32.mrb[0].mxu0
        %v694 = vpop.f32.mrb[0].mxu0
        %v695 = vadd.f32 0.0, %v694
        %v696 = vpop.f32.mrb[0].mxu0
        %697 = vdwg.mxu0
        %s698 = scalar_lea.vmem %s328, 96 [#allocation2]
        %v699 = vld [vmem:[%s698] sm:$0xff]
        %v700 = vld [vmem:[%s698 + $0x8] sm:$0xff]
        %v701 = vld [vmem:[%s698 + $0x10] sm:$0xff]
        %v702 = vld [vmem:[%s698 + $0x18] sm:$0xff]
        %v707 = vunpack.c.l.b16 %v699
        %v708 = vunpack.c.h.b16 %v699
        %v709 = vunpack.c.l.b16 %v700
        %v710 = vunpack.c.h.b16 %v700
        %v711 = vunpack.c.l.b16 %v701
        %v712 = vunpack.c.h.b16 %v701
        %v713 = vunpack.c.l.b16 %v702
        %v714 = vunpack.c.h.b16 %v702
        %v715 = vpack.c.b16 %v709, %v707
        %v716 = vpack.c.b16 %v710, %v708
        %v717 = vpack.c.b16 %v713, %v711
        %v718 = vpack.c.b16 %v714, %v712
        %v722 = vsel %vm482, %v716, 0
        %v725 = vsel %vm482, %v718, 0
        %727 = vmatprep.subr.bf16.mxu0 0
        %728 = vmatpush1.bf16.msra.mxu0 %v457
        %729 = vmatprep.subr.bf16.mxu0 0
        %730 = vmatpush1.bf16.msra.mxu0 %v458
        %731 = vmatprep.subr.bf16.mxu0 0
        %732 = vmatpush1.bf16.msra.mxu0 %v459
        %733 = vmatprep.subr.bf16.mxu0 0
        %734 = vmatpush1.bf16.msra.mxu0 %v460
        %735 = vmatprep.subr.bf16.mxu0 0
        %736 = vmatpush1.bf16.msra.mxu0 %v461
        %737 = vmatprep.subr.bf16.mxu0 0
        %738 = vmatpush1.bf16.msra.mxu0 %v462
        %739 = vmatprep.subr.bf16.mxu0 0
        %740 = vmatpush1.bf16.msra.mxu0 %v463
        %741 = vmatprep.subr.bf16.mxu0 0
        %742 = vmatpush1.bf16.msra.mxu0 %v464
        %743 = vmatprep.subr.bf16.mxu0 0
        %744 = vmatpush1.bf16.msra.mxu0 %v465
        %745 = vmatprep.subr.bf16.mxu0 0
        %746 = vmatpush1.bf16.msra.mxu0 %v466
        %747 = vmatprep.subr.bf16.mxu0 0
        %748 = vmatpush1.bf16.msra.mxu0 %v467
        %749 = vmatprep.subr.bf16.mxu0 0
        %750 = vmatpush1.bf16.msra.mxu0 %v468
        %751 = vmatprep.subr.bf16.mxu0 0
        %752 = vmatpush1.bf16.msra.mxu0 %v491
        %753 = vmatprep.subr.bf16.mxu0 0
        %754 = vmatpush1.bf16.msra.mxu0 0
        %755 = vmatprep.subr.bf16.mxu0 0
        %756 = vmatpush1.bf16.msra.mxu0 0
        %757 = vmatprep.subr.bf16.mxu0 0
        %758 = vmatpush1.bf16.msra.mxu0 0
        %759 = vmatprep.mubr.bf16.mxu0 %v722
        %760 = vmatmul.mubr.bf16.gmra.mrb[0].mxu0 %v715
        %v761 = vpop.f32.mrb[0].mxu0
        %v762 = vadd.f32 0.0, %v761
        %v763 = vpop.f32.mrb[0].mxu0
        %v764 = vpop.f32.mrb[0].mxu0
        %v765 = vadd.f32 0.0, %v764
        %v766 = vpop.f32.mrb[0].mxu0
        %767 = vmatprep.mubr.bf16.mxu0 %v725
        %768 = vmatmul.mubr.bf16.gmra.mrb[0].mxu0 %v717
        %v769 = vpop.f32.mrb[0].mxu0
        %v770 = vadd.f32 0.0, %v769
        %v771 = vpop.f32.mrb[0].mxu0
        %v772 = vpop.f32.mrb[0].mxu0
        %v773 = vadd.f32 0.0, %v772
        %v774 = vpop.f32.mrb[0].mxu0
        %775 = vdwg.mxu0
        %v776 = vmax.f32 %v528, %v606
        %v777 = vmax.f32 %v531, %v609
        %v778 = vmax.f32 %v536, %v614
        %v779 = vmax.f32 %v539, %v617
        %v780 = vmax.f32 %v684, %v762
        %v781 = vmax.f32 %v687, %v765
        %v782 = vmax.f32 %v692, %v770
        %v783 = vmax.f32 %v695, %v773
        %v784 = vmax.f32 %v776, %v780
        %v785 = vmax.f32 %v777, %v781
        %v786 = vmax.f32 %v778, %v782
        %v787 = vmax.f32 %v779, %v783
        %v788 = vld [vmem:[%s2] sm:$0x1]
        %v790 = vlaneseq
        %v791 = vshrl.u32 %v790, 7
        %v792 = vsub.s32 0, %v791
        %v793 = vrot.slane %v788, %v792
        %v795 = vadd.f32 %v784, %v793
        %v796 = vadd.f32 %v785, %v793
        %v797 = vadd.f32 %v786, %v793
        %v798 = vadd.f32 %v787, %v793
        %v799 = vmax.f32 %v795, 0.0
        %v800 = vmax.f32 %v796, 0.0
        %v801 = vmax.f32 %v797, 0.0
        %v802 = vmax.f32 %v798, 0.0
        %v803 = vpack.c.bf16 %v800, %v799
        %v804 = vpack.c.bf16 %v802, %v801
        %v807 = vunpack.c.l.b16 %v803
        %v808 = vunpack.c.h.b16 %v803
        %v809 = vunpack.c.l.b16 %v804
        %v810 = vunpack.c.h.b16 %v804
        %v811 = vpack.c.b16 %v807, %v807
        %v812 = vpack.c.b16 %v808, %v808
        %v813 = vpack.c.b16 %v809, %v809
        %v814 = vpack.c.b16 %v810, %v810
        %vm819 = vcmask 125952
        %820 = vst.msk [vmem:[%s347] sm:$0xf] %vm819, %v811
        %821 = vst.msk [vmem:[%s347 + $0x4] sm:$0xf] %vm819, %v812
        %822 = vst.msk [vmem:[%s347 + $0x8] sm:$0xf] %vm819, %v813
        %823 = vst.msk [vmem:[%s347 + $0xc] sm:$0xf] %vm819, %v814
        %s824 = sand.u32 %s90, 1
        %s825 = sand.u32 %s90, 1
        %s826 = smul.addr %s825, 16
        %s827 = scalar_lea.vmem [#allocation3], %s826
        // Predicated region
        $region85: #{lenet_logits.4} parent=79 // pred_check
          %p828 = pneg %p100
        $region86: #{lenet_logits.4} parent=79 // pred_check_branch
          %830 = sbr.rel (%p828) target = $region88
        $region87: #{lenet_logits.4} parent=79 // pred_region
          %s831 = smul.u32 4, %s14
          %s832 = ssub.s32 7, %s831
          %p833 = scmp.lt.s32.totalorder %s832, 4
          %s834 = scalar_select %p833, %s832, 4
          %s835 = smul.u32 64, %s834
          %p836 = scmp.ne.s32.totalorder 0, %s835
          %s837 = smul.addr %s831, 4
          %s838 = scalar_lea.vmem %s3, %s837
          // Predicated region
          $region89: #{lenet_logits.4} parent=87 // pred_check
            %p839 = pneg %p836
          $region90: #{lenet_logits.4} parent=87 // pred_check_branch
            %841 = sbr.rel (%p839) target = $region92
          $region91: #{lenet_logits.4} parent=87 // pred_region
            // Predicated region
            $region93: #{lenet_logits.4} parent=91 // pred_check
              _
            $region94: #{lenet_logits.4} parent=91 // pred_check_branch
              %843 = sbr.rel target = $region96
            $region95: #{lenet_logits.4} parent=91 // pred_region
              // Predicated region
              $region115: #{lenet_logits.4} parent=95 // pred_check
                _
              $region116: #{lenet_logits.4} parent=95 // pred_check_branch
                %898 = sbr.rel (0) target = $region118
              $region117: #{lenet_logits.4} parent=95 // pred_region
                %s900 = sshrl.u32 %s834, 2
                // While loop
                $region119: #{lenet_logits.4} parent=117 // loop_pre_header
                  _
                $region120: #{lenet_logits.4} parent=117 // loop_header
                  %s902 = sphi 0, %s904
                  %p903 = scmp.ge.s32.totalorder %s902, %s900
                  %s907 = sphi 0, %s920
                  %s908 = sphi %s827, %s923
                  %s909 = sphi %s838, %s924
                $region121: #{lenet_logits.4} parent=117 // loop_header_branch
                  %906 = sbr.rel (%p903) target = $region125
                $region122: #{lenet_logits.4} parent=117 // loop_body
                  %v910 = vld [vmem:[%s908] sm:$0xf]
                  %911 = vst [vmem:[%s909] sm:$0xf] %v910
                  %v912 = vld [vmem:[%s908 + $0x4] sm:$0xf]
                  %913 = vst [vmem:[%s909 + $0x4] sm:$0xf] %v912
                  %v914 = vld [vmem:[%s908 + $0x8] sm:$0xf]
                  %915 = vst [vmem:[%s909 + $0x8] sm:$0xf] %v914
                  %v916 = vld [vmem:[%s908 + $0xc] sm:$0xf]
                  %917 = vst [vmem:[%s909 + $0xc] sm:$0xf] %v916
                  %s918 = sadd.s32 1, %s907
                  %p919 = scmp.ge.s32.totalorder %s918, %s900
                  %s920 = scalar_select %p919, 0, %s918
                  %s921 = smul.u32 %s920, 16
                  %s922 = smul.u32 %s920, 16
                  %s923 = scalar_lea.vmem %s827, %s921 [#allocation3]
                  %s924 = scalar_lea.vmem %s838, %s922
                $region123: #{lenet_logits.4} parent=117 // loop_footer
                  %s904 = sadd.s32 %s902, 1
                $region124: #{lenet_logits.4} parent=117 // loop_footer_branch
                  %901 = sbr.rel target = $region120
                $region125: #{lenet_logits.4} parent=117 // loop_exit
                  _
                %s925 = sshrl.u32 %s834, 2
                %s926 = sand.u32 %s834, 3
                %s927 = smul.u32 %s925, 4
                %s928 = smul.u32 4, %s927
                %s929 = scalar_lea.vmem %s827, %s928 [#allocation3]
                %s930 = smul.u32 4, %s927
                %s931 = scalar_lea.vmem %s838, %s930
                // While loop
                $region126: #{lenet_logits.4} parent=117 // loop_pre_header
                  _
                $region127: #{lenet_logits.4} parent=117 // loop_header
                  %s933 = sphi 0, %s935
                  %p934 = scmp.ge.s32.totalorder %s933, %s926
                  %s938 = sphi 0, %s945
                  %s939 = sphi %s929, %s948
                  %s940 = sphi %s931, %s949
                $region128: #{lenet_logits.4} parent=117 // loop_header_branch
                  %937 = sbr.rel (%p934) target = $region132
                $region129: #{lenet_logits.4} parent=117 // loop_body
                  %v941 = vld [vmem:[%s939] sm:$0xf]
                  %942 = vst [vmem:[%s940] sm:$0xf] %v941
                  %s943 = sadd.s32 1, %s938
                  %p944 = scmp.ge.s32.totalorder %s943, %s926
                  %s945 = scalar_select %p944, 0, %s943
                  %s946 = smul.u32 %s945, 4
                  %s947 = smul.u32 %s945, 4
                  %s948 = scalar_lea.vmem %s929, %s946 [#allocation3]
                  %s949 = scalar_lea.vmem %s931, %s947
                $region130: #{lenet_logits.4} parent=117 // loop_footer
                  %s935 = sadd.s32 %s933, 1
                $region131: #{lenet_logits.4} parent=117 // loop_footer_branch
                  %932 = sbr.rel target = $region127
                $region132: #{lenet_logits.4} parent=117 // loop_exit
                  _
              $region118: #{lenet_logits.4} parent=95 // pred_fallthru
                _
            $region96: #{lenet_logits.4} parent=91 // pred_fallthru
              _
            // Predicated region
            $region97: #{lenet_logits.4} parent=91 // pred_check
              _
            $region98: #{lenet_logits.4} parent=91 // pred_check_branch
              %845 = sbr.rel (0) target = $region100
            $region99: #{lenet_logits.4} parent=91 // pred_region
              %s847 = sshrl.u32 %s834, 2
              // While loop
              $region101: #{lenet_logits.4} parent=99 // loop_pre_header
                _
              $region102: #{lenet_logits.4} parent=99 // loop_header
                %s849 = sphi 0, %s851
                %p850 = scmp.ge.s32.totalorder %s849, %s847
                %s854 = sphi 0, %s867
                %s855 = sphi %s827, %s870
                %s856 = sphi %s838, %s871
              $region103: #{lenet_logits.4} parent=99 // loop_header_branch
                %853 = sbr.rel (%p850) target = $region107
              $region104: #{lenet_logits.4} parent=99 // loop_body
                %v857 = vld [vmem:[%s855] sm:$0xf]
                %858 = vst [vmem:[%s856] sm:$0xf] %v857
                %v859 = vld [vmem:[%s855 + $0x4] sm:$0xf]
                %860 = vst [vmem:[%s856 + $0x4] sm:$0xf] %v859
                %v861 = vld [vmem:[%s855 + $0x8] sm:$0xf]
                %862 = vst [vmem:[%s856 + $0x8] sm:$0xf] %v861
                %v863 = vld [vmem:[%s855 + $0xc] sm:$0xf]
                %864 = vst [vmem:[%s856 + $0xc] sm:$0xf] %v863
                %s865 = sadd.s32 1, %s854
                %p866 = scmp.ge.s32.totalorder %s865, %s847
                %s867 = scalar_select %p866, 0, %s865
                %s868 = smul.u32 %s867, 16
                %s869 = smul.u32 %s867, 16
                %s870 = scalar_lea.vmem %s827, %s868 [#allocation3]
                %s871 = scalar_lea.vmem %s838, %s869
              $region105: #{lenet_logits.4} parent=99 // loop_footer
                %s851 = sadd.s32 %s849, 1
              $region106: #{lenet_logits.4} parent=99 // loop_footer_branch
                %848 = sbr.rel target = $region102
              $region107: #{lenet_logits.4} parent=99 // loop_exit
                _
              %s872 = sshrl.u32 %s834, 2
              %s873 = sand.u32 %s834, 3
              %s874 = smul.u32 %s872, 4
              %s875 = smul.u32 4, %s874
              %s876 = scalar_lea.vmem %s827, %s875 [#allocation3]
              %s877 = smul.u32 4, %s874
              %s878 = scalar_lea.vmem %s838, %s877
              // While loop
              $region108: #{lenet_logits.4} parent=99 // loop_pre_header
                _
              $region109: #{lenet_logits.4} parent=99 // loop_header
                %s880 = sphi 0, %s882
                %p881 = scmp.ge.s32.totalorder %s880, %s873
                %s885 = sphi 0, %s892
                %s886 = sphi %s876, %s895
                %s887 = sphi %s878, %s896
              $region110: #{lenet_logits.4} parent=99 // loop_header_branch
                %884 = sbr.rel (%p881) target = $region114
              $region111: #{lenet_logits.4} parent=99 // loop_body
                %v888 = vld [vmem:[%s886] sm:$0xf]
                %889 = vst [vmem:[%s887] sm:$0xf] %v888
                %s890 = sadd.s32 1, %s885
                %p891 = scmp.ge.s32.totalorder %s890, %s873
                %s892 = scalar_select %p891, 0, %s890
                %s893 = smul.u32 %s892, 4
                %s894 = smul.u32 %s892, 4
                %s895 = scalar_lea.vmem %s876, %s893 [#allocation3]
                %s896 = scalar_lea.vmem %s878, %s894
              $region112: #{lenet_logits.4} parent=99 // loop_footer
                %s882 = sadd.s32 %s880, 1
              $region113: #{lenet_logits.4} parent=99 // loop_footer_branch
                %879 = sbr.rel target = $region109
              $region114: #{lenet_logits.4} parent=99 // loop_exit
                _
            $region100: #{lenet_logits.4} parent=91 // pred_fallthru
              _
          $region92: #{lenet_logits.4} parent=87 // pred_fallthru
            _
          %950 = vnop
        $region88: #{lenet_logits.4} parent=79 // pred_fallthru
          _
      $region80: #{lenet_logits.4} parent=5 // pred_fallthru
        _
      %p951 = scmp.le.s32.totalorder 2, %s9
      // Predicated region
      $region133: #{lenet_logits.4} parent=5 // pred_check
        %p952 = pneg %p951
      $region134: #{lenet_logits.4} parent=5 // pred_check_branch
        %954 = sbr.rel (%p952) target = $region136
      $region135: #{lenet_logits.4} parent=5 // pred_region
        %s955 = ssub.s32 %s9, 2
        // Predicated region
        $region137: #{lenet_logits.4} parent=135 // pred_check
          %p956 = pneg %p106
        $region138: #{lenet_logits.4} parent=135 // pred_check_branch
          %958 = sbr.rel (%p956) target = $region140
        $region139: #{lenet_logits.4} parent=135 // pred_region
          %s959 = sand.u32 %s91, 1
          %s960 = sand.u32 %s91, 1
          %s961 = smul.addr %s960, 16
          %s962 = scalar_lea.vmem [#allocation3], %s961
        $region140: #{lenet_logits.4} parent=135 // pred_fallthru
          _
      $region136: #{lenet_logits.4} parent=5 // pred_fallthru
        _
    $region6: #{lenet_logits.4} parent=1 // loop_footer
      %s13 = sadd.s32 1, %s9
    $region7: #{lenet_logits.4} parent=1 // loop_footer_branch
      %8 = sbr.rel target = $region3
    $region8: #{lenet_logits.4} parent=1 // loop_exit
      _

// kernel: lenet_logits.5
$region0: #{lenet_logits.5}
  #allocation0 [shape = 'u32[]', space=smem, size = 0x4, offset = 0x4, fixed_abs, tag = 'smem constant byte address 0x4 - core index']
  #allocation1 [shape = 'u32[144,128]{1,0:T(1,128)}', space=vmem, size = 0x12000, scoped, tag = 'internal scratch']
  %s0 = inlined_call_operand.vmem [shape: bf16[2,400], index: 0, kind: input, shape index: {}]
  %s1 = inlined_call_operand.vmem [shape: bf16[400,256], index: 1, kind: input, shape index: {}]
  %s2 = inlined_call_operand.vmem [shape: f32[1,256], index: 2, kind: input, shape index: {}]
  %s3 = inlined_call_operand.vmem [shape: bf16[256,128], index: 3, kind: input, shape index: {}]
  %s4 = inlined_call_operand.vmem [shape: f32[1,128], index: 4, kind: input, shape index: {}]
  %s5 = inlined_call_operand.vmem [shape: bf16[128,128], index: 5, kind: input, shape index: {}]
  %s6 = inlined_call_operand.vmem [shape: f32[1,128], index: 6, kind: input, shape index: {}]
  %s7 = inlined_call_operand.hbm [shape: f32[2,128], index: 7, kind: output, shape index: {}]
  %s8 = sld [smem:[#allocation0]]
  $region38: #{lenet_logits.5} parent=0
    _
  %s10 = ssub.s32 1, %s8
  %s11 = scalar_select 0, %s10, %s8
  $region1: #{lenet_logits.5} parent=0
    #allocation2 [shape = 'u8[4096]{0}', space=vmem, size = 0x1000, scoped, tag = 'output window, operand 0, single buffered']
    #allocation3 [shape = 's32[1]{0}', space=sflag, size = 0x4, scoped, tag = 'scoped memory for lenet_logits.5']
    %12 = vsyncpa [#allocation3], 0
    // Predicated region
    $region2: #{lenet_logits.5} parent=1 // pred_check
      _
    $region3: #{lenet_logits.5} parent=1 // pred_check_branch
      %14 = sbr.rel (0) target = $region5
    $region4: #{lenet_logits.5} parent=1 // pred_region
      _
    $region5: #{lenet_logits.5} parent=1 // pred_fallthru
      _
    // Predicated region
    $region6: #{lenet_logits.5} parent=1 // pred_check
      _
    $region7: #{lenet_logits.5} parent=1 // pred_check_branch
      %16 = sbr.rel (0) target = $region9
    $region8: #{lenet_logits.5} parent=1 // pred_region
      _
    $region9: #{lenet_logits.5} parent=1 // pred_fallthru
      _
    // Predicated region
    $region10: #{lenet_logits.5} parent=1 // pred_check
      _
    $region11: #{lenet_logits.5} parent=1 // pred_check_branch
      %18 = sbr.rel (0) target = $region13
    $region12: #{lenet_logits.5} parent=1 // pred_region
      _
    $region13: #{lenet_logits.5} parent=1 // pred_fallthru
      _
    // Predicated region
    $region14: #{lenet_logits.5} parent=1 // pred_check
      _
    $region15: #{lenet_logits.5} parent=1 // pred_check_branch
      %20 = sbr.rel (0) target = $region17
    $region16: #{lenet_logits.5} parent=1 // pred_region
      _
    $region17: #{lenet_logits.5} parent=1 // pred_fallthru
      _
    // Predicated region
    $region18: #{lenet_logits.5} parent=1 // pred_check
      _
    $region19: #{lenet_logits.5} parent=1 // pred_check_branch
      %22 = sbr.rel (0) target = $region21
    $region20: #{lenet_logits.5} parent=1 // pred_region
      _
    $region21: #{lenet_logits.5} parent=1 // pred_fallthru
      _
    // Predicated region
    $region22: #{lenet_logits.5} parent=1 // pred_check
      _
    $region23: #{lenet_logits.5} parent=1 // pred_check_branch
      %24 = sbr.rel (0) target = $region25
    $region24: #{lenet_logits.5} parent=1 // pred_region
      _
    $region25: #{lenet_logits.5} parent=1 // pred_fallthru
      _
    // Predicated region
    $region26: #{lenet_logits.5} parent=1 // pred_check
      _
    $region27: #{lenet_logits.5} parent=1 // pred_check_branch
      %26 = sbr.rel (0) target = $region29
    $region28: #{lenet_logits.5} parent=1 // pred_region
      _
    $region29: #{lenet_logits.5} parent=1 // pred_fallthru
      _
    %v28 = vld [vmem:[%s0] sm:$0xf]
    %v29 = vld [vmem:[%s0 + $0x4] sm:$0xf]
    %v30 = vld [vmem:[%s0 + $0x8] sm:$0xf]
    %v31 = vld [vmem:[%s0 + $0xc] sm:$0xf]
    %v32 = vld [vmem:[%s1] sm:$0xff]
    %v33 = vld [vmem:[%s1 + $0x8] sm:$0xff]
    %v34 = vld [vmem:[%s1 + $0x10] sm:$0xff]
    %v35 = vld [vmem:[%s1 + $0x18] sm:$0xff]
    %v36 = vld [vmem:[%s1 + $0x20] sm:$0xff]
    %v37 = vld [vmem:[%s1 + $0x28] sm:$0xff]
    %v38 = vld [vmem:[%s1 + $0x30] sm:$0xff]
    %v39 = vld [vmem:[%s1 + $0x38] sm:$0xff]
    %v40 = vld [vmem:[%s1 + $0x40] sm:$0xff]
    %v41 = vld [vmem:[%s1 + $0x48] sm:$0xff]
    %v42 = vld [vmem:[%s1 + $0x50] sm:$0xff]
    %v43 = vld [vmem:[%s1 + $0x58] sm:$0xff]
    %v44 = vld [vmem:[%s1 + $0x60] sm:$0xff]
    %v45 = vld [vmem:[%s1 + $0x68] sm:$0xff]
    %v46 = vld [vmem:[%s1 + $0x70] sm:$0xff]
    %v47 = vld [vmem:[%s1 + $0x78] sm:$0xff]
    %v48 = vld [vmem:[%s1 + $0x80] sm:$0xff]
    %v49 = vld [vmem:[%s1 + $0x88] sm:$0xff]
    %v50 = vld [vmem:[%s1 + $0x90] sm:$0xff]
    %v51 = vld [vmem:[%s1 + $0x98] sm:$0xff]
    %v52 = vld [vmem:[%s1 + $0xa0] sm:$0xff]
    %v53 = vld [vmem:[%s1 + $0xa8] sm:$0xff]
    %v54 = vld [vmem:[%s1 + $0xb0] sm:$0xff]
    %v55 = vld [vmem:[%s1 + $0xb8] sm:$0xff]
    %v56 = vld [vmem:[%s1 + $0xc0] sm:$0xff]
    %v57 = vld [vmem:[%s1 + $0xc8] sm:$0xff]
    %v58 = vld [vmem:[%s1 + $0xd0] sm:$0xff]
    %v59 = vld [vmem:[%s1 + $0xd8] sm:$0xff]
    %v60 = vld [vmem:[%s1 + $0xe0] sm:$0xff]
    %v61 = vld [vmem:[%s1 + $0xe8] sm:$0xff]
    %v62 = vld [vmem:[%s1 + $0xf0] sm:$0xff]
    %v63 = vld [vmem:[%s1 + $0xf8] sm:$0xff]
    %v64 = vld [vmem:[%s1 + $0x100] sm:$0xff]
    %v65 = vld [vmem:[%s1 + $0x108] sm:$0xff]
    %v66 = vld [vmem:[%s1 + $0x110] sm:$0xff]
    %v67 = vld [vmem:[%s1 + $0x118] sm:$0xff]
    %v68 = vld [vmem:[%s1 + $0x120] sm:$0xff]
    %v69 = vld [vmem:[%s1 + $0x128] sm:$0xff]
    %v70 = vld [vmem:[%s1 + $0x130] sm:$0xff]
    %v71 = vld [vmem:[%s1 + $0x138] sm:$0xff]
    %v72 = vld [vmem:[%s1 + $0x140] sm:$0xff]
    %v73 = vld [vmem:[%s1 + $0x148] sm:$0xff]
    %v74 = vld [vmem:[%s1 + $0x150] sm:$0xff]
    %v75 = vld [vmem:[%s1 + $0x158] sm:$0xff]
    %v76 = vld [vmem:[%s1 + $0x160] sm:$0xff]
    %v77 = vld [vmem:[%s1 + $0x168] sm:$0xff]
    %v78 = vld [vmem:[%s1 + $0x170] sm:$0xff]
    %v79 = vld [vmem:[%s1 + $0x178] sm:$0xff]
    %v80 = vld [vmem:[%s1 + $0x180] sm:$0xff]
    %v81 = vld [vmem:[%s1 + $0x188] sm:$0xff]
    %v82 = vld [vmem:[%s2] sm:$0x3]
    %v84 = vlaneseq
    %v85 = vshrl.u32 %v84, 7
    %v86 = vsub.s32 0, %v85
    %v87 = vrot.slane %v82, %v86
    %v88 = vlaneseq
    %v89 = vshrl.u32 %v88, 7
    %v90 = vsub.s32 1, %v89
    %v91 = vrot.slane %v82, %v90
    %v98 = vcombine.low %v28, %v29
    %v99 = vcombine.low %v30, %v31
    %v101 = vunpack.c.l.s4 1966171168
    %v102 = vunpack.c.0.s8 %v101
    %v103 = vlaneseq
    %v104 = vshrl.u32 %v103, 7
    %v105 = vsub.s32 %v102, %v104
    %v106 = vrot.slane %v98, %v105
    %v108 = vunpack.c.l.s4 1966171168
    %v109 = vunpack.c.0.s8 %v108
    %v110 = vlaneseq
    %v111 = vshrl.u32 %v110, 7
    %v112 = vsub.s32 %v109, %v111
    %v113 = vrot.slane %v99, %v112
    %v114 = vcombine.low %v106, %v113
    %v115 = vcombine.high %v106, %v113
    %v117 = vunpack.c.l.s4 1966171168
    %v118 = vunpack.c.0.s8 %v117
    %v119 = vlaneseq
    %v120 = vshrl.u32 %v119, 7
    %v121 = vsub.s32 %v118, %v120
    %v122 = vrot.slane %v114, %v121
    %v124 = vunpack.c.l.s4 1966171168
    %v125 = vunpack.c.0.s8 %v124
    %v126 = vlaneseq
    %v127 = vshrl.u32 %v126, 7
    %v128 = vsub.s32 %v125, %v127
    %v129 = vrot.slane %v115, %v128
    %v130 = vcombine.high %v122, %v122
    %v131 = vcombine.high %v129, %v129
    %v185 = vunpack.c.l.b16 %v32
    %v186 = vunpack.c.h.b16 %v32
    %v187 = vunpack.c.l.b16 %v33
    %v188 = vunpack.c.h.b16 %v33
    %v189 = vunpack.c.l.b16 %v34
    %v190 = vunpack.c.h.b16 %v34
    %v191 = vunpack.c.l.b16 %v35
    %v192 = vunpack.c.h.b16 %v35
    %v193 = vunpack.c.l.b16 %v36
    %v194 = vunpack.c.h.b16 %v36
    %v195 = vunpack.c.l.b16 %v37
    %v196 = vunpack.c.h.b16 %v37
    %v197 = vunpack.c.l.b16 %v38
    %v198 = vunpack.c.h.b16 %v38
    %v199 = vunpack.c.l.b16 %v39
    %v200 = vunpack.c.h.b16 %v39
    %v201 = vunpack.c.l.b16 %v40
    %v202 = vunpack.c.h.b16 %v40
    %v203 = vunpack.c.l.b16 %v41
    %v204 = vunpack.c.h.b16 %v41
    %v205 = vunpack.c.l.b16 %v42
    %v206 = vunpack.c.h.b16 %v42
    %v207 = vunpack.c.l.b16 %v43
    %v208 = vunpack.c.h.b16 %v43
    %v209 = vunpack.c.l.b16 %v44
    %v210 = vunpack.c.h.b16 %v44
    %v211 = vunpack.c.l.b16 %v45
    %v212 = vunpack.c.h.b16 %v45
    %v213 = vunpack.c.l.b16 %v46
    %v214 = vunpack.c.h.b16 %v46
    %v215 = vunpack.c.l.b16 %v47
    %v216 = vunpack.c.h.b16 %v47
    %v217 = vunpack.c.l.b16 %v48
    %v218 = vunpack.c.h.b16 %v48
    %v219 = vunpack.c.l.b16 %v49
    %v220 = vunpack.c.h.b16 %v49
    %v221 = vunpack.c.l.b16 %v50
    %v222 = vunpack.c.h.b16 %v50
    %v223 = vunpack.c.l.b16 %v51
    %v224 = vunpack.c.h.b16 %v51
    %v225 = vunpack.c.l.b16 %v52
    %v226 = vunpack.c.h.b16 %v52
    %v227 = vunpack.c.l.b16 %v53
    %v228 = vunpack.c.h.b16 %v53
    %v229 = vunpack.c.l.b16 %v54
    %v230 = vunpack.c.h.b16 %v54
    %v231 = vunpack.c.l.b16 %v55
    %v232 = vunpack.c.h.b16 %v55
    %v233 = vunpack.c.l.b16 %v56
    %v234 = vunpack.c.h.b16 %v56
    %v235 = vunpack.c.l.b16 %v57
    %v236 = vunpack.c.h.b16 %v57
    %v237 = vunpack.c.l.b16 %v58
    %v238 = vunpack.c.h.b16 %v58
    %v239 = vunpack.c.l.b16 %v59
    %v240 = vunpack.c.h.b16 %v59
    %v241 = vunpack.c.l.b16 %v60
    %v242 = vunpack.c.h.b16 %v60
    %v243 = vunpack.c.l.b16 %v61
    %v244 = vunpack.c.h.b16 %v61
    %v245 = vunpack.c.l.b16 %v62
    %v246 = vunpack.c.h.b16 %v62
    %v247 = vunpack.c.l.b16 %v63
    %v248 = vunpack.c.h.b16 %v63
    %v249 = vunpack.c.l.b16 %v64
    %v250 = vunpack.c.h.b16 %v64
    %v251 = vunpack.c.l.b16 %v65
    %v252 = vunpack.c.h.b16 %v65
    %v253 = vunpack.c.l.b16 %v66
    %v254 = vunpack.c.h.b16 %v66
    %v255 = vunpack.c.l.b16 %v67
    %v256 = vunpack.c.h.b16 %v67
    %v257 = vunpack.c.l.b16 %v68
    %v258 = vunpack.c.h.b16 %v68
    %v259 = vunpack.c.l.b16 %v69
    %v260 = vunpack.c.h.b16 %v69
    %v261 = vunpack.c.l.b16 %v70
    %v262 = vunpack.c.h.b16 %v70
    %v263 = vunpack.c.l.b16 %v71
    %v264 = vunpack.c.h.b16 %v71
    %v265 = vunpack.c.l.b16 %v72
    %v266 = vunpack.c.h.b16 %v72
    %v267 = vunpack.c.l.b16 %v73
    %v268 = vunpack.c.h.b16 %v73
    %v269 = vunpack.c.l.b16 %v74
    %v270 = vunpack.c.h.b16 %v74
    %v271 = vunpack.c.l.b16 %v75
    %v272 = vunpack.c.h.b16 %v75
    %v273 = vunpack.c.l.b16 %v76
    %v274 = vunpack.c.h.b16 %v76
    %v275 = vunpack.c.l.b16 %v77
    %v276 = vunpack.c.h.b16 %v77
    %v277 = vunpack.c.l.b16 %v78
    %v278 = vunpack.c.h.b16 %v78
    %v279 = vunpack.c.l.b16 %v79
    %v280 = vunpack.c.h.b16 %v79
    %v281 = vunpack.c.l.b16 %v80
    %v282 = vunpack.c.h.b16 %v80
    %v283 = vunpack.c.l.b16 %v81
    %v284 = vunpack.c.h.b16 %v81
    %v285 = vpack.c.b16 %v187, %v185
    %v286 = vpack.c.b16 %v188, %v186
    %v287 = vpack.c.b16 %v191, %v189
    %v288 = vpack.c.b16 %v192, %v190
    %v289 = vpack.c.b16 %v195, %v193
    %v290 = vpack.c.b16 %v196, %v194
    %v291 = vpack.c.b16 %v199, %v197
    %v292 = vpack.c.b16 %v200, %v198
    %v293 = vpack.c.b16 %v203, %v201
    %v294 = vpack.c.b16 %v204, %v202
    %v295 = vpack.c.b16 %v207, %v205
    %v296 = vpack.c.b16 %v208, %v206
    %v297 = vpack.c.b16 %v211, %v209
    %v298 = vpack.c.b16 %v212, %v210
    %v299 = vpack.c.b16 %v215, %v213
    %v300 = vpack.c.b16 %v216, %v214
    %v301 = vpack.c.b16 %v219, %v217
    %v302 = vpack.c.b16 %v220, %v218
    %v303 = vpack.c.b16 %v223, %v221
    %v304 = vpack.c.b16 %v224, %v222
    %v305 = vpack.c.b16 %v227, %v225
    %v306 = vpack.c.b16 %v228, %v226
    %v307 = vpack.c.b16 %v231, %v229
    %v308 = vpack.c.b16 %v232, %v230
    %v309 = vpack.c.b16 %v235, %v233
    %v310 = vpack.c.b16 %v236, %v234
    %v311 = vpack.c.b16 %v239, %v237
    %v312 = vpack.c.b16 %v240, %v238
    %v313 = vpack.c.b16 %v243, %v241
    %v314 = vpack.c.b16 %v244, %v242
    %v315 = vpack.c.b16 %v247, %v245
    %v316 = vpack.c.b16 %v248, %v246
    %v317 = vpack.c.b16 %v251, %v249
    %v318 = vpack.c.b16 %v252, %v250
    %v319 = vpack.c.b16 %v255, %v253
    %v320 = vpack.c.b16 %v256, %v254
    %v321 = vpack.c.b16 %v259, %v257
    %v322 = vpack.c.b16 %v260, %v258
    %v323 = vpack.c.b16 %v263, %v261
    %v324 = vpack.c.b16 %v264, %v262
    %v325 = vpack.c.b16 %v267, %v265
    %v326 = vpack.c.b16 %v268, %v266
    %v327 = vpack.c.b16 %v271, %v269
    %v328 = vpack.c.b16 %v272, %v270
    %v329 = vpack.c.b16 %v275, %v273
    %v330 = vpack.c.b16 %v276, %v274
    %v331 = vpack.c.b16 %v279, %v277
    %v332 = vpack.c.b16 %v280, %v278
    %v333 = vpack.c.b16 %v283, %v281
    %v334 = vpack.c.b16 %v284, %v282
    %vm385 = vcmask 130048
    %v387 = vsel %vm385, %v131, 0
    %389 = vmatprep.subr.bf16.mxu0 %v286
    %390 = vmatpush1.bf16.msra.mxu0 %v285
    %391 = vmatprep.subr.bf16.mxu0 %v288
    %392 = vmatpush1.bf16.msra.mxu0 %v287
    %393 = vmatprep.subr.bf16.mxu0 %v290
    %394 = vmatpush1.bf16.msra.mxu0 %v289
    %395 = vmatprep.subr.bf16.mxu0 %v292
    %396 = vmatpush1.bf16.msra.mxu0 %v291
    %397 = vmatprep.subr.bf16.mxu0 %v294
    %398 = vmatpush1.bf16.msra.mxu0 %v293
    %399 = vmatprep.subr.bf16.mxu0 %v296
    %400 = vmatpush1.bf16.msra.mxu0 %v295
    %401 = vmatprep.subr.bf16.mxu0 %v298
    %402 = vmatpush1.bf16.msra.mxu0 %v297
    %403 = vmatprep.subr.bf16.mxu0 %v300
    %404 = vmatpush1.bf16.msra.mxu0 %v299
    %405 = vmatprep.subr.bf16.mxu0 %v302
    %406 = vmatpush1.bf16.msra.mxu0 %v301
    %407 = vmatprep.subr.bf16.mxu0 %v304
    %408 = vmatpush1.bf16.msra.mxu0 %v303
    %409 = vmatprep.subr.bf16.mxu0 %v306
    %410 = vmatpush1.bf16.msra.mxu0 %v305
    %411 = vmatprep.subr.bf16.mxu0 %v308
    %412 = vmatpush1.bf16.msra.mxu0 %v307
    %413 = vmatprep.subr.bf16.mxu0 %v310
    %414 = vmatpush1.bf16.msra.mxu0 %v309
    %415 = vmatprep.subr.bf16.mxu0 %v312
    %416 = vmatpush1.bf16.msra.mxu0 %v311
    %417 = vmatprep.subr.bf16.mxu0 %v314
    %418 = vmatpush1.bf16.msra.mxu0 %v313
    %419 = vmatprep.subr.bf16.mxu0 %v316
    %420 = vmatpush1.bf16.msra.mxu0 %v315
    %421 = vmatprep.mubr.bf16.mxu0 %v129
    %422 = vmatmul.mubr.bf16.gmra.mrb[0].mxu0 %v122
    %v423 = vpop.f32.mrb[0].mxu0
    %v424 = vadd.f32 %v87, %v423
    %v425 = vpop.f32.mrb[0].mxu0
    %v426 = vadd.f32 %v91, %v425
    %v427 = vpop.f32.mrb[0].mxu0
    %v428 = vpop.f32.mrb[0].mxu0
    %429 = vdwg.mxu0
    %430 = vmatprep.subr.bf16.mxu0 %v318
    %431 = vmatpush1.bf16.msra.mxu0 %v317
    %432 = vmatprep.subr.bf16.mxu0 %v320
    %433 = vmatpush1.bf16.msra.mxu0 %v319
    %434 = vmatprep.subr.bf16.mxu0 %v322
    %435 = vmatpush1.bf16.msra.mxu0 %v321
    %436 = vmatprep.subr.bf16.mxu0 %v324
    %437 = vmatpush1.bf16.msra.mxu0 %v323
    %438 = vmatprep.subr.bf16.mxu0 %v326
    %439 = vmatpush1.bf16.msra.mxu0 %v325
    %440 = vmatprep.subr.bf16.mxu0 %v328
    %441 = vmatpush1.bf16.msra.mxu0 %v327
    %442 = vmatprep.subr.bf16.mxu0 %v330
    %443 = vmatpush1.bf16.msra.mxu0 %v329
    %444 = vmatprep.subr.bf16.mxu0 %v332
    %445 = vmatpush1.bf16.msra.mxu0 %v331
    %446 = vmatprep.subr.bf16.mxu0 %v334
    %447 = vmatpush1.bf16.msra.mxu0 %v333
    %448 = vmatprep.subr.bf16.mxu0 0
    %449 = vmatpush1.bf16.msra.mxu0 0
    %450 = vmatprep.subr.bf16.mxu0 0
    %451 = vmatpush1.bf16.msra.mxu0 0
    %452 = vmatprep.subr.bf16.mxu0 0
    %453 = vmatpush1.bf16.msra.mxu0 0
    %454 = vmatprep.subr.bf16.mxu0 0
    %455 = vmatpush1.bf16.msra.mxu0 0
    %456 = vmatprep.subr.bf16.mxu0 0
    %457 = vmatpush1.bf16.msra.mxu0 0
    %458 = vmatprep.subr.bf16.mxu0 0
    %459 = vmatpush1.bf16.msra.mxu0 0
    %460 = vmatprep.subr.bf16.mxu0 0
    %461 = vmatpush1.bf16.msra.mxu0 0
    %462 = vmatprep.mubr.bf16.mxu0 %v387
    %463 = vmatmul.mubr.bf16.gmra.mrb[0].mxu0 %v130
    %v464 = vpop.f32.mrb[0].mxu0
    %v465 = vadd.f32 %v424, %v464
    %v466 = vpop.f32.mrb[0].mxu0
    %v467 = vadd.f32 %v426, %v466
    %v468 = vpop.f32.mrb[0].mxu0
    %v469 = vpop.f32.mrb[0].mxu0
    %470 = vdwg.mxu0
    %v471 = vmax.f32 %v465, 0.0
    %v472 = vmax.f32 %v467, 0.0
    %v473 = vpack.c.bf16 %v471, %v471
    %v474 = vpack.c.bf16 %v472, %v472
    %v475 = vld [vmem:[%s3] sm:$0xf]
    %v476 = vld [vmem:[%s3 + $0x4] sm:$0xf]
    %v477 = vld [vmem:[%s3 + $0x8] sm:$0xf]
    %v478 = vld [vmem:[%s3 + $0xc] sm:$0xf]
    %v479 = vld [vmem:[%s3 + $0x10] sm:$0xf]
    %v480 = vld [vmem:[%s3 + $0x14] sm:$0xf]
    %v481 = vld [vmem:[%s3 + $0x18] sm:$0xf]
    %v482 = vld [vmem:[%s3 + $0x1c] sm:$0xf]
    %v483 = vld [vmem:[%s3 + $0x20] sm:$0xf]
    %v484 = vld [vmem:[%s3 + $0x24] sm:$0xf]
    %v485 = vld [vmem:[%s3 + $0x28] sm:$0xf]
    %v486 = vld [vmem:[%s3 + $0x2c] sm:$0xf]
    %v487 = vld [vmem:[%s3 + $0x30] sm:$0xf]
    %v488 = vld [vmem:[%s3 + $0x34] sm:$0xf]
    %v489 = vld [vmem:[%s3 + $0x38] sm:$0xf]
    %v490 = vld [vmem:[%s3 + $0x3c] sm:$0xf]
    %v491 = vld [vmem:[%s3 + $0x40] sm:$0xf]
    %v492 = vld [vmem:[%s3 + $0x44] sm:$0xf]
    %v493 = vld [vmem:[%s3 + $0x48] sm:$0xf]
    %v494 = vld [vmem:[%s3 + $0x4c] sm:$0xf]
    %v495 = vld [vmem:[%s3 + $0x50] sm:$0xf]
    %v496 = vld [vmem:[%s3 + $0x54] sm:$0xf]
    %v497 = vld [vmem:[%s3 + $0x58] sm:$0xf]
    %v498 = vld [vmem:[%s3 + $0x5c] sm:$0xf]
    %v499 = vld [vmem:[%s3 + $0x60] sm:$0xf]
    %v500 = vld [vmem:[%s3 + $0x64] sm:$0xf]
    %v501 = vld [vmem:[%s3 + $0x68] sm:$0xf]
    %v502 = vld [vmem:[%s3 + $0x6c] sm:$0xf]
    %v503 = vld [vmem:[%s3 + $0x70] sm:$0xf]
    %v504 = vld [vmem:[%s3 + $0x74] sm:$0xf]
    %v505 = vld [vmem:[%s3 + $0x78] sm:$0xf]
    %v506 = vld [vmem:[%s3 + $0x7c] sm:$0xf]
    %v507 = vld [vmem:[%s4] sm:$0x1]
    %v509 = vlaneseq
    %v510 = vshrl.u32 %v509, 7
    %v511 = vsub.s32 0, %v510
    %v512 = vrot.slane %v507, %v511
    %v546 = vunpack.c.l.b16 %v475
    %v547 = vunpack.c.l.b16 %v476
    %v548 = vunpack.c.l.b16 %v477
    %v549 = vunpack.c.l.b16 %v478
    %v550 = vunpack.c.l.b16 %v479
    %v551 = vunpack.c.l.b16 %v480
    %v552 = vunpack.c.l.b16 %v481
    %v553 = vunpack.c.l.b16 %v482
    %v554 = vunpack.c.l.b16 %v483
    %v555 = vunpack.c.l.b16 %v484
    %v556 = vunpack.c.l.b16 %v485
    %v557 = vunpack.c.l.b16 %v486
    %v558 = vunpack.c.l.b16 %v487
    %v559 = vunpack.c.l.b16 %v488
    %v560 = vunpack.c.l.b16 %v489
    %v561 = vunpack.c.l.b16 %v490
    %v562 = vunpack.c.l.b16 %v491
    %v563 = vunpack.c.l.b16 %v492
    %v564 = vunpack.c.l.b16 %v493
    %v565 = vunpack.c.l.b16 %v494
    %v566 = vunpack.c.l.b16 %v495
    %v567 = vunpack.c.l.b16 %v496
    %v568 = vunpack.c.l.b16 %v497
    %v569 = vunpack.c.l.b16 %v498
    %v570 = vunpack.c.l.b16 %v499
    %v571 = vunpack.c.l.b16 %v500
    %v572 = vunpack.c.l.b16 %v501
    %v573 = vunpack.c.l.b16 %v502
    %v574 = vunpack.c.l.b16 %v503
    %v575 = vunpack.c.l.b16 %v504
    %v576 = vunpack.c.l.b16 %v505
    %v577 = vunpack.c.l.b16 %v506
    %v578 = vpack.c.b16 %v547, %v546
    %v579 = vpack.c.b16 %v549, %v548
    %v580 = vpack.c.b16 %v551, %v550
    %v581 = vpack.c.b16 %v553, %v552
    %v582 = vpack.c.b16 %v555, %v554
    %v583 = vpack.c.b16 %v557, %v556
    %v584 = vpack.c.b16 %v559, %v558
    %v585 = vpack.c.b16 %v561, %v560
    %v586 = vpack.c.b16 %v563, %v562
    %v587 = vpack.c.b16 %v565, %v564
    %v588 = vpack.c.b16 %v567, %v566
    %v589 = vpack.c.b16 %v569, %v568
    %v590 = vpack.c.b16 %v571, %v570
    %v591 = vpack.c.b16 %v573, %v572
    %v592 = vpack.c.b16 %v575, %v574
    %v593 = vpack.c.b16 %v577, %v576
    %610 = vmatprep.subr.bf16.mxu0 0
    %611 = vmatpush1.bf16.msra.mxu0 %v578
    %612 = vmatprep.subr.bf16.mxu0 0
    %613 = vmatpush1.bf16.msra.mxu0 %v579
    %614 = vmatprep.subr.bf16.mxu0 0
    %615 = vmatpush1.bf16.msra.mxu0 %v580
    %616 = vmatprep.subr.bf16.mxu0 0
    %617 = vmatpush1.bf16.msra.mxu0 %v581
    %618 = vmatprep.subr.bf16.mxu0 0
    %619 = vmatpush1.bf16.msra.mxu0 %v582
    %620 = vmatprep.subr.bf16.mxu0 0
    %621 = vmatpush1.bf16.msra.mxu0 %v583
    %622 = vmatprep.subr.bf16.mxu0 0
    %623 = vmatpush1.bf16.msra.mxu0 %v584
    %624 = vmatprep.subr.bf16.mxu0 0
    %625 = vmatpush1.bf16.msra.mxu0 %v585
    %626 = vmatprep.subr.bf16.mxu0 0
    %627 = vmatpush1.bf16.msra.mxu0 %v586
    %628 = vmatprep.subr.bf16.mxu0 0
    %629 = vmatpush1.bf16.msra.mxu0 %v587
    %630 = vmatprep.subr.bf16.mxu0 0
    %631 = vmatpush1.bf16.msra.mxu0 %v588
    %632 = vmatprep.subr.bf16.mxu0 0
    %633 = vmatpush1.bf16.msra.mxu0 %v589
    %634 = vmatprep.subr.bf16.mxu0 0
    %635 = vmatpush1.bf16.msra.mxu0 %v590
    %636 = vmatprep.subr.bf16.mxu0 0
    %637 = vmatpush1.bf16.msra.mxu0 %v591
    %638 = vmatprep.subr.bf16.mxu0 0
    %639 = vmatpush1.bf16.msra.mxu0 %v592
    %640 = vmatprep.subr.bf16.mxu0 0
    %641 = vmatpush1.bf16.msra.mxu0 %v593
    %642 = vmatprep.mubr.bf16.mxu0 %v474
    %643 = vmatmul.mubr.bf16.gmra.mrb[0].mxu0 %v473
    %v644 = vpop.f32.mrb[0].mxu0
    %v645 = vadd.f32 %v512, %v644
    %v646 = vpop.f32.mrb[0].mxu0
    %v647 = vpop.f32.mrb[0].mxu0
    %v648 = vpop.f32.mrb[0].mxu0
    %649 = vdwg.mxu0
    %v650 = vmax.f32 %v645, 0.0
    %v651 = vpack.c.bf16 %v650, %v650
    %v652 = vld [vmem:[%s5] sm:$0xf]
    %v653 = vld [vmem:[%s5 + $0x4] sm:$0xf]
    %v654 = vld [vmem:[%s5 + $0x8] sm:$0xf]
    %v655 = vld [vmem:[%s5 + $0xc] sm:$0xf]
    %v656 = vld [vmem:[%s5 + $0x10] sm:$0xf]
    %v657 = vld [vmem:[%s5 + $0x14] sm:$0xf]
    %v658 = vld [vmem:[%s5 + $0x18] sm:$0xf]
    %v659 = vld [vmem:[%s5 + $0x1c] sm:$0xf]
    %v660 = vld [vmem:[%s5 + $0x20] sm:$0xf]
    %v661 = vld [vmem:[%s5 + $0x24] sm:$0xf]
    %v662 = vld [vmem:[%s5 + $0x28] sm:$0xf]
    %v663 = vld [vmem:[%s5 + $0x2c] sm:$0xf]
    %v664 = vld [vmem:[%s5 + $0x30] sm:$0xf]
    %v665 = vld [vmem:[%s5 + $0x34] sm:$0xf]
    %v666 = vld [vmem:[%s5 + $0x38] sm:$0xf]
    %v667 = vld [vmem:[%s5 + $0x3c] sm:$0xf]
    %v668 = vld [vmem:[%s6] sm:$0x1]
    %v670 = vlaneseq
    %v671 = vshrl.u32 %v670, 7
    %v672 = vsub.s32 0, %v671
    %v673 = vrot.slane %v668, %v672
    %v691 = vunpack.c.l.b16 %v652
    %v692 = vunpack.c.l.b16 %v653
    %v693 = vunpack.c.l.b16 %v654
    %v694 = vunpack.c.l.b16 %v655
    %v695 = vunpack.c.l.b16 %v656
    %v696 = vunpack.c.l.b16 %v657
    %v697 = vunpack.c.l.b16 %v658
    %v698 = vunpack.c.l.b16 %v659
    %v699 = vunpack.c.l.b16 %v660
    %v700 = vunpack.c.l.b16 %v661
    %v701 = vunpack.c.l.b16 %v662
    %v702 = vunpack.c.l.b16 %v663
    %v703 = vunpack.c.l.b16 %v664
    %v704 = vunpack.c.l.b16 %v665
    %v705 = vunpack.c.l.b16 %v666
    %v706 = vunpack.c.l.b16 %v667
    %v707 = vpack.c.b16 %v692, %v691
    %v708 = vpack.c.b16 %v694, %v693
    %v709 = vpack.c.b16 %v696, %v695
    %v710 = vpack.c.b16 %v698, %v697
    %v711 = vpack.c.b16 %v700, %v699
    %v712 = vpack.c.b16 %v702, %v701
    %v713 = vpack.c.b16 %v704, %v703
    %v714 = vpack.c.b16 %v706, %v705
    %723 = vmatprep.subr.bf16.mxu0 0
    %724 = vmatpush1.bf16.msra.mxu0 %v707
    %725 = vmatprep.subr.bf16.mxu0 0
    %726 = vmatpush1.bf16.msra.mxu0 %v708
    %727 = vmatprep.subr.bf16.mxu0 0
    %728 = vmatpush1.bf16.msra.mxu0 %v709
    %729 = vmatprep.subr.bf16.mxu0 0
    %730 = vmatpush1.bf16.msra.mxu0 %v710
    %731 = vmatprep.subr.bf16.mxu0 0
    %732 = vmatpush1.bf16.msra.mxu0 %v711
    %733 = vmatprep.subr.bf16.mxu0 0
    %734 = vmatpush1.bf16.msra.mxu0 %v712
    %735 = vmatprep.subr.bf16.mxu0 0
    %736 = vmatpush1.bf16.msra.mxu0 %v713
    %737 = vmatprep.subr.bf16.mxu0 0
    %738 = vmatpush1.bf16.msra.mxu0 %v714
    %739 = vmatprep.subr.bf16.mxu0 0
    %740 = vmatpush1.bf16.msra.mxu0 0
    %741 = vmatprep.subr.bf16.mxu0 0
    %742 = vmatpush1.bf16.msra.mxu0 0
    %743 = vmatprep.subr.bf16.mxu0 0
    %744 = vmatpush1.bf16.msra.mxu0 0
    %745 = vmatprep.subr.bf16.mxu0 0
    %746 = vmatpush1.bf16.msra.mxu0 0
    %747 = vmatprep.subr.bf16.mxu0 0
    %748 = vmatpush1.bf16.msra.mxu0 0
    %749 = vmatprep.subr.bf16.mxu0 0
    %750 = vmatpush1.bf16.msra.mxu0 0
    %751 = vmatprep.subr.bf16.mxu0 0
    %752 = vmatpush1.bf16.msra.mxu0 0
    %753 = vmatprep.subr.bf16.mxu0 0
    %754 = vmatpush1.bf16.msra.mxu0 0
    %755 = vmatprep.mubr.bf16.mxu0 0
    %756 = vmatmul.mubr.bf16.gmra.mrb[0].mxu0 %v651
    %v757 = vpop.f32.mrb[0].mxu0
    %v758 = vadd.f32 %v673, %v757
    %v759 = vpop.f32.mrb[0].mxu0
    %v760 = vpop.f32.mrb[0].mxu0
    %v761 = vpop.f32.mrb[0].mxu0
    %762 = vdwg.mxu0
    %763 = vst [vmem:[#allocation2] sm:$0xff] %v758
    // Predicated region
    $region30: #{lenet_logits.5} parent=1 // pred_check
      _
    $region31: #{lenet_logits.5} parent=1 // pred_check_branch
      %765 = sbr.rel (0) target = $region33
    $region32: #{lenet_logits.5} parent=1 // pred_region
      %s767 = ssub.s32 128, 32
      %768 = vsyncadd [#allocation3], %s767
      %s769 = sshll.u32 [#allocation2], 4
      %s770 = int_to_ptr.vmem [resolvable:$true] %s769
      %775 = dma.vmem_to_hbm [thread:$0]  %s770, 32, %s7, [#allocation3], 32, 32, 2
    $region33: #{lenet_logits.5} parent=1 // pred_fallthru
      _
    // Predicated region
    $region34: #{lenet_logits.5} parent=1 // pred_check
      _
    $region35: #{lenet_logits.5} parent=1 // pred_check_branch
      %777 = sbr.rel (0) target = $region37
    $region36: #{lenet_logits.5} parent=1 // pred_region
      %778 = dma.done [#allocation3], 128
    $region37: #{lenet_logits.5} parent=1 // pred_fallthru
      _
    %779 = vsyncpa [#allocation3], 1

</llo_original>
